<compile_context>
chip_gen: v6e
topology: v6e:2x2x1
jax: 0.10.0
libtpu: 0.0.40
codegen_flags: <defaults>
</compile_context>

<pallas_src>
import jax
import jax.numpy as jnp
from jax.experimental import pallas as pl
from jax.experimental.pallas import tpu as pltpu

D_IN = 28 * 28    # 784
D_CODE = 3
LAYER_DIMS = [(D_IN, 128), (128, 64), (64, 12), (12, D_CODE),     # encoder
              (D_CODE, 12), (12, 64), (64, 128), (128, D_IN)]      # decoder


def _round_up(n, m):
    return ((n + m - 1) // m) * m


def _pick_bm(b8, bm_max):
    """Largest row tile (multiple of 8, <= bm_max) that divides b8, preferring >= 2 grid
    steps so the 'parallel' batch axis can be split across v7x's two TensorCores."""
    bm_max = max(8, min(bm_max, b8))
    start = b8 // 2 if b8 >= 16 else b8
    start = max(8, min(bm_max, (start // 8) * 8))
    for cand in range(start, 7, -8):
        if b8 % cand == 0:
            return cand
    return 8


def _autoencoder_kernel(x_ref,
                        w1, b1, w2, b2, w3, b3, w4, b4,      # encoder
                        w5, b5, w6, b6, w7, b7, w8, b8,      # decoder
                        enc_ref, dec_ref):
    def dense(h_bf16, w_ref, b_ref):
        # bf16 x bf16 operands, f32 accumulation on the MXU.
        return jnp.dot(h_bf16, w_ref[...],
                       preferred_element_type=jnp.float32) + b_ref[...]

    x = x_ref[...].astype(jnp.bfloat16)        # single cast straight to the MXU dtype

    # ---- encoder ----
    h = jnp.tanh(dense(x, w1, b1)).astype(jnp.bfloat16)
    h = jnp.tanh(dense(h, w2, b2)).astype(jnp.bfloat16)
    h = jnp.tanh(dense(h, w3, b3)).astype(jnp.bfloat16)
    enc = dense(h, w4, b4)                     # (bm, 3) f32
    enc_ref[...] = enc.astype(enc_ref.dtype)

    # ---- decoder ----
    h = jnp.tanh(dense(enc.astype(jnp.bfloat16), w5, b5)).astype(jnp.bfloat16)
    h = jnp.tanh(dense(h, w6, b6)).astype(jnp.bfloat16)
    h = jnp.tanh(dense(h, w7, b7)).astype(jnp.bfloat16)
    logits = dense(h, w8, b8)                  # (bm, 784) f32
    # sigmoid(x) == 0.5 * (tanh(0.5 * x) + 1)  (keeps the transcendental on the EUP)
    dec_ref[...] = (0.5 * (jnp.tanh(0.5 * logits) + 1.0)).astype(dec_ref.dtype)


def prepare_params(params):
    """One-time prep: weights -> bf16 MXU operands, biases stay f32 (1, out).
    Call once outside the per-step path; no padding is needed anymore."""
    flat = []
    for w, b in params:
        flat.append(jnp.asarray(w, jnp.bfloat16))
        flat.append(jnp.asarray(b, jnp.float32))
    return tuple(flat)


def _build_call(B, bm):
    def const_spec(shape):
        return pl.BlockSpec(shape, lambda i: (0, 0))   # VMEM-resident, same block each step

    flat_shapes = []
    for fan_in, fan_out in LAYER_DIMS:
        flat_shapes.append((fan_in, fan_out))
        flat_shapes.append((1, fan_out))

    in_specs = [pl.BlockSpec((bm, D_IN), lambda i: (i, 0))]
    in_specs += [const_spec(s) for s in flat_shapes]
    out_specs = [pl.BlockSpec((bm, D_CODE), lambda i: (i, 0)),
                 pl.BlockSpec((bm, D_IN), lambda i: (i, 0))]
    out_shape = (jax.ShapeDtypeStruct((B, D_CODE), jnp.float32),
                 jax.ShapeDtypeStruct((B, D_IN), jnp.float32))

    return pl.pallas_call(
        _autoencoder_kernel,
        out_shape=out_shape,
        grid_spec=pltpu.PrefetchScalarGridSpec(
            num_scalar_prefetch=0,
            grid=(B // bm,),
            in_specs=in_specs,
            out_specs=out_specs,
        ),
        compiler_params=pltpu.CompilerParams(
            dimension_semantics=("parallel",),          # batch axis shards across TCs
            vmem_limit_bytes=48 * 1024 * 1024,          # safe on v5e/v6e (128 MiB) and v7x (64 MiB)
        ),
    )


def autoencoder_forward(x, flat_params, *, bm_max=512):
    """x: (B, 784) float32. flat_params: output of prepare_params().

    Returns (encoded (B, 3), decoded (B, 784)) matching the PyTorch AutoEncoder.forward.
    """
    B, D = x.shape
    assert D == D_IN
    B8 = _round_up(B, 8)
    bm = _pick_bm(B8, bm_max)
    xin = x.astype(jnp.float32)
    if B8 != B:
        # Only rows are ever padded (rare, ragged batch); feature dims stay unpadded.
        xin = jnp.pad(xin, ((0, B8 - B), (0, 0)))
    enc, dec = _build_call(B8, bm)(xin, *flat_params)
    if B8 != B:
        enc, dec = enc[:B], dec[:B]
    return enc, dec


def init_params(key):
    """Deterministic init mimicking PyTorch nn.Linear (uniform +-1/sqrt(fan_in)).
    Weights returned already transposed to (in, out); biases as (1, out)."""
    params = []
    for fan_in, fan_out in LAYER_DIMS:
        key, kw, kb = jax.random.split(key, 3)
        bound = 1.0 / (fan_in ** 0.5)
        w = jax.random.uniform(kw, (fan_in, fan_out), jnp.float32, -bound, bound)
        b = jax.random.uniform(kb, (1, fan_out), jnp.float32, -bound, bound)
        params.append((w, b))
    return params


def reference_forward(x, params):
    h = x
    for i, (w, b) in enumerate(params[:4]):
        h = h @ w + b
        if i < 3:
            h = jnp.tanh(h)
    enc = h
    h = enc
    for i, (w, b) in enumerate(params[4:]):
        h = h @ w + b
        h = jnp.tanh(h) if i < 3 else jax.nn.sigmoid(h)
    return enc, h


if __name__ == "__main__":
    key = jax.random.PRNGKey(0)
    kx, kp = jax.random.split(key)

    B = 256                                     # bm picked as 128 -> 2 grid steps (v7x megacore)
    x = jax.random.normal(kx, (B, D_IN), jnp.float32)
    params = init_params(kp)

    flat = prepare_params(params)               # one-time bf16 cast, outside the jitted path
    fwd = jax.jit(autoencoder_forward)

    enc, dec = fwd(x, flat)
    enc = jax.block_until_ready(enc)
    dec = jax.block_until_ready(dec)

    enc_ref, dec_ref = reference_forward(x, params)
    assert enc.shape == (B, D_CODE) and dec.shape == (B, D_IN)
    # bf16 matmul operands (f32 accumulation) -> loosened tolerance vs. the pure-f32 reference.
    assert jnp.allclose(enc, enc_ref, atol=3e-2, rtol=3e-2), \
        float(jnp.max(jnp.abs(enc - enc_ref)))
    assert jnp.allclose(dec, dec_ref, atol=3e-2, rtol=3e-2), \
        float(jnp.max(jnp.abs(dec - dec_ref)))

    print("KERNEL_OK")
</pallas_src>

<mosaic_0001>
module attributes {stable_mosaic.version = 11 : i64} {
  func.func @_autoencoder_kernel(%arg0: i32, %arg1: memref<128x784xf32, #tpu.memory_space<vmem>>, %arg2: memref<784x128xbf16, #tpu.memory_space<vmem>>, %arg3: memref<1x128xf32, #tpu.memory_space<vmem>>, %arg4: memref<128x64xbf16, #tpu.memory_space<vmem>>, %arg5: memref<1x64xf32, #tpu.memory_space<vmem>>, %arg6: memref<64x12xbf16, #tpu.memory_space<vmem>>, %arg7: memref<1x12xf32, #tpu.memory_space<vmem>>, %arg8: memref<12x3xbf16, #tpu.memory_space<vmem>>, %arg9: memref<1x3xf32, #tpu.memory_space<vmem>>, %arg10: memref<3x12xbf16, #tpu.memory_space<vmem>>, %arg11: memref<1x12xf32, #tpu.memory_space<vmem>>, %arg12: memref<12x64xbf16, #tpu.memory_space<vmem>>, %arg13: memref<1x64xf32, #tpu.memory_space<vmem>>, %arg14: memref<64x128xbf16, #tpu.memory_space<vmem>>, %arg15: memref<1x128xf32, #tpu.memory_space<vmem>>, %arg16: memref<128x784xbf16, #tpu.memory_space<vmem>>, %arg17: memref<1x784xf32, #tpu.memory_space<vmem>>, %arg18: memref<128x3xf32, #tpu.memory_space<vmem>>, %arg19: memref<128x784xf32, #tpu.memory_space<vmem>>) attributes {dimension_semantics = [#tpu.dimension_semantics<parallel>], iteration_bounds = array<i64: 2>, scalar_prefetch = 0 : i64, scratch_operands = 0 : i64, tpu.core_type = #tpu.core_type<tc>, window_params = [{transform_indices = @transform_0, window_bounds = array<i64: 128, 784>}, {pipeline_mode = #tpu.pipeline_mode<synchronous>, transform_indices = @transform_1, window_bounds = array<i64: 784, 128>}, {pipeline_mode = #tpu.pipeline_mode<synchronous>, transform_indices = @transform_2, window_bounds = array<i64: 1, 128>}, {pipeline_mode = #tpu.pipeline_mode<synchronous>, transform_indices = @transform_3, window_bounds = array<i64: 128, 64>}, {pipeline_mode = #tpu.pipeline_mode<synchronous>, transform_indices = @transform_4, window_bounds = array<i64: 1, 64>}, {pipeline_mode = #tpu.pipeline_mode<synchronous>, transform_indices = @transform_5, window_bounds = array<i64: 64, 12>}, {pipeline_mode = #tpu.pipeline_mode<synchronous>, transform_indices = @transform_6, window_bounds = array<i64: 1, 12>}, {pipeline_mode = #tpu.pipeline_mode<synchronous>, transform_indices = @transform_7, window_bounds = array<i64: 12, 3>}, {pipeline_mode = #tpu.pipeline_mode<synchronous>, transform_indices = @transform_8, window_bounds = array<i64: 1, 3>}, {pipeline_mode = #tpu.pipeline_mode<synchronous>, transform_indices = @transform_9, window_bounds = array<i64: 3, 12>}, {pipeline_mode = #tpu.pipeline_mode<synchronous>, transform_indices = @transform_10, window_bounds = array<i64: 1, 12>}, {pipeline_mode = #tpu.pipeline_mode<synchronous>, transform_indices = @transform_11, window_bounds = array<i64: 12, 64>}, {pipeline_mode = #tpu.pipeline_mode<synchronous>, transform_indices = @transform_12, window_bounds = array<i64: 1, 64>}, {pipeline_mode = #tpu.pipeline_mode<synchronous>, transform_indices = @transform_13, window_bounds = array<i64: 64, 128>}, {pipeline_mode = #tpu.pipeline_mode<synchronous>, transform_indices = @transform_14, window_bounds = array<i64: 1, 128>}, {pipeline_mode = #tpu.pipeline_mode<synchronous>, transform_indices = @transform_15, window_bounds = array<i64: 128, 784>}, {pipeline_mode = #tpu.pipeline_mode<synchronous>, transform_indices = @transform_16, window_bounds = array<i64: 1, 784>}, {transform_indices = @transform_17, window_bounds = array<i64: 128, 3>}, {transform_indices = @transform_18, window_bounds = array<i64: 128, 784>}]} {
    %c0 = arith.constant 0 : index
    %c0_0 = arith.constant 0 : index
    %0 = vector.load %arg1[%c0, %c0_0] : memref<128x784xf32, #tpu.memory_space<vmem>>, vector<128x784xf32>
    %1 = arith.truncf %0 : vector<128x784xf32> to vector<128x784xbf16>
    %c0_1 = arith.constant 0 : index
    %c0_2 = arith.constant 0 : index
    %2 = vector.load %arg2[%c0_1, %c0_2] : memref<784x128xbf16, #tpu.memory_space<vmem>>, vector<784x128xbf16>
    %cst = arith.constant dense<0.000000e+00> : vector<128x128xf32>
    %3 = tpu.matmul %1, %2, %cst {dimension_numbers = #tpu.dot_dimension_numbers<[1], [0], [0], [1], [0, 0, 1, 1], [], []>} : vector<128x784xbf16>, vector<784x128xbf16>, vector<128x128xf32> -> vector<128x128xf32>
    %c0_3 = arith.constant 0 : index
    %c0_4 = arith.constant 0 : index
    %4 = vector.load %arg3[%c0_3, %c0_4] : memref<1x128xf32, #tpu.memory_space<vmem>>, vector<1x128xf32>
    %5 = vector.broadcast %4 : vector<1x128xf32> to vector<128x128xf32>
    %6 = arith.addf %3, %5 : vector<128x128xf32>
    %7 = math.tanh %6 : vector<128x128xf32>
    %8 = arith.truncf %7 : vector<128x128xf32> to vector<128x128xbf16>
    %c0_5 = arith.constant 0 : index
    %c0_6 = arith.constant 0 : index
    %9 = vector.load %arg4[%c0_5, %c0_6] : memref<128x64xbf16, #tpu.memory_space<vmem>>, vector<128x64xbf16>
    %cst_7 = arith.constant dense<0.000000e+00> : vector<128x64xf32>
    %10 = tpu.matmul %8, %9, %cst_7 {dimension_numbers = #tpu.dot_dimension_numbers<[1], [0], [0], [1], [0, 0, 1, 1], [], []>} : vector<128x128xbf16>, vector<128x64xbf16>, vector<128x64xf32> -> vector<128x64xf32>
    %c0_8 = arith.constant 0 : index
    %c0_9 = arith.constant 0 : index
    %11 = vector.load %arg5[%c0_8, %c0_9] : memref<1x64xf32, #tpu.memory_space<vmem>>, vector<1x64xf32>
    %12 = vector.broadcast %11 : vector<1x64xf32> to vector<128x64xf32>
    %13 = arith.addf %10, %12 : vector<128x64xf32>
    %14 = math.tanh %13 : vector<128x64xf32>
    %15 = arith.truncf %14 : vector<128x64xf32> to vector<128x64xbf16>
    %c0_10 = arith.constant 0 : index
    %c0_11 = arith.constant 0 : index
    %16 = vector.load %arg6[%c0_10, %c0_11] : memref<64x12xbf16, #tpu.memory_space<vmem>>, vector<64x12xbf16>
    %cst_12 = arith.constant dense<0.000000e+00> : vector<128x12xf32>
    %17 = tpu.matmul %15, %16, %cst_12 {dimension_numbers = #tpu.dot_dimension_numbers<[1], [0], [0], [1], [0, 0, 1, 1], [], []>} : vector<128x64xbf16>, vector<64x12xbf16>, vector<128x12xf32> -> vector<128x12xf32>
    %c0_13 = arith.constant 0 : index
    %c0_14 = arith.constant 0 : index
    %18 = vector.load %arg7[%c0_13, %c0_14] : memref<1x12xf32, #tpu.memory_space<vmem>>, vector<1x12xf32>
    %19 = vector.broadcast %18 : vector<1x12xf32> to vector<128x12xf32>
    %20 = arith.addf %17, %19 : vector<128x12xf32>
    %21 = math.tanh %20 : vector<128x12xf32>
    %22 = arith.truncf %21 : vector<128x12xf32> to vector<128x12xbf16>
    %c0_15 = arith.constant 0 : index
    %c0_16 = arith.constant 0 : index
    %23 = vector.load %arg8[%c0_15, %c0_16] : memref<12x3xbf16, #tpu.memory_space<vmem>>, vector<12x3xbf16>
    %cst_17 = arith.constant dense<0.000000e+00> : vector<128x3xf32>
    %24 = tpu.matmul %22, %23, %cst_17 {dimension_numbers = #tpu.dot_dimension_numbers<[1], [0], [0], [1], [0, 0, 1, 1], [], []>} : vector<128x12xbf16>, vector<12x3xbf16>, vector<128x3xf32> -> vector<128x3xf32>
    %c0_18 = arith.constant 0 : index
    %c0_19 = arith.constant 0 : index
    %25 = vector.load %arg9[%c0_18, %c0_19] : memref<1x3xf32, #tpu.memory_space<vmem>>, vector<1x3xf32>
    %26 = vector.broadcast %25 : vector<1x3xf32> to vector<128x3xf32>
    %27 = arith.addf %24, %26 : vector<128x3xf32>
    %c0_20 = arith.constant 0 : index
    %c0_21 = arith.constant 0 : index
    %28 = vector.load %arg18[%c0_20, %c0_21] : memref<128x3xf32, #tpu.memory_space<vmem>>, vector<128x3xf32>
    tpu.vector_store %arg18[%c0_20, %c0_21], %27 {strides = array<i32>} : memref<128x3xf32, #tpu.memory_space<vmem>>, vector<128x3xf32>,
    %29 = arith.truncf %27 : vector<128x3xf32> to vector<128x3xbf16>
    %c0_22 = arith.constant 0 : index
    %c0_23 = arith.constant 0 : index
    %30 = vector.load %arg10[%c0_22, %c0_23] : memref<3x12xbf16, #tpu.memory_space<vmem>>, vector<3x12xbf16>
    %cst_24 = arith.constant dense<0.000000e+00> : vector<128x12xf32>
    %31 = tpu.matmul %29, %30, %cst_24 {dimension_numbers = #tpu.dot_dimension_numbers<[1], [0], [0], [1], [0, 0, 1, 1], [], []>} : vector<128x3xbf16>, vector<3x12xbf16>, vector<128x12xf32> -> vector<128x12xf32>
    %c0_25 = arith.constant 0 : index
    %c0_26 = arith.constant 0 : index
    %32 = vector.load %arg11[%c0_25, %c0_26] : memref<1x12xf32, #tpu.memory_space<vmem>>, vector<1x12xf32>
    %33 = vector.broadcast %32 : vector<1x12xf32> to vector<128x12xf32>
    %34 = arith.addf %31, %33 : vector<128x12xf32>
    %35 = math.tanh %34 : vector<128x12xf32>
    %36 = arith.truncf %35 : vector<128x12xf32> to vector<128x12xbf16>
    %c0_27 = arith.constant 0 : index
    %c0_28 = arith.constant 0 : index
    %37 = vector.load %arg12[%c0_27, %c0_28] : memref<12x64xbf16, #tpu.memory_space<vmem>>, vector<12x64xbf16>
    %cst_29 = arith.constant dense<0.000000e+00> : vector<128x64xf32>
    %38 = tpu.matmul %36, %37, %cst_29 {dimension_numbers = #tpu.dot_dimension_numbers<[1], [0], [0], [1], [0, 0, 1, 1], [], []>} : vector<128x12xbf16>, vector<12x64xbf16>, vector<128x64xf32> -> vector<128x64xf32>
    %c0_30 = arith.constant 0 : index
    %c0_31 = arith.constant 0 : index
    %39 = vector.load %arg13[%c0_30, %c0_31] : memref<1x64xf32, #tpu.memory_space<vmem>>, vector<1x64xf32>
    %40 = vector.broadcast %39 : vector<1x64xf32> to vector<128x64xf32>
    %41 = arith.addf %38, %40 : vector<128x64xf32>
    %42 = math.tanh %41 : vector<128x64xf32>
    %43 = arith.truncf %42 : vector<128x64xf32> to vector<128x64xbf16>
    %c0_32 = arith.constant 0 : index
    %c0_33 = arith.constant 0 : index
    %44 = vector.load %arg14[%c0_32, %c0_33] : memref<64x128xbf16, #tpu.memory_space<vmem>>, vector<64x128xbf16>
    %cst_34 = arith.constant dense<0.000000e+00> : vector<128x128xf32>
    %45 = tpu.matmul %43, %44, %cst_34 {dimension_numbers = #tpu.dot_dimension_numbers<[1], [0], [0], [1], [0, 0, 1, 1], [], []>} : vector<128x64xbf16>, vector<64x128xbf16>, vector<128x128xf32> -> vector<128x128xf32>
    %c0_35 = arith.constant 0 : index
    %c0_36 = arith.constant 0 : index
    %46 = vector.load %arg15[%c0_35, %c0_36] : memref<1x128xf32, #tpu.memory_space<vmem>>, vector<1x128xf32>
    %47 = vector.broadcast %46 : vector<1x128xf32> to vector<128x128xf32>
    %48 = arith.addf %45, %47 : vector<128x128xf32>
    %49 = math.tanh %48 : vector<128x128xf32>
    %50 = arith.truncf %49 : vector<128x128xf32> to vector<128x128xbf16>
    %c0_37 = arith.constant 0 : index
    %c0_38 = arith.constant 0 : index
    %51 = vector.load %arg16[%c0_37, %c0_38] : memref<128x784xbf16, #tpu.memory_space<vmem>>, vector<128x784xbf16>
    %cst_39 = arith.constant dense<0.000000e+00> : vector<128x784xf32>
    %52 = tpu.matmul %50, %51, %cst_39 {dimension_numbers = #tpu.dot_dimension_numbers<[1], [0], [0], [1], [0, 0, 1, 1], [], []>} : vector<128x128xbf16>, vector<128x784xbf16>, vector<128x784xf32> -> vector<128x784xf32>
    %c0_40 = arith.constant 0 : index
    %c0_41 = arith.constant 0 : index
    %53 = vector.load %arg17[%c0_40, %c0_41] : memref<1x784xf32, #tpu.memory_space<vmem>>, vector<1x784xf32>
    %54 = vector.broadcast %53 : vector<1x784xf32> to vector<128x784xf32>
    %55 = arith.addf %52, %54 : vector<128x784xf32>
    %cst_42 = arith.constant 5.000000e-01 : f32
    %56 = vector.broadcast %cst_42 : f32 to vector<128x784xf32>
    %57 = arith.mulf %56, %55 : vector<128x784xf32>
    %58 = math.tanh %57 : vector<128x784xf32>
    %cst_43 = arith.constant 1.000000e+00 : f32
    %59 = vector.broadcast %cst_43 : f32 to vector<128x784xf32>
    %60 = arith.addf %58, %59 : vector<128x784xf32>
    %cst_44 = arith.constant 5.000000e-01 : f32
    %61 = vector.broadcast %cst_44 : f32 to vector<128x784xf32>
    %62 = arith.mulf %61, %60 : vector<128x784xf32>
    %c0_45 = arith.constant 0 : index
    %c0_46 = arith.constant 0 : index
    %63 = vector.load %arg19[%c0_45, %c0_46] : memref<128x784xf32, #tpu.memory_space<vmem>>, vector<128x784xf32>
    tpu.vector_store %arg19[%c0_45, %c0_46], %62 {strides = array<i32>} : memref<128x784xf32, #tpu.memory_space<vmem>>, vector<128x784xf32>,
    return
  }
  func.func @transform_0(%arg0: i32) -> (i32, i32) {
    %c0_i32 = arith.constant 0 : i32
    %c0_i32_0 = arith.constant 0 : i32
    return %arg0, %c0_i32 : i32, i32
  }
  func.func @transform_1(%arg0: i32) -> (i32, i32) {
    %c0_i32 = arith.constant 0 : i32
    %c0_i32_0 = arith.constant 0 : i32
    %c0_i32_1 = arith.constant 0 : i32
    return %c0_i32, %c0_i32_0 : i32, i32
  }
  func.func @transform_2(%arg0: i32) -> (i32, i32) {
    %c0_i32 = arith.constant 0 : i32
    %c0_i32_0 = arith.constant 0 : i32
    %c0_i32_1 = arith.constant 0 : i32
    return %c0_i32, %c0_i32_0 : i32, i32
  }
  func.func @transform_3(%arg0: i32) -> (i32, i32) {
    %c0_i32 = arith.constant 0 : i32
    %c0_i32_0 = arith.constant 0 : i32
    %c0_i32_1 = arith.constant 0 : i32
    return %c0_i32, %c0_i32_0 : i32, i32
  }
  func.func @transform_4(%arg0: i32) -> (i32, i32) {
    %c0_i32 = arith.constant 0 : i32
    %c0_i32_0 = arith.constant 0 : i32
    %c0_i32_1 = arith.constant 0 : i32
    return %c0_i32, %c0_i32_0 : i32, i32
  }
  func.func @transform_5(%arg0: i32) -> (i32, i32) {
    %c0_i32 = arith.constant 0 : i32
    %c0_i32_0 = arith.constant 0 : i32
    %c0_i32_1 = arith.constant 0 : i32
    return %c0_i32, %c0_i32_0 : i32, i32
  }
  func.func @transform_6(%arg0: i32) -> (i32, i32) {
    %c0_i32 = arith.constant 0 : i32
    %c0_i32_0 = arith.constant 0 : i32
    %c0_i32_1 = arith.constant 0 : i32
    return %c0_i32, %c0_i32_0 : i32, i32
  }
  func.func @transform_7(%arg0: i32) -> (i32, i32) {
    %c0_i32 = arith.constant 0 : i32
    %c0_i32_0 = arith.constant 0 : i32
    %c0_i32_1 = arith.constant 0 : i32
    return %c0_i32, %c0_i32_0 : i32, i32
  }
  func.func @transform_8(%arg0: i32) -> (i32, i32) {
    %c0_i32 = arith.constant 0 : i32
    %c0_i32_0 = arith.constant 0 : i32
    %c0_i32_1 = arith.constant 0 : i32
    return %c0_i32, %c0_i32_0 : i32, i32
  }
  func.func @transform_9(%arg0: i32) -> (i32, i32) {
    %c0_i32 = arith.constant 0 : i32
    %c0_i32_0 = arith.constant 0 : i32
    %c0_i32_1 = arith.constant 0 : i32
    return %c0_i32, %c0_i32_0 : i32, i32
  }
  func.func @transform_10(%arg0: i32) -> (i32, i32) {
    %c0_i32 = arith.constant 0 : i32
    %c0_i32_0 = arith.constant 0 : i32
    %c0_i32_1 = arith.constant 0 : i32
    return %c0_i32, %c0_i32_0 : i32, i32
  }
  func.func @transform_11(%arg0: i32) -> (i32, i32) {
    %c0_i32 = arith.constant 0 : i32
    %c0_i32_0 = arith.constant 0 : i32
    %c0_i32_1 = arith.constant 0 : i32
    return %c0_i32, %c0_i32_0 : i32, i32
  }
  func.func @transform_12(%arg0: i32) -> (i32, i32) {
    %c0_i32 = arith.constant 0 : i32
    %c0_i32_0 = arith.constant 0 : i32
    %c0_i32_1 = arith.constant 0 : i32
    return %c0_i32, %c0_i32_0 : i32, i32
  }
  func.func @transform_13(%arg0: i32) -> (i32, i32) {
    %c0_i32 = arith.constant 0 : i32
    %c0_i32_0 = arith.constant 0 : i32
    %c0_i32_1 = arith.constant 0 : i32
    return %c0_i32, %c0_i32_0 : i32, i32
  }
  func.func @transform_14(%arg0: i32) -> (i32, i32) {
    %c0_i32 = arith.constant 0 : i32
    %c0_i32_0 = arith.constant 0 : i32
    %c0_i32_1 = arith.constant 0 : i32
    return %c0_i32, %c0_i32_0 : i32, i32
  }
  func.func @transform_15(%arg0: i32) -> (i32, i32) {
    %c0_i32 = arith.constant 0 : i32
    %c0_i32_0 = arith.constant 0 : i32
    %c0_i32_1 = arith.constant 0 : i32
    return %c0_i32, %c0_i32_0 : i32, i32
  }
  func.func @transform_16(%arg0: i32) -> (i32, i32) {
    %c0_i32 = arith.constant 0 : i32
    %c0_i32_0 = arith.constant 0 : i32
    %c0_i32_1 = arith.constant 0 : i32
    return %c0_i32, %c0_i32_0 : i32, i32
  }
  func.func @transform_17(%arg0: i32) -> (i32, i32) {
    %c0_i32 = arith.constant 0 : i32
    %c0_i32_0 = arith.constant 0 : i32
    return %arg0, %c0_i32 : i32, i32
  }
  func.func @transform_18(%arg0: i32) -> (i32, i32) {
    %c0_i32 = arith.constant 0 : i32
    %c0_i32_0 = arith.constant 0 : i32
    return %arg0, %c0_i32 : i32, i32
  }
}

</mosaic_0001>

<llo_original>
// kernel: autoencoder_forward.1
$region0: #{autoencoder_forward.1}
  #allocation0 [shape = 'u32[]', space=smem, size = 0x4, offset = 0x4, fixed_abs, tag = 'smem constant byte address 0x4 - core index']
  #allocation1 [shape = 'u32[144,128]{1,0:T(1,128)}', space=vmem, size = 0x12000, scoped, tag = 'internal scratch']
  %s0 = inlined_call_operand.vmem [shape: f32[256,784], index: 0, kind: input, shape index: {}]
  %s1 = inlined_call_operand.vmem [shape: bf16[784,128], index: 1, kind: input, shape index: {}]
  %s2 = inlined_call_operand.vmem [shape: f32[1,128], index: 2, kind: input, shape index: {}]
  %s3 = inlined_call_operand.vmem [shape: bf16[128,64], index: 3, kind: input, shape index: {}]
  %s4 = inlined_call_operand.vmem [shape: f32[1,64], index: 4, kind: input, shape index: {}]
  %s5 = inlined_call_operand.vmem [shape: bf16[64,12], index: 5, kind: input, shape index: {}]
  %s6 = inlined_call_operand.vmem [shape: f32[1,12], index: 6, kind: input, shape index: {}]
  %s7 = inlined_call_operand.vmem [shape: bf16[12,3], index: 7, kind: input, shape index: {}]
  %s8 = inlined_call_operand.vmem [shape: f32[1,3], index: 8, kind: input, shape index: {}]
  %s9 = inlined_call_operand.vmem [shape: bf16[3,12], index: 9, kind: input, shape index: {}]
  %s10 = inlined_call_operand.vmem [shape: f32[1,12], index: 10, kind: input, shape index: {}]
  %s11 = inlined_call_operand.vmem [shape: bf16[12,64], index: 11, kind: input, shape index: {}]
  %s12 = inlined_call_operand.vmem [shape: f32[1,64], index: 12, kind: input, shape index: {}]
  %s13 = inlined_call_operand.vmem [shape: bf16[64,128], index: 13, kind: input, shape index: {}]
  %s14 = inlined_call_operand.vmem [shape: f32[1,128], index: 14, kind: input, shape index: {}]
  %s15 = inlined_call_operand.vmem [shape: bf16[128,784], index: 15, kind: input, shape index: {}]
  %s16 = inlined_call_operand.vmem [shape: f32[1,784], index: 16, kind: input, shape index: {}]
  %s17 = inlined_call_operand.vmem [shape: f32[256,3], index: 17, kind: output, shape index: {0}]
  %s18 = inlined_call_operand.vmem [shape: f32[256,784], index: 18, kind: output, shape index: {1}]
  %19 = xla_tuple %s17, %s18
  %s20 = sld [smem:[#allocation0]]
  $region109: #{autoencoder_forward.1} parent=0
    _
  %s22 = ssub.s32 1, %s20
  %s23 = scalar_select 0, %s22, %s20
  loop: start=0, step=1, limit=4
  $region2: #{autoencoder_forward.1} parent=0 // loop_pre_header
    _
  $region3: #{autoencoder_forward.1} parent=0 // loop_header
    %s25 = sphi 0, %s29
    %p26 = scmp.ge.s32.totalorder %s25, 4
    %s35 = sphi 0, %s37
    %s38 = sphi 0, %s35
    %s39 = sphi 0, %s38
    %s55 = sphi 0, %s39
    %s59 = sphi 0, %s59
    %s61 = sphi 0, %s59
    %s62 = sphi 0, %s61
    %s76 = sphi 0, %s62
    %s80 = sphi 0, %s80
    %s82 = sphi 0, %s80
    %s83 = sphi 0, %s82
    %s97 = sphi 0, %s83
    %s101 = sphi 0, %s101
    %s103 = sphi 0, %s101
    %s104 = sphi 0, %s103
    %s118 = sphi 0, %s104
    %s122 = sphi 0, %s122
    %s124 = sphi 0, %s122
    %s125 = sphi 0, %s124
    %s139 = sphi 0, %s125
    %s143 = sphi 0, %s143
    %s145 = sphi 0, %s143
    %s146 = sphi 0, %s145
    %s160 = sphi 0, %s146
    %s164 = sphi 0, %s164
    %s166 = sphi 0, %s164
    %s167 = sphi 0, %s166
    %s181 = sphi 0, %s167
    %s185 = sphi 0, %s185
    %s187 = sphi 0, %s185
    %s188 = sphi 0, %s187
    %s202 = sphi 0, %s188
    %s206 = sphi 0, %s206
    %s208 = sphi 0, %s206
    %s209 = sphi 0, %s208
    %s223 = sphi 0, %s209
    %s227 = sphi 0, %s227
    %s229 = sphi 0, %s227
    %s230 = sphi 0, %s229
    %s244 = sphi 0, %s230
    %s248 = sphi 0, %s248
    %s250 = sphi 0, %s248
    %s251 = sphi 0, %s250
    %s265 = sphi 0, %s251
    %s269 = sphi 0, %s269
    %s271 = sphi 0, %s269
    %s272 = sphi 0, %s271
    %s286 = sphi 0, %s272
    %s290 = sphi 0, %s290
    %s292 = sphi 0, %s290
    %s293 = sphi 0, %s292
    %s307 = sphi 0, %s293
    %s311 = sphi 0, %s311
    %s313 = sphi 0, %s311
    %s314 = sphi 0, %s313
    %s328 = sphi 0, %s314
    %s332 = sphi 0, %s332
    %s334 = sphi 0, %s332
    %s335 = sphi 0, %s334
    %s349 = sphi 0, %s335
    %s353 = sphi 0, %s353
    %s355 = sphi 0, %s353
    %s356 = sphi 0, %s355
    %s370 = sphi 0, %s356
    %s374 = sphi 0, %s374
    %s376 = sphi 0, %s374
    %s377 = sphi 0, %s376
    %s391 = sphi 0, %s377
    %s397 = sphi 0, %s399
    %s400 = sphi 0, %s397
    %s401 = sphi 0, %s400
    %s417 = sphi 0, %s401
    %s423 = sphi 0, %s425
    %s426 = sphi 0, %s423
    %s427 = sphi 0, %s426
    %s443 = sphi 0, %s427
  $region4: #{autoencoder_forward.1} parent=0 // loop_header_branch
    %28 = sbr.rel (%p26) target = $region8
  $region5: #{autoencoder_forward.1} parent=0 // loop_body
    %s30 = ssub.s32 %s25, 1
    %s31 = ssub.s32 %s25, 2
    %s32 = sadd.s32 %s25, 1
    %s33 = ssub.s32 %s25, %s32
    %p34 = scmp.eq.s32.totalorder %s33, 0
    %s36 = sadd.s32 %s35, 1
    %s37 = scalar_select %p34, %s35, %s36
    %p40 = pneg %p34
    %p41 = scmp.eq.s32.totalorder %s25, 1
    %p42 = por %p40, %p41
    %p43 = scmp.ne.s32.totalorder %s35, %s38
    %p44 = scmp.eq.s32.totalorder %s25, 0
    %p45 = por %p43, %p44
    %p46 = scmp.ne.s32.totalorder %s35, %s38
    %p47 = scmp.eq.s32.totalorder %s30, 1
    %p48 = por %p46, %p47
    %p49 = scmp.ne.s32.totalorder %s38, %s39
    %p50 = scmp.eq.s32.totalorder %s30, 0
    %p51 = por %p49, %p50
    %p52 = scmp.ne.s32.totalorder %s38, %s39
    %p53 = scmp.eq.s32.totalorder %s31, 1
    %p54 = por %p52, %p53
    %p56 = scmp.ne.s32.totalorder %s39, %s55
    %p57 = scmp.eq.s32.totalorder %s31, 0
    %p58 = por %p56, %p57
    %s60 = sadd.s32 %s59, 1
    %p63 = scmp.eq.s32.totalorder %s25, 1
    %p64 = scmp.ne.s32.totalorder %s59, %s61
    %p65 = scmp.eq.s32.totalorder %s25, 0
    %p66 = por %p64, %p65
    %p67 = scmp.ne.s32.totalorder %s59, %s61
    %p68 = scmp.eq.s32.totalorder %s30, 1
    %p69 = por %p67, %p68
    %p70 = scmp.ne.s32.totalorder %s61, %s62
    %p71 = scmp.eq.s32.totalorder %s30, 0
    %p72 = por %p70, %p71
    %p73 = scmp.ne.s32.totalorder %s61, %s62
    %p74 = scmp.eq.s32.totalorder %s31, 1
    %p75 = por %p73, %p74
    %p77 = scmp.ne.s32.totalorder %s62, %s76
    %p78 = scmp.eq.s32.totalorder %s31, 0
    %p79 = por %p77, %p78
    %s81 = sadd.s32 %s80, 1
    %p84 = scmp.eq.s32.totalorder %s25, 1
    %p85 = scmp.ne.s32.totalorder %s80, %s82
    %p86 = scmp.eq.s32.totalorder %s25, 0
    %p87 = por %p85, %p86
    %p88 = scmp.ne.s32.totalorder %s80, %s82
    %p89 = scmp.eq.s32.totalorder %s30, 1
    %p90 = por %p88, %p89
    %p91 = scmp.ne.s32.totalorder %s82, %s83
    %p92 = scmp.eq.s32.totalorder %s30, 0
    %p93 = por %p91, %p92
    %p94 = scmp.ne.s32.totalorder %s82, %s83
    %p95 = scmp.eq.s32.totalorder %s31, 1
    %p96 = por %p94, %p95
    %p98 = scmp.ne.s32.totalorder %s83, %s97
    %p99 = scmp.eq.s32.totalorder %s31, 0
    %p100 = por %p98, %p99
    %s102 = sadd.s32 %s101, 1
    %p105 = scmp.eq.s32.totalorder %s25, 1
    %p106 = scmp.ne.s32.totalorder %s101, %s103
    %p107 = scmp.eq.s32.totalorder %s25, 0
    %p108 = por %p106, %p107
    %p109 = scmp.ne.s32.totalorder %s101, %s103
    %p110 = scmp.eq.s32.totalorder %s30, 1
    %p111 = por %p109, %p110
    %p112 = scmp.ne.s32.totalorder %s103, %s104
    %p113 = scmp.eq.s32.totalorder %s30, 0
    %p114 = por %p112, %p113
    %p115 = scmp.ne.s32.totalorder %s103, %s104
    %p116 = scmp.eq.s32.totalorder %s31, 1
    %p117 = por %p115, %p116
    %p119 = scmp.ne.s32.totalorder %s104, %s118
    %p120 = scmp.eq.s32.totalorder %s31, 0
    %p121 = por %p119, %p120
    %s123 = sadd.s32 %s122, 1
    %p126 = scmp.eq.s32.totalorder %s25, 1
    %p127 = scmp.ne.s32.totalorder %s122, %s124
    %p128 = scmp.eq.s32.totalorder %s25, 0
    %p129 = por %p127, %p128
    %p130 = scmp.ne.s32.totalorder %s122, %s124
    %p131 = scmp.eq.s32.totalorder %s30, 1
    %p132 = por %p130, %p131
    %p133 = scmp.ne.s32.totalorder %s124, %s125
    %p134 = scmp.eq.s32.totalorder %s30, 0
    %p135 = por %p133, %p134
    %p136 = scmp.ne.s32.totalorder %s124, %s125
    %p137 = scmp.eq.s32.totalorder %s31, 1
    %p138 = por %p136, %p137
    %p140 = scmp.ne.s32.totalorder %s125, %s139
    %p141 = scmp.eq.s32.totalorder %s31, 0
    %p142 = por %p140, %p141
    %s144 = sadd.s32 %s143, 1
    %p147 = scmp.eq.s32.totalorder %s25, 1
    %p148 = scmp.ne.s32.totalorder %s143, %s145
    %p149 = scmp.eq.s32.totalorder %s25, 0
    %p150 = por %p148, %p149
    %p151 = scmp.ne.s32.totalorder %s143, %s145
    %p152 = scmp.eq.s32.totalorder %s30, 1
    %p153 = por %p151, %p152
    %p154 = scmp.ne.s32.totalorder %s145, %s146
    %p155 = scmp.eq.s32.totalorder %s30, 0
    %p156 = por %p154, %p155
    %p157 = scmp.ne.s32.totalorder %s145, %s146
    %p158 = scmp.eq.s32.totalorder %s31, 1
    %p159 = por %p157, %p158
    %p161 = scmp.ne.s32.totalorder %s146, %s160
    %p162 = scmp.eq.s32.totalorder %s31, 0
    %p163 = por %p161, %p162
    %s165 = sadd.s32 %s164, 1
    %p168 = scmp.eq.s32.totalorder %s25, 1
    %p169 = scmp.ne.s32.totalorder %s164, %s166
    %p170 = scmp.eq.s32.totalorder %s25, 0
    %p171 = por %p169, %p170
    %p172 = scmp.ne.s32.totalorder %s164, %s166
    %p173 = scmp.eq.s32.totalorder %s30, 1
    %p174 = por %p172, %p173
    %p175 = scmp.ne.s32.totalorder %s166, %s167
    %p176 = scmp.eq.s32.totalorder %s30, 0
    %p177 = por %p175, %p176
    %p178 = scmp.ne.s32.totalorder %s166, %s167
    %p179 = scmp.eq.s32.totalorder %s31, 1
    %p180 = por %p178, %p179
    %p182 = scmp.ne.s32.totalorder %s167, %s181
    %p183 = scmp.eq.s32.totalorder %s31, 0
    %p184 = por %p182, %p183
    %s186 = sadd.s32 %s185, 1
    %p189 = scmp.eq.s32.totalorder %s25, 1
    %p190 = scmp.ne.s32.totalorder %s185, %s187
    %p191 = scmp.eq.s32.totalorder %s25, 0
    %p192 = por %p190, %p191
    %p193 = scmp.ne.s32.totalorder %s185, %s187
    %p194 = scmp.eq.s32.totalorder %s30, 1
    %p195 = por %p193, %p194
    %p196 = scmp.ne.s32.totalorder %s187, %s188
    %p197 = scmp.eq.s32.totalorder %s30, 0
    %p198 = por %p196, %p197
    %p199 = scmp.ne.s32.totalorder %s187, %s188
    %p200 = scmp.eq.s32.totalorder %s31, 1
    %p201 = por %p199, %p200
    %p203 = scmp.ne.s32.totalorder %s188, %s202
    %p204 = scmp.eq.s32.totalorder %s31, 0
    %p205 = por %p203, %p204
    %s207 = sadd.s32 %s206, 1
    %p210 = scmp.eq.s32.totalorder %s25, 1
    %p211 = scmp.ne.s32.totalorder %s206, %s208
    %p212 = scmp.eq.s32.totalorder %s25, 0
    %p213 = por %p211, %p212
    %p214 = scmp.ne.s32.totalorder %s206, %s208
    %p215 = scmp.eq.s32.totalorder %s30, 1
    %p216 = por %p214, %p215
    %p217 = scmp.ne.s32.totalorder %s208, %s209
    %p218 = scmp.eq.s32.totalorder %s30, 0
    %p219 = por %p217, %p218
    %p220 = scmp.ne.s32.totalorder %s208, %s209
    %p221 = scmp.eq.s32.totalorder %s31, 1
    %p222 = por %p220, %p221
    %p224 = scmp.ne.s32.totalorder %s209, %s223
    %p225 = scmp.eq.s32.totalorder %s31, 0
    %p226 = por %p224, %p225
    %s228 = sadd.s32 %s227, 1
    %p231 = scmp.eq.s32.totalorder %s25, 1
    %p232 = scmp.ne.s32.totalorder %s227, %s229
    %p233 = scmp.eq.s32.totalorder %s25, 0
    %p234 = por %p232, %p233
    %p235 = scmp.ne.s32.totalorder %s227, %s229
    %p236 = scmp.eq.s32.totalorder %s30, 1
    %p237 = por %p235, %p236
    %p238 = scmp.ne.s32.totalorder %s229, %s230
    %p239 = scmp.eq.s32.totalorder %s30, 0
    %p240 = por %p238, %p239
    %p241 = scmp.ne.s32.totalorder %s229, %s230
    %p242 = scmp.eq.s32.totalorder %s31, 1
    %p243 = por %p241, %p242
    %p245 = scmp.ne.s32.totalorder %s230, %s244
    %p246 = scmp.eq.s32.totalorder %s31, 0
    %p247 = por %p245, %p246
    %s249 = sadd.s32 %s248, 1
    %p252 = scmp.eq.s32.totalorder %s25, 1
    %p253 = scmp.ne.s32.totalorder %s248, %s250
    %p254 = scmp.eq.s32.totalorder %s25, 0
    %p255 = por %p253, %p254
    %p256 = scmp.ne.s32.totalorder %s248, %s250
    %p257 = scmp.eq.s32.totalorder %s30, 1
    %p258 = por %p256, %p257
    %p259 = scmp.ne.s32.totalorder %s250, %s251
    %p260 = scmp.eq.s32.totalorder %s30, 0
    %p261 = por %p259, %p260
    %p262 = scmp.ne.s32.totalorder %s250, %s251
    %p263 = scmp.eq.s32.totalorder %s31, 1
    %p264 = por %p262, %p263
    %p266 = scmp.ne.s32.totalorder %s251, %s265
    %p267 = scmp.eq.s32.totalorder %s31, 0
    %p268 = por %p266, %p267
    %s270 = sadd.s32 %s269, 1
    %p273 = scmp.eq.s32.totalorder %s25, 1
    %p274 = scmp.ne.s32.totalorder %s269, %s271
    %p275 = scmp.eq.s32.totalorder %s25, 0
    %p276 = por %p274, %p275
    %p277 = scmp.ne.s32.totalorder %s269, %s271
    %p278 = scmp.eq.s32.totalorder %s30, 1
    %p279 = por %p277, %p278
    %p280 = scmp.ne.s32.totalorder %s271, %s272
    %p281 = scmp.eq.s32.totalorder %s30, 0
    %p282 = por %p280, %p281
    %p283 = scmp.ne.s32.totalorder %s271, %s272
    %p284 = scmp.eq.s32.totalorder %s31, 1
    %p285 = por %p283, %p284
    %p287 = scmp.ne.s32.totalorder %s272, %s286
    %p288 = scmp.eq.s32.totalorder %s31, 0
    %p289 = por %p287, %p288
    %s291 = sadd.s32 %s290, 1
    %p294 = scmp.eq.s32.totalorder %s25, 1
    %p295 = scmp.ne.s32.totalorder %s290, %s292
    %p296 = scmp.eq.s32.totalorder %s25, 0
    %p297 = por %p295, %p296
    %p298 = scmp.ne.s32.totalorder %s290, %s292
    %p299 = scmp.eq.s32.totalorder %s30, 1
    %p300 = por %p298, %p299
    %p301 = scmp.ne.s32.totalorder %s292, %s293
    %p302 = scmp.eq.s32.totalorder %s30, 0
    %p303 = por %p301, %p302
    %p304 = scmp.ne.s32.totalorder %s292, %s293
    %p305 = scmp.eq.s32.totalorder %s31, 1
    %p306 = por %p304, %p305
    %p308 = scmp.ne.s32.totalorder %s293, %s307
    %p309 = scmp.eq.s32.totalorder %s31, 0
    %p310 = por %p308, %p309
    %s312 = sadd.s32 %s311, 1
    %p315 = scmp.eq.s32.totalorder %s25, 1
    %p316 = scmp.ne.s32.totalorder %s311, %s313
    %p317 = scmp.eq.s32.totalorder %s25, 0
    %p318 = por %p316, %p317
    %p319 = scmp.ne.s32.totalorder %s311, %s313
    %p320 = scmp.eq.s32.totalorder %s30, 1
    %p321 = por %p319, %p320
    %p322 = scmp.ne.s32.totalorder %s313, %s314
    %p323 = scmp.eq.s32.totalorder %s30, 0
    %p324 = por %p322, %p323
    %p325 = scmp.ne.s32.totalorder %s313, %s314
    %p326 = scmp.eq.s32.totalorder %s31, 1
    %p327 = por %p325, %p326
    %p329 = scmp.ne.s32.totalorder %s314, %s328
    %p330 = scmp.eq.s32.totalorder %s31, 0
    %p331 = por %p329, %p330
    %s333 = sadd.s32 %s332, 1
    %p336 = scmp.eq.s32.totalorder %s25, 1
    %p337 = scmp.ne.s32.totalorder %s332, %s334
    %p338 = scmp.eq.s32.totalorder %s25, 0
    %p339 = por %p337, %p338
    %p340 = scmp.ne.s32.totalorder %s332, %s334
    %p341 = scmp.eq.s32.totalorder %s30, 1
    %p342 = por %p340, %p341
    %p343 = scmp.ne.s32.totalorder %s334, %s335
    %p344 = scmp.eq.s32.totalorder %s30, 0
    %p345 = por %p343, %p344
    %p346 = scmp.ne.s32.totalorder %s334, %s335
    %p347 = scmp.eq.s32.totalorder %s31, 1
    %p348 = por %p346, %p347
    %p350 = scmp.ne.s32.totalorder %s335, %s349
    %p351 = scmp.eq.s32.totalorder %s31, 0
    %p352 = por %p350, %p351
    %s354 = sadd.s32 %s353, 1
    %p357 = scmp.eq.s32.totalorder %s25, 1
    %p358 = scmp.ne.s32.totalorder %s353, %s355
    %p359 = scmp.eq.s32.totalorder %s25, 0
    %p360 = por %p358, %p359
    %p361 = scmp.ne.s32.totalorder %s353, %s355
    %p362 = scmp.eq.s32.totalorder %s30, 1
    %p363 = por %p361, %p362
    %p364 = scmp.ne.s32.totalorder %s355, %s356
    %p365 = scmp.eq.s32.totalorder %s30, 0
    %p366 = por %p364, %p365
    %p367 = scmp.ne.s32.totalorder %s355, %s356
    %p368 = scmp.eq.s32.totalorder %s31, 1
    %p369 = por %p367, %p368
    %p371 = scmp.ne.s32.totalorder %s356, %s370
    %p372 = scmp.eq.s32.totalorder %s31, 0
    %p373 = por %p371, %p372
    %s375 = sadd.s32 %s374, 1
    %p378 = scmp.eq.s32.totalorder %s25, 1
    %p379 = scmp.ne.s32.totalorder %s374, %s376
    %p380 = scmp.eq.s32.totalorder %s25, 0
    %p381 = por %p379, %p380
    %p382 = scmp.ne.s32.totalorder %s374, %s376
    %p383 = scmp.eq.s32.totalorder %s30, 1
    %p384 = por %p382, %p383
    %p385 = scmp.ne.s32.totalorder %s376, %s377
    %p386 = scmp.eq.s32.totalorder %s30, 0
    %p387 = por %p385, %p386
    %p388 = scmp.ne.s32.totalorder %s376, %s377
    %p389 = scmp.eq.s32.totalorder %s31, 1
    %p390 = por %p388, %p389
    %p392 = scmp.ne.s32.totalorder %s377, %s391
    %p393 = scmp.eq.s32.totalorder %s31, 0
    %p394 = por %p392, %p393
    %s395 = ssub.s32 %s25, %s32
    %p396 = scmp.eq.s32.totalorder %s395, 0
    %s398 = sadd.s32 %s397, 1
    %s399 = scalar_select %p396, %s397, %s398
    %p402 = pneg %p396
    %p403 = scmp.eq.s32.totalorder %s25, 1
    %p404 = por %p402, %p403
    %p405 = scmp.ne.s32.totalorder %s397, %s400
    %p406 = scmp.eq.s32.totalorder %s25, 0
    %p407 = por %p405, %p406
    %p408 = scmp.ne.s32.totalorder %s397, %s400
    %p409 = scmp.eq.s32.totalorder %s30, 1
    %p410 = por %p408, %p409
    %p411 = scmp.ne.s32.totalorder %s400, %s401
    %p412 = scmp.eq.s32.totalorder %s30, 0
    %p413 = por %p411, %p412
    %p414 = scmp.ne.s32.totalorder %s400, %s401
    %p415 = scmp.eq.s32.totalorder %s31, 1
    %p416 = por %p414, %p415
    %p418 = scmp.ne.s32.totalorder %s401, %s417
    %p419 = scmp.eq.s32.totalorder %s31, 0
    %p420 = por %p418, %p419
    %s421 = ssub.s32 %s25, %s32
    %p422 = scmp.eq.s32.totalorder %s421, 0
    %s424 = sadd.s32 %s423, 1
    %s425 = scalar_select %p422, %s423, %s424
    %p428 = pneg %p422
    %p429 = scmp.eq.s32.totalorder %s25, 1
    %p430 = por %p428, %p429
    %p431 = scmp.ne.s32.totalorder %s423, %s426
    %p432 = scmp.eq.s32.totalorder %s25, 0
    %p433 = por %p431, %p432
    %p434 = scmp.ne.s32.totalorder %s423, %s426
    %p435 = scmp.eq.s32.totalorder %s30, 1
    %p436 = por %p434, %p435
    %p437 = scmp.ne.s32.totalorder %s426, %s427
    %p438 = scmp.eq.s32.totalorder %s30, 0
    %p439 = por %p437, %p438
    %p440 = scmp.ne.s32.totalorder %s426, %s427
    %p441 = scmp.eq.s32.totalorder %s31, 1
    %p442 = por %p440, %p441
    %p444 = scmp.ne.s32.totalorder %s427, %s443
    %p445 = scmp.eq.s32.totalorder %s31, 0
    %p446 = por %p444, %p445
    %p447 = scmp.le.s32.totalorder 1, %s25
    %p448 = scmp.lt.s32.totalorder %s25, 3
    %p449 = pnand %p447, %p448
    %p450 = pneg %p449
    // Predicated region
    $region9: #{autoencoder_forward.1} parent=5 // pred_check
      _
    $region10: #{autoencoder_forward.1} parent=5 // pred_check_branch
      %452 = sbr.rel (%p449) target = $region12
    $region11: #{autoencoder_forward.1} parent=5 // pred_region
      %s453 = ssub.s32 %s25, 1
      // Predicated region
      $region13: #{autoencoder_forward.1} parent=11 // pred_check
        %p454 = pneg %p72
      $region14: #{autoencoder_forward.1} parent=11 // pred_check_branch
        %456 = sbr.rel (%p454) target = $region16
      $region15: #{autoencoder_forward.1} parent=11 // pred_region
        _
      $region16: #{autoencoder_forward.1} parent=11 // pred_fallthru
        _
      // Predicated region
      $region17: #{autoencoder_forward.1} parent=11 // pred_check
        %p457 = pneg %p93
      $region18: #{autoencoder_forward.1} parent=11 // pred_check_branch
        %459 = sbr.rel (%p457) target = $region20
      $region19: #{autoencoder_forward.1} parent=11 // pred_region
        _
      $region20: #{autoencoder_forward.1} parent=11 // pred_fallthru
        _
      // Predicated region
      $region21: #{autoencoder_forward.1} parent=11 // pred_check
        %p460 = pneg %p114
      $region22: #{autoencoder_forward.1} parent=11 // pred_check_branch
        %462 = sbr.rel (%p460) target = $region24
      $region23: #{autoencoder_forward.1} parent=11 // pred_region
        _
      $region24: #{autoencoder_forward.1} parent=11 // pred_fallthru
        _
      // Predicated region
      $region25: #{autoencoder_forward.1} parent=11 // pred_check
        %p463 = pneg %p135
      $region26: #{autoencoder_forward.1} parent=11 // pred_check_branch
        %465 = sbr.rel (%p463) target = $region28
      $region27: #{autoencoder_forward.1} parent=11 // pred_region
        _
      $region28: #{autoencoder_forward.1} parent=11 // pred_fallthru
        _
      // Predicated region
      $region29: #{autoencoder_forward.1} parent=11 // pred_check
        %p466 = pneg %p156
      $region30: #{autoencoder_forward.1} parent=11 // pred_check_branch
        %468 = sbr.rel (%p466) target = $region32
      $region31: #{autoencoder_forward.1} parent=11 // pred_region
        _
      $region32: #{autoencoder_forward.1} parent=11 // pred_fallthru
        _
      // Predicated region
      $region33: #{autoencoder_forward.1} parent=11 // pred_check
        %p469 = pneg %p177
      $region34: #{autoencoder_forward.1} parent=11 // pred_check_branch
        %471 = sbr.rel (%p469) target = $region36
      $region35: #{autoencoder_forward.1} parent=11 // pred_region
        _
      $region36: #{autoencoder_forward.1} parent=11 // pred_fallthru
        _
      // Predicated region
      $region37: #{autoencoder_forward.1} parent=11 // pred_check
        %p472 = pneg %p198
      $region38: #{autoencoder_forward.1} parent=11 // pred_check_branch
        %474 = sbr.rel (%p472) target = $region40
      $region39: #{autoencoder_forward.1} parent=11 // pred_region
        _
      $region40: #{autoencoder_forward.1} parent=11 // pred_fallthru
        _
      // Predicated region
      $region41: #{autoencoder_forward.1} parent=11 // pred_check
        %p475 = pneg %p219
      $region42: #{autoencoder_forward.1} parent=11 // pred_check_branch
        %477 = sbr.rel (%p475) target = $region44
      $region43: #{autoencoder_forward.1} parent=11 // pred_region
        _
      $region44: #{autoencoder_forward.1} parent=11 // pred_fallthru
        _
      // Predicated region
      $region45: #{autoencoder_forward.1} parent=11 // pred_check
        %p478 = pneg %p240
      $region46: #{autoencoder_forward.1} parent=11 // pred_check_branch
        %480 = sbr.rel (%p478) target = $region48
      $region47: #{autoencoder_forward.1} parent=11 // pred_region
        _
      $region48: #{autoencoder_forward.1} parent=11 // pred_fallthru
        _
      // Predicated region
      $region49: #{autoencoder_forward.1} parent=11 // pred_check
        %p481 = pneg %p261
      $region50: #{autoencoder_forward.1} parent=11 // pred_check_branch
        %483 = sbr.rel (%p481) target = $region52
      $region51: #{autoencoder_forward.1} parent=11 // pred_region
        _
      $region52: #{autoencoder_forward.1} parent=11 // pred_fallthru
        _
      // Predicated region
      $region53: #{autoencoder_forward.1} parent=11 // pred_check
        %p484 = pneg %p282
      $region54: #{autoencoder_forward.1} parent=11 // pred_check_branch
        %486 = sbr.rel (%p484) target = $region56
      $region55: #{autoencoder_forward.1} parent=11 // pred_region
        _
      $region56: #{autoencoder_forward.1} parent=11 // pred_fallthru
        _
      // Predicated region
      $region57: #{autoencoder_forward.1} parent=11 // pred_check
        %p487 = pneg %p303
      $region58: #{autoencoder_forward.1} parent=11 // pred_check_branch
        %489 = sbr.rel (%p487) target = $region60
      $region59: #{autoencoder_forward.1} parent=11 // pred_region
        _
      $region60: #{autoencoder_forward.1} parent=11 // pred_fallthru
        _
      // Predicated region
      $region61: #{autoencoder_forward.1} parent=11 // pred_check
        %p490 = pneg %p324
      $region62: #{autoencoder_forward.1} parent=11 // pred_check_branch
        %492 = sbr.rel (%p490) target = $region64
      $region63: #{autoencoder_forward.1} parent=11 // pred_region
        _
      $region64: #{autoencoder_forward.1} parent=11 // pred_fallthru
        _
      // Predicated region
      $region65: #{autoencoder_forward.1} parent=11 // pred_check
        %p493 = pneg %p345
      $region66: #{autoencoder_forward.1} parent=11 // pred_check_branch
        %495 = sbr.rel (%p493) target = $region68
      $region67: #{autoencoder_forward.1} parent=11 // pred_region
        _
      $region68: #{autoencoder_forward.1} parent=11 // pred_fallthru
        _
      // Predicated region
      $region69: #{autoencoder_forward.1} parent=11 // pred_check
        %p496 = pneg %p366
      $region70: #{autoencoder_forward.1} parent=11 // pred_check_branch
        %498 = sbr.rel (%p496) target = $region72
      $region71: #{autoencoder_forward.1} parent=11 // pred_region
        _
      $region72: #{autoencoder_forward.1} parent=11 // pred_fallthru
        _
      // Predicated region
      $region73: #{autoencoder_forward.1} parent=11 // pred_check
        %p499 = pneg %p387
      $region74: #{autoencoder_forward.1} parent=11 // pred_check_branch
        %501 = sbr.rel (%p499) target = $region76
      $region75: #{autoencoder_forward.1} parent=11 // pred_region
        _
      $region76: #{autoencoder_forward.1} parent=11 // pred_fallthru
        _
    $region12: #{autoencoder_forward.1} parent=5 // pred_fallthru
      _
    %p502 = scmp.lt.s32.totalorder %s25, 2
    // Predicated region
    $region77: #{autoencoder_forward.1} parent=5 // pred_check
      %p503 = pneg %p502
    $region78: #{autoencoder_forward.1} parent=5 // pred_check_branch
      %505 = sbr.rel (%p503) target = $region80
    $region79: #{autoencoder_forward.1} parent=5 // pred_region
      // Predicated region
      $region81: #{autoencoder_forward.1} parent=79 // pred_check
        %p506 = pneg %p45
      $region82: #{autoencoder_forward.1} parent=79 // pred_check_branch
        %508 = sbr.rel (%p506) target = $region84
      $region83: #{autoencoder_forward.1} parent=79 // pred_region
        %s509 = smul.u32 16, %s25
        %p510 = scmp.lt.s32.totalorder %s509, 31
        %s511 = scalar_select %p510, %s509, 31
        %s512 = smul.addr %s511, 7
        %s513 = smul.addr %s512, 8
        %s514 = scalar_lea.vmem %s0, %s513
        %s515 = smul.u32 16, %s25
      $region84: #{autoencoder_forward.1} parent=79 // pred_fallthru
        _
    $region80: #{autoencoder_forward.1} parent=5 // pred_fallthru
      _
    %p516 = scmp.le.s32.totalorder 1, %s25
    %p517 = scmp.lt.s32.totalorder %s25, 3
    %p518 = pnand %p516, %p517
    %p519 = pneg %p518
    // Predicated region
    $region85: #{autoencoder_forward.1} parent=5 // pred_check
      _
    $region86: #{autoencoder_forward.1} parent=5 // pred_check_branch
      %521 = sbr.rel (%p518) target = $region88
    $region87: #{autoencoder_forward.1} parent=5 // pred_region
      %s522 = ssub.s32 %s25, 1
      %s523 = smul.u32 16, %s30
      %p524 = scmp.lt.s32.totalorder %s523, 31
      %s525 = scalar_select %p524, %s523, 31
      %s526 = smul.addr %s525, 7
      %s527 = smul.addr %s526, 8
      %s528 = scalar_lea.vmem %s0, %s527
      %p529 = pneg %p51
      %p530 = pneg %p48
      %p531 = pneg %p72
      %p532 = pneg %p69
      %p533 = pneg %p93
      %p534 = pneg %p90
      %p535 = pneg %p114
      %p536 = pneg %p111
      %p537 = pneg %p135
      %p538 = pneg %p132
      %p539 = pneg %p156
      %p540 = pneg %p153
      %p541 = pneg %p177
      %p542 = pneg %p174
      %p543 = pneg %p198
      %p544 = pneg %p195
      %p545 = pneg %p219
      %p546 = pneg %p216
      %p547 = pneg %p240
      %p548 = pneg %p237
      %p549 = pneg %p261
      %p550 = pneg %p258
      %p551 = pneg %p282
      %p552 = pneg %p279
      %p553 = pneg %p303
      %p554 = pneg %p300
      %p555 = pneg %p324
      %p556 = pneg %p321
      %p557 = pneg %p345
      %p558 = pneg %p342
      %p559 = pneg %p366
      %p560 = pneg %p363
      %p561 = pneg %p387
      %p562 = pneg %p384
      %p563 = pneg %p413
      %p564 = pneg %p410
      %s565 = smul.u32 16, %s30
      %p566 = scmp.lt.s32.totalorder %s565, 31
      %s567 = scalar_select %p566, %s565, 31
      %s568 = smul.addr %s567, 8
      %s569 = scalar_lea.vmem %s17, %s568
      %p570 = pneg %p439
      %p571 = pneg %p436
      %s572 = smul.u32 16, %s30
      %p573 = scmp.lt.s32.totalorder %s572, 31
      %s574 = scalar_select %p573, %s572, 31
      %s575 = smul.addr %s574, 7
      %s576 = smul.addr %s575, 8
      %s577 = scalar_lea.vmem %s18, %s576
      %s578 = smul.u32 16, %s30
      %p579 = scmp.lt.s32.totalorder %s578, 31
      %s580 = scalar_select %p579, %s578, 31
      %s581 = smul.addr %s580, 7
      %s582 = smul.addr %s581, 8
      %s583 = scalar_lea.vmem %s0, %s582
      %s584 = smul.u32 16, %s30
      %s585 = smul.u32 16, %s30
      %p586 = scmp.lt.s32.totalorder %s585, 31
      %s587 = scalar_select %p586, %s585, 31
      %s588 = smul.addr %s587, 8
      %s589 = scalar_lea.vmem %s17, %s588
      %s590 = smul.u32 16, %s30
      %s591 = smul.u32 16, %s30
      %p592 = scmp.lt.s32.totalorder %s591, 31
      %s593 = scalar_select %p592, %s591, 31
      %s594 = smul.addr %s593, 7
      %s595 = smul.addr %s594, 8
      %s596 = scalar_lea.vmem %s18, %s595
      %s597 = smul.u32 16, %s30
      %v599 = vld [vmem:[%s583] sm:$0xff]
      %v600 = vld [vmem:[%s583 + $0x8] sm:$0xff]
      %v601 = vld [vmem:[%s583 + $0x10] sm:$0xff]
      %v602 = vld [vmem:[%s583 + $0x18] sm:$0xff]
      %v603 = vld [vmem:[%s583 + $0x20] sm:$0xff]
      %v604 = vld [vmem:[%s583 + $0x28] sm:$0xff]
      %v605 = vld [vmem:[%s583 + $0x30] sm:$0xff]
      %v606 = vld [vmem:[%s583 + $0x38] sm:$0xff]
      %v607 = vld [vmem:[%s583 + $0x40] sm:$0xff]
      %v608 = vld [vmem:[%s583 + $0x48] sm:$0xff]
      %v609 = vld [vmem:[%s583 + $0x50] sm:$0xff]
      %v610 = vld [vmem:[%s583 + $0x58] sm:$0xff]
      %v611 = vld [vmem:[%s583 + $0x60] sm:$0xff]
      %v612 = vld [vmem:[%s583 + $0x68] sm:$0xff]
      %v613 = vld [vmem:[%s583 + $0x70] sm:$0xff]
      %v614 = vld [vmem:[%s583 + $0x78] sm:$0xff]
      %v615 = vld [vmem:[%s583 + $0x80] sm:$0xff]
      %v616 = vld [vmem:[%s583 + $0x88] sm:$0xff]
      %v617 = vld [vmem:[%s583 + $0x90] sm:$0xff]
      %v618 = vld [vmem:[%s583 + $0x98] sm:$0xff]
      %v619 = vld [vmem:[%s583 + $0xa0] sm:$0xff]
      %v620 = vld [vmem:[%s583 + $0xa8] sm:$0xff]
      %v621 = vld [vmem:[%s583 + $0xb0] sm:$0xff]
      %v622 = vld [vmem:[%s583 + $0xb8] sm:$0xff]
      %v623 = vld [vmem:[%s583 + $0xc0] sm:$0xff]
      %v624 = vld [vmem:[%s583 + $0xc8] sm:$0xff]
      %v625 = vld [vmem:[%s583 + $0xd0] sm:$0xff]
      %v626 = vld [vmem:[%s583 + $0xd8] sm:$0xff]
      %v627 = vld [vmem:[%s583 + $0xe0] sm:$0xff]
      %v628 = vld [vmem:[%s583 + $0xe8] sm:$0xff]
      %v629 = vld [vmem:[%s583 + $0xf0] sm:$0xff]
      %v630 = vld [vmem:[%s583 + $0xf8] sm:$0xff]
      %v631 = vld [vmem:[%s583 + $0x100] sm:$0xff]
      %v632 = vld [vmem:[%s583 + $0x108] sm:$0xff]
      %v633 = vld [vmem:[%s583 + $0x110] sm:$0xff]
      %v634 = vld [vmem:[%s583 + $0x118] sm:$0xff]
      %v635 = vld [vmem:[%s583 + $0x120] sm:$0xff]
      %v636 = vld [vmem:[%s583 + $0x128] sm:$0xff]
      %v637 = vld [vmem:[%s583 + $0x130] sm:$0xff]
      %v638 = vld [vmem:[%s583 + $0x138] sm:$0xff]
      %v639 = vld [vmem:[%s583 + $0x140] sm:$0xff]
      %v640 = vld [vmem:[%s583 + $0x148] sm:$0xff]
      %v641 = vld [vmem:[%s583 + $0x150] sm:$0xff]
      %v642 = vld [vmem:[%s583 + $0x158] sm:$0xff]
      %v643 = vld [vmem:[%s583 + $0x160] sm:$0xff]
      %v644 = vld [vmem:[%s583 + $0x168] sm:$0xff]
      %v645 = vld [vmem:[%s583 + $0x170] sm:$0xff]
      %v646 = vld [vmem:[%s583 + $0x178] sm:$0xff]
      %v647 = vld [vmem:[%s583 + $0x180] sm:$0xff]
      %v648 = vld [vmem:[%s583 + $0x188] sm:$0xff]
      %v649 = vld [vmem:[%s583 + $0x190] sm:$0xff]
      %v650 = vld [vmem:[%s583 + $0x198] sm:$0xff]
      %v651 = vld [vmem:[%s583 + $0x1a0] sm:$0xff]
      %v652 = vld [vmem:[%s583 + $0x1a8] sm:$0xff]
      %v653 = vld [vmem:[%s583 + $0x1b0] sm:$0xff]
      %v654 = vld [vmem:[%s583 + $0x1b8] sm:$0xff]
      %v655 = vld [vmem:[%s583 + $0x1c0] sm:$0xff]
      %v656 = vld [vmem:[%s583 + $0x1c8] sm:$0xff]
      %v657 = vld [vmem:[%s583 + $0x1d0] sm:$0xff]
      %v658 = vld [vmem:[%s583 + $0x1d8] sm:$0xff]
      %v659 = vld [vmem:[%s583 + $0x1e0] sm:$0xff]
      %v660 = vld [vmem:[%s583 + $0x1e8] sm:$0xff]
      %v661 = vld [vmem:[%s583 + $0x1f0] sm:$0xff]
      %v662 = vld [vmem:[%s583 + $0x1f8] sm:$0xff]
      %v663 = vld [vmem:[%s583 + $0x200] sm:$0xff]
      %v664 = vld [vmem:[%s583 + $0x208] sm:$0xff]
      %v665 = vld [vmem:[%s583 + $0x210] sm:$0xff]
      %v666 = vld [vmem:[%s583 + $0x218] sm:$0xff]
      %v667 = vld [vmem:[%s583 + $0x220] sm:$0xff]
      %v668 = vld [vmem:[%s583 + $0x228] sm:$0xff]
      %v669 = vld [vmem:[%s583 + $0x230] sm:$0xff]
      %v670 = vld [vmem:[%s583 + $0x238] sm:$0xff]
      %v671 = vld [vmem:[%s583 + $0x240] sm:$0xff]
      %v672 = vld [vmem:[%s583 + $0x248] sm:$0xff]
      %v673 = vld [vmem:[%s583 + $0x250] sm:$0xff]
      %v674 = vld [vmem:[%s583 + $0x258] sm:$0xff]
      %v675 = vld [vmem:[%s583 + $0x260] sm:$0xff]
      %v676 = vld [vmem:[%s583 + $0x268] sm:$0xff]
      %v677 = vld [vmem:[%s583 + $0x270] sm:$0xff]
      %v678 = vld [vmem:[%s583 + $0x278] sm:$0xff]
      %v679 = vld [vmem:[%s583 + $0x280] sm:$0xff]
      %v680 = vld [vmem:[%s583 + $0x288] sm:$0xff]
      %v681 = vld [vmem:[%s583 + $0x290] sm:$0xff]
      %v682 = vld [vmem:[%s583 + $0x298] sm:$0xff]
      %v683 = vld [vmem:[%s583 + $0x2a0] sm:$0xff]
      %v684 = vld [vmem:[%s583 + $0x2a8] sm:$0xff]
      %v685 = vld [vmem:[%s583 + $0x2b0] sm:$0xff]
      %v686 = vld [vmem:[%s583 + $0x2b8] sm:$0xff]
      %v687 = vld [vmem:[%s583 + $0x2c0] sm:$0xff]
      %v688 = vld [vmem:[%s583 + $0x2c8] sm:$0xff]
      %v689 = vld [vmem:[%s583 + $0x2d0] sm:$0xff]
      %v690 = vld [vmem:[%s583 + $0x2d8] sm:$0xff]
      %v691 = vld [vmem:[%s583 + $0x2e0] sm:$0xff]
      %v692 = vld [vmem:[%s583 + $0x2e8] sm:$0xff]
      %v693 = vld [vmem:[%s583 + $0x2f0] sm:$0xff]
      %v694 = vld [vmem:[%s583 + $0x2f8] sm:$0xff]
      %v695 = vld [vmem:[%s583 + $0x300] sm:$0xff]
      %v696 = vld [vmem:[%s583 + $0x308] sm:$0xff]
      %v697 = vld [vmem:[%s583 + $0x310] sm:$0xff]
      %v698 = vld [vmem:[%s583 + $0x318] sm:$0xff]
      %v699 = vld [vmem:[%s583 + $0x320] sm:$0xff]
      %v700 = vld [vmem:[%s583 + $0x328] sm:$0xff]
      %v701 = vld [vmem:[%s583 + $0x330] sm:$0xff]
      %v702 = vld [vmem:[%s583 + $0x338] sm:$0xff]
      %v703 = vld [vmem:[%s583 + $0x340] sm:$0xff]
      %v704 = vld [vmem:[%s583 + $0x348] sm:$0xff]
      %v705 = vld [vmem:[%s583 + $0x350] sm:$0xff]
      %v706 = vld [vmem:[%s583 + $0x358] sm:$0xff]
      %v707 = vld [vmem:[%s583 + $0x360] sm:$0xff]
      %v708 = vld [vmem:[%s583 + $0x368] sm:$0xff]
      %v709 = vld [vmem:[%s583 + $0x370] sm:$0xff]
      %v710 = vld [vmem:[%s583 + $0x378] sm:$0xff]
      %v711 = vpack.c.bf16 %v606, %v599
      %v712 = vpack.c.bf16 %v607, %v600
      %v713 = vpack.c.bf16 %v608, %v601
      %v714 = vpack.c.bf16 %v609, %v602
      %v715 = vpack.c.bf16 %v610, %v603
      %v716 = vpack.c.bf16 %v611, %v604
      %v717 = vpack.c.bf16 %v612, %v605
      %v718 = vpack.c.bf16 %v620, %v613
      %v719 = vpack.c.bf16 %v621, %v614
      %v720 = vpack.c.bf16 %v622, %v615
      %v721 = vpack.c.bf16 %v623, %v616
      %v722 = vpack.c.bf16 %v624, %v617
      %v723 = vpack.c.bf16 %v625, %v618
      %v724 = vpack.c.bf16 %v626, %v619
      %v725 = vpack.c.bf16 %v634, %v627
      %v726 = vpack.c.bf16 %v635, %v628
      %v727 = vpack.c.bf16 %v636, %v629
      %v728 = vpack.c.bf16 %v637, %v630
      %v729 = vpack.c.bf16 %v638, %v631
      %v730 = vpack.c.bf16 %v639, %v632
      %v731 = vpack.c.bf16 %v640, %v633
      %v732 = vpack.c.bf16 %v648, %v641
      %v733 = vpack.c.bf16 %v649, %v642
      %v734 = vpack.c.bf16 %v650, %v643
      %v735 = vpack.c.bf16 %v651, %v644
      %v736 = vpack.c.bf16 %v652, %v645
      %v737 = vpack.c.bf16 %v653, %v646
      %v738 = vpack.c.bf16 %v654, %v647
      %v739 = vpack.c.bf16 %v662, %v655
      %v740 = vpack.c.bf16 %v663, %v656
      %v741 = vpack.c.bf16 %v664, %v657
      %v742 = vpack.c.bf16 %v665, %v658
      %v743 = vpack.c.bf16 %v666, %v659
      %v744 = vpack.c.bf16 %v667, %v660
      %v745 = vpack.c.bf16 %v668, %v661
      %v746 = vpack.c.bf16 %v676, %v669
      %v747 = vpack.c.bf16 %v677, %v670
      %v748 = vpack.c.bf16 %v678, %v671
      %v749 = vpack.c.bf16 %v679, %v672
      %v750 = vpack.c.bf16 %v680, %v673
      %v751 = vpack.c.bf16 %v681, %v674
      %v752 = vpack.c.bf16 %v682, %v675
      %v753 = vpack.c.bf16 %v690, %v683
      %v754 = vpack.c.bf16 %v691, %v684
      %v755 = vpack.c.bf16 %v692, %v685
      %v756 = vpack.c.bf16 %v693, %v686
      %v757 = vpack.c.bf16 %v694, %v687
      %v758 = vpack.c.bf16 %v695, %v688
      %v759 = vpack.c.bf16 %v696, %v689
      %v760 = vpack.c.bf16 %v704, %v697
      %v761 = vpack.c.bf16 %v705, %v698
      %v762 = vpack.c.bf16 %v706, %v699
      %v763 = vpack.c.bf16 %v707, %v700
      %v764 = vpack.c.bf16 %v708, %v701
      %v765 = vpack.c.bf16 %v709, %v702
      %v766 = vpack.c.bf16 %v710, %v703
      %v767 = vld [vmem:[%s1] sm:$0xf]
      %v768 = vld [vmem:[%s1 + $0x4] sm:$0xf]
      %v769 = vld [vmem:[%s1 + $0x8] sm:$0xf]
      %v770 = vld [vmem:[%s1 + $0xc] sm:$0xf]
      %v771 = vld [vmem:[%s1 + $0x10] sm:$0xf]
      %v772 = vld [vmem:[%s1 + $0x14] sm:$0xf]
      %v773 = vld [vmem:[%s1 + $0x18] sm:$0xf]
      %v774 = vld [vmem:[%s1 + $0x1c] sm:$0xf]
      %v775 = vld [vmem:[%s1 + $0x20] sm:$0xf]
      %v776 = vld [vmem:[%s1 + $0x24] sm:$0xf]
      %v777 = vld [vmem:[%s1 + $0x28] sm:$0xf]
      %v778 = vld [vmem:[%s1 + $0x2c] sm:$0xf]
      %v779 = vld [vmem:[%s1 + $0x30] sm:$0xf]
      %v780 = vld [vmem:[%s1 + $0x34] sm:$0xf]
      %v781 = vld [vmem:[%s1 + $0x38] sm:$0xf]
      %v782 = vld [vmem:[%s1 + $0x3c] sm:$0xf]
      %v783 = vld [vmem:[%s1 + $0x40] sm:$0xf]
      %v784 = vld [vmem:[%s1 + $0x44] sm:$0xf]
      %v785 = vld [vmem:[%s1 + $0x48] sm:$0xf]
      %v786 = vld [vmem:[%s1 + $0x4c] sm:$0xf]
      %v787 = vld [vmem:[%s1 + $0x50] sm:$0xf]
      %v788 = vld [vmem:[%s1 + $0x54] sm:$0xf]
      %v789 = vld [vmem:[%s1 + $0x58] sm:$0xf]
      %v790 = vld [vmem:[%s1 + $0x5c] sm:$0xf]
      %v791 = vld [vmem:[%s1 + $0x60] sm:$0xf]
      %v792 = vld [vmem:[%s1 + $0x64] sm:$0xf]
      %v793 = vld [vmem:[%s1 + $0x68] sm:$0xf]
      %v794 = vld [vmem:[%s1 + $0x6c] sm:$0xf]
      %v795 = vld [vmem:[%s1 + $0x70] sm:$0xf]
      %v796 = vld [vmem:[%s1 + $0x74] sm:$0xf]
      %v797 = vld [vmem:[%s1 + $0x78] sm:$0xf]
      %v798 = vld [vmem:[%s1 + $0x7c] sm:$0xf]
      %v799 = vld [vmem:[%s1 + $0x80] sm:$0xf]
      %v800 = vld [vmem:[%s1 + $0x84] sm:$0xf]
      %v801 = vld [vmem:[%s1 + $0x88] sm:$0xf]
      %v802 = vld [vmem:[%s1 + $0x8c] sm:$0xf]
      %v803 = vld [vmem:[%s1 + $0x90] sm:$0xf]
      %v804 = vld [vmem:[%s1 + $0x94] sm:$0xf]
      %v805 = vld [vmem:[%s1 + $0x98] sm:$0xf]
      %v806 = vld [vmem:[%s1 + $0x9c] sm:$0xf]
      %v807 = vld [vmem:[%s1 + $0xa0] sm:$0xf]
      %v808 = vld [vmem:[%s1 + $0xa4] sm:$0xf]
      %v809 = vld [vmem:[%s1 + $0xa8] sm:$0xf]
      %v810 = vld [vmem:[%s1 + $0xac] sm:$0xf]
      %v811 = vld [vmem:[%s1 + $0xb0] sm:$0xf]
      %v812 = vld [vmem:[%s1 + $0xb4] sm:$0xf]
      %v813 = vld [vmem:[%s1 + $0xb8] sm:$0xf]
      %v814 = vld [vmem:[%s1 + $0xbc] sm:$0xf]
      %v815 = vld [vmem:[%s1 + $0xc0] sm:$0xf]
      %v816 = vld [vmem:[%s1 + $0xc4] sm:$0xf]
      %v817 = vld [vmem:[%s1 + $0xc8] sm:$0xf]
      %v818 = vld [vmem:[%s1 + $0xcc] sm:$0xf]
      %v819 = vld [vmem:[%s1 + $0xd0] sm:$0xf]
      %v820 = vld [vmem:[%s1 + $0xd4] sm:$0xf]
      %v821 = vld [vmem:[%s1 + $0xd8] sm:$0xf]
      %v822 = vld [vmem:[%s1 + $0xdc] sm:$0xf]
      %v823 = vld [vmem:[%s1 + $0xe0] sm:$0xf]
      %v824 = vld [vmem:[%s1 + $0xe4] sm:$0xf]
      %v825 = vld [vmem:[%s1 + $0xe8] sm:$0xf]
      %v826 = vld [vmem:[%s1 + $0xec] sm:$0xf]
      %v827 = vld [vmem:[%s1 + $0xf0] sm:$0xf]
      %v828 = vld [vmem:[%s1 + $0xf4] sm:$0xf]
      %v829 = vld [vmem:[%s1 + $0xf8] sm:$0xf]
      %v830 = vld [vmem:[%s1 + $0xfc] sm:$0xf]
      %v831 = vld [vmem:[%s1 + $0x100] sm:$0xf]
      %v832 = vld [vmem:[%s1 + $0x104] sm:$0xf]
      %v833 = vld [vmem:[%s1 + $0x108] sm:$0xf]
      %v834 = vld [vmem:[%s1 + $0x10c] sm:$0xf]
      %v835 = vld [vmem:[%s1 + $0x110] sm:$0xf]
      %v836 = vld [vmem:[%s1 + $0x114] sm:$0xf]
      %v837 = vld [vmem:[%s1 + $0x118] sm:$0xf]
      %v838 = vld [vmem:[%s1 + $0x11c] sm:$0xf]
      %v839 = vld [vmem:[%s1 + $0x120] sm:$0xf]
      %v840 = vld [vmem:[%s1 + $0x124] sm:$0xf]
      %v841 = vld [vmem:[%s1 + $0x128] sm:$0xf]
      %v842 = vld [vmem:[%s1 + $0x12c] sm:$0xf]
      %v843 = vld [vmem:[%s1 + $0x130] sm:$0xf]
      %v844 = vld [vmem:[%s1 + $0x134] sm:$0xf]
      %v845 = vld [vmem:[%s1 + $0x138] sm:$0xf]
      %v846 = vld [vmem:[%s1 + $0x13c] sm:$0xf]
      %v847 = vld [vmem:[%s1 + $0x140] sm:$0xf]
      %v848 = vld [vmem:[%s1 + $0x144] sm:$0xf]
      %v849 = vld [vmem:[%s1 + $0x148] sm:$0xf]
      %v850 = vld [vmem:[%s1 + $0x14c] sm:$0xf]
      %v851 = vld [vmem:[%s1 + $0x150] sm:$0xf]
      %v852 = vld [vmem:[%s1 + $0x154] sm:$0xf]
      %v853 = vld [vmem:[%s1 + $0x158] sm:$0xf]
      %v854 = vld [vmem:[%s1 + $0x15c] sm:$0xf]
      %v855 = vld [vmem:[%s1 + $0x160] sm:$0xf]
      %v856 = vld [vmem:[%s1 + $0x164] sm:$0xf]
      %v857 = vld [vmem:[%s1 + $0x168] sm:$0xf]
      %v858 = vld [vmem:[%s1 + $0x16c] sm:$0xf]
      %v859 = vld [vmem:[%s1 + $0x170] sm:$0xf]
      %v860 = vld [vmem:[%s1 + $0x174] sm:$0xf]
      %v861 = vld [vmem:[%s1 + $0x178] sm:$0xf]
      %v862 = vld [vmem:[%s1 + $0x17c] sm:$0xf]
      %v863 = vld [vmem:[%s1 + $0x180] sm:$0xf]
      %v864 = vld [vmem:[%s1 + $0x184] sm:$0xf]
      %v865 = vld [vmem:[%s2] sm:$0x1]
      %v867 = vlaneseq
      %v868 = vshrl.u32 %v867, 7
      %v869 = vsub.s32 0, %v868
      %v870 = vrot.slane %v865, %v869
      %v970 = vunpack.c.l.b16 %v767
      %v971 = vunpack.c.l.b16 %v768
      %v972 = vunpack.c.l.b16 %v769
      %v973 = vunpack.c.l.b16 %v770
      %v974 = vunpack.c.l.b16 %v771
      %v975 = vunpack.c.l.b16 %v772
      %v976 = vunpack.c.l.b16 %v773
      %v977 = vunpack.c.l.b16 %v774
      %v978 = vunpack.c.l.b16 %v775
      %v979 = vunpack.c.l.b16 %v776
      %v980 = vunpack.c.l.b16 %v777
      %v981 = vunpack.c.l.b16 %v778
      %v982 = vunpack.c.l.b16 %v779
      %v983 = vunpack.c.l.b16 %v780
      %v984 = vunpack.c.l.b16 %v781
      %v985 = vunpack.c.l.b16 %v782
      %v986 = vunpack.c.l.b16 %v783
      %v987 = vunpack.c.l.b16 %v784
      %v988 = vunpack.c.l.b16 %v785
      %v989 = vunpack.c.l.b16 %v786
      %v990 = vunpack.c.l.b16 %v787
      %v991 = vunpack.c.l.b16 %v788
      %v992 = vunpack.c.l.b16 %v789
      %v993 = vunpack.c.l.b16 %v790
      %v994 = vunpack.c.l.b16 %v791
      %v995 = vunpack.c.l.b16 %v792
      %v996 = vunpack.c.l.b16 %v793
      %v997 = vunpack.c.l.b16 %v794
      %v998 = vunpack.c.l.b16 %v795
      %v999 = vunpack.c.l.b16 %v796
      %v1000 = vunpack.c.l.b16 %v797
      %v1001 = vunpack.c.l.b16 %v798
      %v1002 = vunpack.c.l.b16 %v799
      %v1003 = vunpack.c.l.b16 %v800
      %v1004 = vunpack.c.l.b16 %v801
      %v1005 = vunpack.c.l.b16 %v802
      %v1006 = vunpack.c.l.b16 %v803
      %v1007 = vunpack.c.l.b16 %v804
      %v1008 = vunpack.c.l.b16 %v805
      %v1009 = vunpack.c.l.b16 %v806
      %v1010 = vunpack.c.l.b16 %v807
      %v1011 = vunpack.c.l.b16 %v808
      %v1012 = vunpack.c.l.b16 %v809
      %v1013 = vunpack.c.l.b16 %v810
      %v1014 = vunpack.c.l.b16 %v811
      %v1015 = vunpack.c.l.b16 %v812
      %v1016 = vunpack.c.l.b16 %v813
      %v1017 = vunpack.c.l.b16 %v814
      %v1018 = vunpack.c.l.b16 %v815
      %v1019 = vunpack.c.l.b16 %v816
      %v1020 = vunpack.c.l.b16 %v817
      %v1021 = vunpack.c.l.b16 %v818
      %v1022 = vunpack.c.l.b16 %v819
      %v1023 = vunpack.c.l.b16 %v820
      %v1024 = vunpack.c.l.b16 %v821
      %v1025 = vunpack.c.l.b16 %v822
      %v1026 = vunpack.c.l.b16 %v823
      %v1027 = vunpack.c.l.b16 %v824
      %v1028 = vunpack.c.l.b16 %v825
      %v1029 = vunpack.c.l.b16 %v826
      %v1030 = vunpack.c.l.b16 %v827
      %v1031 = vunpack.c.l.b16 %v828
      %v1032 = vunpack.c.l.b16 %v829
      %v1033 = vunpack.c.l.b16 %v830
      %v1034 = vunpack.c.l.b16 %v831
      %v1035 = vunpack.c.l.b16 %v832
      %v1036 = vunpack.c.l.b16 %v833
      %v1037 = vunpack.c.l.b16 %v834
      %v1038 = vunpack.c.l.b16 %v835
      %v1039 = vunpack.c.l.b16 %v836
      %v1040 = vunpack.c.l.b16 %v837
      %v1041 = vunpack.c.l.b16 %v838
      %v1042 = vunpack.c.l.b16 %v839
      %v1043 = vunpack.c.l.b16 %v840
      %v1044 = vunpack.c.l.b16 %v841
      %v1045 = vunpack.c.l.b16 %v842
      %v1046 = vunpack.c.l.b16 %v843
      %v1047 = vunpack.c.l.b16 %v844
      %v1048 = vunpack.c.l.b16 %v845
      %v1049 = vunpack.c.l.b16 %v846
      %v1050 = vunpack.c.l.b16 %v847
      %v1051 = vunpack.c.l.b16 %v848
      %v1052 = vunpack.c.l.b16 %v849
      %v1053 = vunpack.c.l.b16 %v850
      %v1054 = vunpack.c.l.b16 %v851
      %v1055 = vunpack.c.l.b16 %v852
      %v1056 = vunpack.c.l.b16 %v853
      %v1057 = vunpack.c.l.b16 %v854
      %v1058 = vunpack.c.l.b16 %v855
      %v1059 = vunpack.c.l.b16 %v856
      %v1060 = vunpack.c.l.b16 %v857
      %v1061 = vunpack.c.l.b16 %v858
      %v1062 = vunpack.c.l.b16 %v859
      %v1063 = vunpack.c.l.b16 %v860
      %v1064 = vunpack.c.l.b16 %v861
      %v1065 = vunpack.c.l.b16 %v862
      %v1066 = vunpack.c.l.b16 %v863
      %v1067 = vunpack.c.l.b16 %v864
      %v1068 = vpack.c.b16 %v971, %v970
      %v1069 = vpack.c.b16 %v973, %v972
      %v1070 = vpack.c.b16 %v975, %v974
      %v1071 = vpack.c.b16 %v977, %v976
      %v1072 = vpack.c.b16 %v979, %v978
      %v1073 = vpack.c.b16 %v981, %v980
      %v1074 = vpack.c.b16 %v983, %v982
      %v1075 = vpack.c.b16 %v985, %v984
      %v1076 = vpack.c.b16 %v987, %v986
      %v1077 = vpack.c.b16 %v989, %v988
      %v1078 = vpack.c.b16 %v991, %v990
      %v1079 = vpack.c.b16 %v993, %v992
      %v1080 = vpack.c.b16 %v995, %v994
      %v1081 = vpack.c.b16 %v997, %v996
      %v1082 = vpack.c.b16 %v999, %v998
      %v1083 = vpack.c.b16 %v1001, %v1000
      %v1084 = vpack.c.b16 %v1003, %v1002
      %v1085 = vpack.c.b16 %v1005, %v1004
      %v1086 = vpack.c.b16 %v1007, %v1006
      %v1087 = vpack.c.b16 %v1009, %v1008
      %v1088 = vpack.c.b16 %v1011, %v1010
      %v1089 = vpack.c.b16 %v1013, %v1012
      %v1090 = vpack.c.b16 %v1015, %v1014
      %v1091 = vpack.c.b16 %v1017, %v1016
      %v1092 = vpack.c.b16 %v1019, %v1018
      %v1093 = vpack.c.b16 %v1021, %v1020
      %v1094 = vpack.c.b16 %v1023, %v1022
      %v1095 = vpack.c.b16 %v1025, %v1024
      %v1096 = vpack.c.b16 %v1027, %v1026
      %v1097 = vpack.c.b16 %v1029, %v1028
      %v1098 = vpack.c.b16 %v1031, %v1030
      %v1099 = vpack.c.b16 %v1033, %v1032
      %v1100 = vpack.c.b16 %v1035, %v1034
      %v1101 = vpack.c.b16 %v1037, %v1036
      %v1102 = vpack.c.b16 %v1039, %v1038
      %v1103 = vpack.c.b16 %v1041, %v1040
      %v1104 = vpack.c.b16 %v1043, %v1042
      %v1105 = vpack.c.b16 %v1045, %v1044
      %v1106 = vpack.c.b16 %v1047, %v1046
      %v1107 = vpack.c.b16 %v1049, %v1048
      %v1108 = vpack.c.b16 %v1051, %v1050
      %v1109 = vpack.c.b16 %v1053, %v1052
      %v1110 = vpack.c.b16 %v1055, %v1054
      %v1111 = vpack.c.b16 %v1057, %v1056
      %v1112 = vpack.c.b16 %v1059, %v1058
      %v1113 = vpack.c.b16 %v1061, %v1060
      %v1114 = vpack.c.b16 %v1063, %v1062
      %v1115 = vpack.c.b16 %v1065, %v1064
      %v1116 = vpack.c.b16 %v1067, %v1066
      %vm1166 = vcmask 130048
      %v1168 = vsel %vm1166, %v717, 0
      %v1171 = vsel %vm1166, %v724, 0
      %v1174 = vsel %vm1166, %v731, 0
      %v1177 = vsel %vm1166, %v738, 0
      %v1180 = vsel %vm1166, %v745, 0
      %v1183 = vsel %vm1166, %v752, 0
      %v1186 = vsel %vm1166, %v759, 0
      %v1189 = vsel %vm1166, %v766, 0
      %1191 = vmatprep.subr.bf16.mxu0 0
      %1192 = vmatpush1.bf16.msra.mxu0 %v1075
      %1193 = vmatprep.subr.bf16.mxu0 0
      %1194 = vmatpush1.bf16.msra.mxu0 %v1074
      %1195 = vmatprep.subr.bf16.mxu0 0
      %1196 = vmatpush1.bf16.msra.mxu0 %v1073
      %1197 = vmatprep.subr.bf16.mxu0 0
      %1198 = vmatpush1.bf16.msra.mxu0 %v1072
      %1199 = vmatprep.subr.bf16.mxu0 0
      %1200 = vmatpush1.bf16.msra.mxu0 %v1071
      %1201 = vmatprep.subr.bf16.mxu0 0
      %1202 = vmatpush1.bf16.msra.mxu0 %v1070
      %1203 = vmatprep.subr.bf16.mxu0 0
      %1204 = vmatpush1.bf16.msra.mxu0 %v1069
      %1205 = vmatprep.subr.bf16.mxu0 0
      %1206 = vmatpush1.bf16.msra.mxu0 %v1068
      %1207 = vmatprep.subr.bf16.mxu0 0
      %1208 = vmatpush2.bf16.msra.mxu0 %v1083
      %1209 = vmatprep.subr.bf16.mxu0 0
      %1210 = vmatpush2.bf16.msra.mxu0 %v1082
      %1211 = vmatprep.subr.bf16.mxu0 0
      %1212 = vmatpush2.bf16.msra.mxu0 %v1081
      %1213 = vmatprep.subr.bf16.mxu0 0
      %1214 = vmatpush2.bf16.msra.mxu0 %v1080
      %1215 = vmatprep.subr.bf16.mxu0 0
      %1216 = vmatpush2.bf16.msra.mxu0 %v1079
      %1217 = vmatprep.subr.bf16.mxu0 0
      %1218 = vmatpush2.bf16.msra.mxu0 %v1078
      %1219 = vmatprep.subr.bf16.mxu0 0
      %1220 = vmatpush2.bf16.msra.mxu0 %v1077
      %1221 = vmatprep.subr.bf16.mxu0 0
      %1222 = vmatpush2.bf16.msra.mxu0 %v1076
      %1223 = vmatprep.mubr.bf16.mxu0 %v712
      %1224 = vmatmul.mubr.bf16.gmra.mxu0 %v711
      %v1225 = vpop.f32.mrf.mxu0
      %v1226 = vadd.f32 %v870, %v1225
      %v1227 = vpop.f32.mrf.mxu0
      %v1228 = vpop.f32.mrf.mxu0
      %v1229 = vadd.f32 %v870, %v1228
      %v1230 = vpop.f32.mrf.mxu0
      %1231 = vmatprep.mubr.bf16.mxu0 %v719
      %1232 = vmatmul.mubr.bf16.gmra.mxu0 %v718
      %v1233 = vpop.f32.mrf.mxu0
      %v1234 = vadd.f32 %v870, %v1233
      %v1235 = vpop.f32.mrf.mxu0
      %v1236 = vpop.f32.mrf.mxu0
      %v1237 = vadd.f32 %v870, %v1236
      %v1238 = vpop.f32.mrf.mxu0
      %1239 = vmatprep.mubr.bf16.mxu0 %v726
      %1240 = vmatmul.mubr.bf16.gmra.mxu0 %v725
      %v1241 = vpop.f32.mrf.mxu0
      %v1242 = vadd.f32 %v870, %v1241
      %v1243 = vpop.f32.mrf.mxu0
      %v1244 = vpop.f32.mrf.mxu0
      %v1245 = vadd.f32 %v870, %v1244
      %v1246 = vpop.f32.mrf.mxu0
      %1247 = vmatprep.mubr.bf16.mxu0 %v733
      %1248 = vmatmul.mubr.bf16.gmra.mxu0 %v732
      %v1249 = vpop.f32.mrf.mxu0
      %v1250 = vadd.f32 %v870, %v1249
      %v1251 = vpop.f32.mrf.mxu0
      %v1252 = vpop.f32.mrf.mxu0
      %v1253 = vadd.f32 %v870, %v1252
      %v1254 = vpop.f32.mrf.mxu0
      %1255 = vmatprep.mubr.bf16.mxu0 %v740
      %1256 = vmatmul.mubr.bf16.gmra.mxu0 %v739
      %v1257 = vpop.f32.mrf.mxu0
      %v1258 = vadd.f32 %v870, %v1257
      %v1259 = vpop.f32.mrf.mxu0
      %v1260 = vpop.f32.mrf.mxu0
      %v1261 = vadd.f32 %v870, %v1260
      %v1262 = vpop.f32.mrf.mxu0
      %1263 = vmatprep.mubr.bf16.mxu0 %v747
      %1264 = vmatmul.mubr.bf16.gmra.mxu0 %v746
      %v1265 = vpop.f32.mrf.mxu0
      %v1266 = vadd.f32 %v870, %v1265
      %v1267 = vpop.f32.mrf.mxu0
      %v1268 = vpop.f32.mrf.mxu0
      %v1269 = vadd.f32 %v870, %v1268
      %v1270 = vpop.f32.mrf.mxu0
      %1271 = vmatprep.mubr.bf16.mxu0 %v754
      %1272 = vmatmul.mubr.bf16.gmra.mxu0 %v753
      %v1273 = vpop.f32.mrf.mxu0
      %v1274 = vadd.f32 %v870, %v1273
      %v1275 = vpop.f32.mrf.mxu0
      %v1276 = vpop.f32.mrf.mxu0
      %v1277 = vadd.f32 %v870, %v1276
      %v1278 = vpop.f32.mrf.mxu0
      %1279 = vmatprep.mubr.bf16.mxu0 %v761
      %1280 = vmatmul.mubr.bf16.gmra.mxu0 %v760
      %v1281 = vpop.f32.mrf.mxu0
      %v1282 = vadd.f32 %v870, %v1281
      %v1283 = vpop.f32.mrf.mxu0
      %v1284 = vpop.f32.mrf.mxu0
      %v1285 = vadd.f32 %v870, %v1284
      %v1286 = vpop.f32.mrf.mxu0
      %1287 = vdwg.mxu0
      %1288 = vmatprep.subr.bf16.mxu0 0
      %1289 = vmatpush1.bf16.msra.mxu0 %v1091
      %1290 = vmatprep.subr.bf16.mxu0 0
      %1291 = vmatpush1.bf16.msra.mxu0 %v1090
      %1292 = vmatprep.subr.bf16.mxu0 0
      %1293 = vmatpush1.bf16.msra.mxu0 %v1089
      %1294 = vmatprep.subr.bf16.mxu0 0
      %1295 = vmatpush1.bf16.msra.mxu0 %v1088
      %1296 = vmatprep.subr.bf16.mxu0 0
      %1297 = vmatpush1.bf16.msra.mxu0 %v1087
      %1298 = vmatprep.subr.bf16.mxu0 0
      %1299 = vmatpush1.bf16.msra.mxu0 %v1086
      %1300 = vmatprep.subr.bf16.mxu0 0
      %1301 = vmatpush1.bf16.msra.mxu0 %v1085
      %1302 = vmatprep.subr.bf16.mxu0 0
      %1303 = vmatpush1.bf16.msra.mxu0 %v1084
      %1304 = vmatprep.subr.bf16.mxu0 0
      %1305 = vmatpush2.bf16.msra.mxu0 %v1099
      %1306 = vmatprep.subr.bf16.mxu0 0
      %1307 = vmatpush2.bf16.msra.mxu0 %v1098
      %1308 = vmatprep.subr.bf16.mxu0 0
      %1309 = vmatpush2.bf16.msra.mxu0 %v1097
      %1310 = vmatprep.subr.bf16.mxu0 0
      %1311 = vmatpush2.bf16.msra.mxu0 %v1096
      %1312 = vmatprep.subr.bf16.mxu0 0
      %1313 = vmatpush2.bf16.msra.mxu0 %v1095
      %1314 = vmatprep.subr.bf16.mxu0 0
      %1315 = vmatpush2.bf16.msra.mxu0 %v1094
      %1316 = vmatprep.subr.bf16.mxu0 0
      %1317 = vmatpush2.bf16.msra.mxu0 %v1093
      %1318 = vmatprep.subr.bf16.mxu0 0
      %1319 = vmatpush2.bf16.msra.mxu0 %v1092
      %1320 = vmatprep.mubr.bf16.mxu0 %v714
      %1321 = vmatmul.mubr.bf16.gmra.mxu0 %v713
      %v1322 = vpop.f32.mrf.mxu0
      %v1323 = vadd.f32 %v1226, %v1322
      %v1324 = vpop.f32.mrf.mxu0
      %v1325 = vpop.f32.mrf.mxu0
      %v1326 = vadd.f32 %v1229, %v1325
      %v1327 = vpop.f32.mrf.mxu0
      %1328 = vmatprep.mubr.bf16.mxu0 %v721
      %1329 = vmatmul.mubr.bf16.gmra.mxu0 %v720
      %v1330 = vpop.f32.mrf.mxu0
      %v1331 = vadd.f32 %v1234, %v1330
      %v1332 = vpop.f32.mrf.mxu0
      %v1333 = vpop.f32.mrf.mxu0
      %v1334 = vadd.f32 %v1237, %v1333
      %v1335 = vpop.f32.mrf.mxu0
      %1336 = vmatprep.mubr.bf16.mxu0 %v728
      %1337 = vmatmul.mubr.bf16.gmra.mxu0 %v727
      %v1338 = vpop.f32.mrf.mxu0
      %v1339 = vadd.f32 %v1242, %v1338
      %v1340 = vpop.f32.mrf.mxu0
      %v1341 = vpop.f32.mrf.mxu0
      %v1342 = vadd.f32 %v1245, %v1341
      %v1343 = vpop.f32.mrf.mxu0
      %1344 = vmatprep.mubr.bf16.mxu0 %v735
      %1345 = vmatmul.mubr.bf16.gmra.mxu0 %v734
      %v1346 = vpop.f32.mrf.mxu0
      %v1347 = vadd.f32 %v1250, %v1346
      %v1348 = vpop.f32.mrf.mxu0
      %v1349 = vpop.f32.mrf.mxu0
      %v1350 = vadd.f32 %v1253, %v1349
      %v1351 = vpop.f32.mrf.mxu0
      %1352 = vmatprep.mubr.bf16.mxu0 %v742
      %1353 = vmatmul.mubr.bf16.gmra.mxu0 %v741
      %v1354 = vpop.f32.mrf.mxu0
      %v1355 = vadd.f32 %v1258, %v1354
      %v1356 = vpop.f32.mrf.mxu0
      %v1357 = vpop.f32.mrf.mxu0
      %v1358 = vadd.f32 %v1261, %v1357
      %v1359 = vpop.f32.mrf.mxu0
      %1360 = vmatprep.mubr.bf16.mxu0 %v749
      %1361 = vmatmul.mubr.bf16.gmra.mxu0 %v748
      %v1362 = vpop.f32.mrf.mxu0
      %v1363 = vadd.f32 %v1266, %v1362
      %v1364 = vpop.f32.mrf.mxu0
      %v1365 = vpop.f32.mrf.mxu0
      %v1366 = vadd.f32 %v1269, %v1365
      %v1367 = vpop.f32.mrf.mxu0
      %1368 = vmatprep.mubr.bf16.mxu0 %v756
      %1369 = vmatmul.mubr.bf16.gmra.mxu0 %v755
      %v1370 = vpop.f32.mrf.mxu0
      %v1371 = vadd.f32 %v1274, %v1370
      %v1372 = vpop.f32.mrf.mxu0
      %v1373 = vpop.f32.mrf.mxu0
      %v1374 = vadd.f32 %v1277, %v1373
      %v1375 = vpop.f32.mrf.mxu0
      %1376 = vmatprep.mubr.bf16.mxu0 %v763
      %1377 = vmatmul.mubr.bf16.gmra.mxu0 %v762
      %v1378 = vpop.f32.mrf.mxu0
      %v1379 = vadd.f32 %v1282, %v1378
      %v1380 = vpop.f32.mrf.mxu0
      %v1381 = vpop.f32.mrf.mxu0
      %v1382 = vadd.f32 %v1285, %v1381
      %v1383 = vpop.f32.mrf.mxu0
      %1384 = vdwg.mxu0
      %1385 = vmatprep.subr.bf16.mxu0 0
      %1386 = vmatpush1.bf16.msra.mxu0 %v1107
      %1387 = vmatprep.subr.bf16.mxu0 0
      %1388 = vmatpush1.bf16.msra.mxu0 %v1106
      %1389 = vmatprep.subr.bf16.mxu0 0
      %1390 = vmatpush1.bf16.msra.mxu0 %v1105
      %1391 = vmatprep.subr.bf16.mxu0 0
      %1392 = vmatpush1.bf16.msra.mxu0 %v1104
      %1393 = vmatprep.subr.bf16.mxu0 0
      %1394 = vmatpush1.bf16.msra.mxu0 %v1103
      %1395 = vmatprep.subr.bf16.mxu0 0
      %1396 = vmatpush1.bf16.msra.mxu0 %v1102
      %1397 = vmatprep.subr.bf16.mxu0 0
      %1398 = vmatpush1.bf16.msra.mxu0 %v1101
      %1399 = vmatprep.subr.bf16.mxu0 0
      %1400 = vmatpush1.bf16.msra.mxu0 %v1100
      %1401 = vmatprep.subr.bf16.mxu0 0
      %1402 = vmatpush2.bf16.msra.mxu0 %v1115
      %1403 = vmatprep.subr.bf16.mxu0 0
      %1404 = vmatpush2.bf16.msra.mxu0 %v1114
      %1405 = vmatprep.subr.bf16.mxu0 0
      %1406 = vmatpush2.bf16.msra.mxu0 %v1113
      %1407 = vmatprep.subr.bf16.mxu0 0
      %1408 = vmatpush2.bf16.msra.mxu0 %v1112
      %1409 = vmatprep.subr.bf16.mxu0 0
      %1410 = vmatpush2.bf16.msra.mxu0 %v1111
      %1411 = vmatprep.subr.bf16.mxu0 0
      %1412 = vmatpush2.bf16.msra.mxu0 %v1110
      %1413 = vmatprep.subr.bf16.mxu0 0
      %1414 = vmatpush2.bf16.msra.mxu0 %v1109
      %1415 = vmatprep.subr.bf16.mxu0 0
      %1416 = vmatpush2.bf16.msra.mxu0 %v1108
      %1417 = vmatprep.mubr.bf16.mxu0 %v716
      %1418 = vmatmul.mubr.bf16.gmra.mxu0 %v715
      %v1419 = vpop.f32.mrf.mxu0
      %v1420 = vadd.f32 %v1323, %v1419
      %v1421 = vpop.f32.mrf.mxu0
      %v1422 = vpop.f32.mrf.mxu0
      %v1423 = vadd.f32 %v1326, %v1422
      %v1424 = vpop.f32.mrf.mxu0
      %1425 = vmatprep.mubr.bf16.mxu0 %v723
      %1426 = vmatmul.mubr.bf16.gmra.mxu0 %v722
      %v1427 = vpop.f32.mrf.mxu0
      %v1428 = vadd.f32 %v1331, %v1427
      %v1429 = vpop.f32.mrf.mxu0
      %v1430 = vpop.f32.mrf.mxu0
      %v1431 = vadd.f32 %v1334, %v1430
      %v1432 = vpop.f32.mrf.mxu0
      %1433 = vmatprep.mubr.bf16.mxu0 %v730
      %1434 = vmatmul.mubr.bf16.gmra.mxu0 %v729
      %v1435 = vpop.f32.mrf.mxu0
      %v1436 = vadd.f32 %v1339, %v1435
      %v1437 = vpop.f32.mrf.mxu0
      %v1438 = vpop.f32.mrf.mxu0
      %v1439 = vadd.f32 %v1342, %v1438
      %v1440 = vpop.f32.mrf.mxu0
      %1441 = vmatprep.mubr.bf16.mxu0 %v737
      %1442 = vmatmul.mubr.bf16.gmra.mxu0 %v736
      %v1443 = vpop.f32.mrf.mxu0
      %v1444 = vadd.f32 %v1347, %v1443
      %v1445 = vpop.f32.mrf.mxu0
      %v1446 = vpop.f32.mrf.mxu0
      %v1447 = vadd.f32 %v1350, %v1446
      %v1448 = vpop.f32.mrf.mxu0
      %1449 = vmatprep.mubr.bf16.mxu0 %v744
      %1450 = vmatmul.mubr.bf16.gmra.mxu0 %v743
      %v1451 = vpop.f32.mrf.mxu0
      %v1452 = vadd.f32 %v1355, %v1451
      %v1453 = vpop.f32.mrf.mxu0
      %v1454 = vpop.f32.mrf.mxu0
      %v1455 = vadd.f32 %v1358, %v1454
      %v1456 = vpop.f32.mrf.mxu0
      %1457 = vmatprep.mubr.bf16.mxu0 %v751
      %1458 = vmatmul.mubr.bf16.gmra.mxu0 %v750
      %v1459 = vpop.f32.mrf.mxu0
      %v1460 = vadd.f32 %v1363, %v1459
      %v1461 = vpop.f32.mrf.mxu0
      %v1462 = vpop.f32.mrf.mxu0
      %v1463 = vadd.f32 %v1366, %v1462
      %v1464 = vpop.f32.mrf.mxu0
      %1465 = vmatprep.mubr.bf16.mxu0 %v758
      %1466 = vmatmul.mubr.bf16.gmra.mxu0 %v757
      %v1467 = vpop.f32.mrf.mxu0
      %v1468 = vadd.f32 %v1371, %v1467
      %v1469 = vpop.f32.mrf.mxu0
      %v1470 = vpop.f32.mrf.mxu0
      %v1471 = vadd.f32 %v1374, %v1470
      %v1472 = vpop.f32.mrf.mxu0
      %1473 = vmatprep.mubr.bf16.mxu0 %v765
      %1474 = vmatmul.mubr.bf16.gmra.mxu0 %v764
      %v1475 = vpop.f32.mrf.mxu0
      %v1476 = vadd.f32 %v1379, %v1475
      %v1477 = vpop.f32.mrf.mxu0
      %v1478 = vpop.f32.mrf.mxu0
      %v1479 = vadd.f32 %v1382, %v1478
      %v1480 = vpop.f32.mrf.mxu0
      %1481 = vdwg.mxu0
      %1482 = vmatprep.subr.bf16.mxu0 0
      %1483 = vmatpush1.bf16.msra.mxu0 0
      %1484 = vmatprep.subr.bf16.mxu0 0
      %1485 = vmatpush1.bf16.msra.mxu0 0
      %1486 = vmatprep.subr.bf16.mxu0 0
      %1487 = vmatpush1.bf16.msra.mxu0 0
      %1488 = vmatprep.subr.bf16.mxu0 0
      %1489 = vmatpush1.bf16.msra.mxu0 0
      %1490 = vmatprep.subr.bf16.mxu0 0
      %1491 = vmatpush1.bf16.msra.mxu0 0
      %1492 = vmatprep.subr.bf16.mxu0 0
      %1493 = vmatpush1.bf16.msra.mxu0 0
      %1494 = vmatprep.subr.bf16.mxu0 0
      %1495 = vmatpush1.bf16.msra.mxu0 0
      %1496 = vmatprep.subr.bf16.mxu0 0
      %1497 = vmatpush1.bf16.msra.mxu0 %v1116
      %1498 = vmatprep.subr.bf16.mxu0 0
      %1499 = vmatpush2.bf16.msra.mxu0 0
      %1500 = vmatprep.subr.bf16.mxu0 0
      %1501 = vmatpush2.bf16.msra.mxu0 0
      %1502 = vmatprep.subr.bf16.mxu0 0
      %1503 = vmatpush2.bf16.msra.mxu0 0
      %1504 = vmatprep.subr.bf16.mxu0 0
      %1505 = vmatpush2.bf16.msra.mxu0 0
      %1506 = vmatprep.subr.bf16.mxu0 0
      %1507 = vmatpush2.bf16.msra.mxu0 0
      %1508 = vmatprep.subr.bf16.mxu0 0
      %1509 = vmatpush2.bf16.msra.mxu0 0
      %1510 = vmatprep.subr.bf16.mxu0 0
      %1511 = vmatpush2.bf16.msra.mxu0 0
      %1512 = vmatprep.subr.bf16.mxu0 0
      %1513 = vmatpush2.bf16.msra.mxu0 0
      %1514 = vmatprep.mubr.bf16.mxu0 0
      %1515 = vmatmul.mubr.bf16.gmra.mxu0 %v1168
      %v1516 = vpop.f32.mrf.mxu0
      %v1517 = vadd.f32 %v1420, %v1516
      %v1518 = vpop.f32.mrf.mxu0
      %v1519 = vpop.f32.mrf.mxu0
      %v1520 = vadd.f32 %v1423, %v1519
      %v1521 = vpop.f32.mrf.mxu0
      %1522 = vmatprep.mubr.bf16.mxu0 0
      %1523 = vmatmul.mubr.bf16.gmra.mxu0 %v1171
      %v1524 = vpop.f32.mrf.mxu0
      %v1525 = vadd.f32 %v1428, %v1524
      %v1526 = vpop.f32.mrf.mxu0
      %v1527 = vpop.f32.mrf.mxu0
      %v1528 = vadd.f32 %v1431, %v1527
      %v1529 = vpop.f32.mrf.mxu0
      %1530 = vmatprep.mubr.bf16.mxu0 0
      %1531 = vmatmul.mubr.bf16.gmra.mxu0 %v1174
      %v1532 = vpop.f32.mrf.mxu0
      %v1533 = vadd.f32 %v1436, %v1532
      %v1534 = vpop.f32.mrf.mxu0
      %v1535 = vpop.f32.mrf.mxu0
      %v1536 = vadd.f32 %v1439, %v1535
      %v1537 = vpop.f32.mrf.mxu0
      %1538 = vmatprep.mubr.bf16.mxu0 0
      %1539 = vmatmul.mubr.bf16.gmra.mxu0 %v1177
      %v1540 = vpop.f32.mrf.mxu0
      %v1541 = vadd.f32 %v1444, %v1540
      %v1542 = vpop.f32.mrf.mxu0
      %v1543 = vpop.f32.mrf.mxu0
      %v1544 = vadd.f32 %v1447, %v1543
      %v1545 = vpop.f32.mrf.mxu0
      %1546 = vmatprep.mubr.bf16.mxu0 0
      %1547 = vmatmul.mubr.bf16.gmra.mxu0 %v1180
      %v1548 = vpop.f32.mrf.mxu0
      %v1549 = vadd.f32 %v1452, %v1548
      %v1550 = vpop.f32.mrf.mxu0
      %v1551 = vpop.f32.mrf.mxu0
      %v1552 = vadd.f32 %v1455, %v1551
      %v1553 = vpop.f32.mrf.mxu0
      %1554 = vmatprep.mubr.bf16.mxu0 0
      %1555 = vmatmul.mubr.bf16.gmra.mxu0 %v1183
      %v1556 = vpop.f32.mrf.mxu0
      %v1557 = vadd.f32 %v1460, %v1556
      %v1558 = vpop.f32.mrf.mxu0
      %v1559 = vpop.f32.mrf.mxu0
      %v1560 = vadd.f32 %v1463, %v1559
      %v1561 = vpop.f32.mrf.mxu0
      %1562 = vmatprep.mubr.bf16.mxu0 0
      %1563 = vmatmul.mubr.bf16.gmra.mxu0 %v1186
      %v1564 = vpop.f32.mrf.mxu0
      %v1565 = vadd.f32 %v1468, %v1564
      %v1566 = vpop.f32.mrf.mxu0
      %v1567 = vpop.f32.mrf.mxu0
      %v1568 = vadd.f32 %v1471, %v1567
      %v1569 = vpop.f32.mrf.mxu0
      %1570 = vmatprep.mubr.bf16.mxu0 0
      %1571 = vmatmul.mubr.bf16.gmra.mxu0 %v1189
      %v1572 = vpop.f32.mrf.mxu0
      %v1573 = vadd.f32 %v1476, %v1572
      %v1574 = vpop.f32.mrf.mxu0
      %v1575 = vpop.f32.mrf.mxu0
      %v1576 = vadd.f32 %v1479, %v1575
      %v1577 = vpop.f32.mrf.mxu0
      %1578 = vdwg.mxu0
      %v1579 = vtanh.pop %v1517
      %v1580 = vtanh.pop %v1520
      %v1581 = vtanh.pop %v1525
      %v1582 = vtanh.pop %v1528
      %v1583 = vtanh.pop %v1533
      %v1584 = vtanh.pop %v1536
      %v1585 = vtanh.pop %v1541
      %v1586 = vtanh.pop %v1544
      %v1587 = vtanh.pop %v1549
      %v1588 = vtanh.pop %v1552
      %v1589 = vtanh.pop %v1557
      %v1590 = vtanh.pop %v1560
      %v1591 = vtanh.pop %v1565
      %v1592 = vtanh.pop %v1568
      %v1593 = vtanh.pop %v1573
      %v1594 = vtanh.pop %v1576
      %v1595 = vpack.c.bf16 %v1580, %v1579
      %v1596 = vpack.c.bf16 %v1582, %v1581
      %v1597 = vpack.c.bf16 %v1584, %v1583
      %v1598 = vpack.c.bf16 %v1586, %v1585
      %v1599 = vpack.c.bf16 %v1588, %v1587
      %v1600 = vpack.c.bf16 %v1590, %v1589
      %v1601 = vpack.c.bf16 %v1592, %v1591
      %v1602 = vpack.c.bf16 %v1594, %v1593
      %v1603 = vld [vmem:[%s3] sm:$0xf]
      %v1604 = vld [vmem:[%s3 + $0x4] sm:$0xf]
      %v1605 = vld [vmem:[%s3 + $0x8] sm:$0xf]
      %v1606 = vld [vmem:[%s3 + $0xc] sm:$0xf]
      %v1607 = vld [vmem:[%s3 + $0x10] sm:$0xf]
      %v1608 = vld [vmem:[%s3 + $0x14] sm:$0xf]
      %v1609 = vld [vmem:[%s3 + $0x18] sm:$0xf]
      %v1610 = vld [vmem:[%s3 + $0x1c] sm:$0xf]
      %v1611 = vld [vmem:[%s3 + $0x20] sm:$0xf]
      %v1612 = vld [vmem:[%s3 + $0x24] sm:$0xf]
      %v1613 = vld [vmem:[%s3 + $0x28] sm:$0xf]
      %v1614 = vld [vmem:[%s3 + $0x2c] sm:$0xf]
      %v1615 = vld [vmem:[%s3 + $0x30] sm:$0xf]
      %v1616 = vld [vmem:[%s3 + $0x34] sm:$0xf]
      %v1617 = vld [vmem:[%s3 + $0x38] sm:$0xf]
      %v1618 = vld [vmem:[%s3 + $0x3c] sm:$0xf]
      %v1619 = vld [vmem:[%s4] sm:$0x1]
      %v1621 = vlaneseq
      %v1622 = vshrl.u32 %v1621, 7
      %v1623 = vsub.s32 0, %v1622
      %v1624 = vrot.slane %v1619, %v1623
      %v1642 = vunpack.c.l.b16 %v1603
      %v1643 = vunpack.c.l.b16 %v1604
      %v1644 = vunpack.c.l.b16 %v1605
      %v1645 = vunpack.c.l.b16 %v1606
      %v1646 = vunpack.c.l.b16 %v1607
      %v1647 = vunpack.c.l.b16 %v1608
      %v1648 = vunpack.c.l.b16 %v1609
      %v1649 = vunpack.c.l.b16 %v1610
      %v1650 = vunpack.c.l.b16 %v1611
      %v1651 = vunpack.c.l.b16 %v1612
      %v1652 = vunpack.c.l.b16 %v1613
      %v1653 = vunpack.c.l.b16 %v1614
      %v1654 = vunpack.c.l.b16 %v1615
      %v1655 = vunpack.c.l.b16 %v1616
      %v1656 = vunpack.c.l.b16 %v1617
      %v1657 = vunpack.c.l.b16 %v1618
      %v1658 = vpack.c.b16 %v1643, %v1642
      %v1659 = vpack.c.b16 %v1645, %v1644
      %v1660 = vpack.c.b16 %v1647, %v1646
      %v1661 = vpack.c.b16 %v1649, %v1648
      %v1662 = vpack.c.b16 %v1651, %v1650
      %v1663 = vpack.c.b16 %v1653, %v1652
      %v1664 = vpack.c.b16 %v1655, %v1654
      %v1665 = vpack.c.b16 %v1657, %v1656
      %1674 = vmatprep.subr.bf16.mxu0 0
      %1675 = vmatpush1.bf16.msra.mxu0 %v1665
      %1676 = vmatprep.subr.bf16.mxu0 0
      %1677 = vmatpush1.bf16.msra.mxu0 %v1664
      %1678 = vmatprep.subr.bf16.mxu0 0
      %1679 = vmatpush1.bf16.msra.mxu0 %v1663
      %1680 = vmatprep.subr.bf16.mxu0 0
      %1681 = vmatpush1.bf16.msra.mxu0 %v1662
      %1682 = vmatprep.subr.bf16.mxu0 0
      %1683 = vmatpush1.bf16.msra.mxu0 %v1661
      %1684 = vmatprep.subr.bf16.mxu0 0
      %1685 = vmatpush1.bf16.msra.mxu0 %v1660
      %1686 = vmatprep.subr.bf16.mxu0 0
      %1687 = vmatpush1.bf16.msra.mxu0 %v1659
      %1688 = vmatprep.subr.bf16.mxu0 0
      %1689 = vmatpush1.bf16.msra.mxu0 %v1658
      %1690 = vmatprep.subr.bf16.mxu0 0
      %1691 = vmatpush2.bf16.msra.mxu0 0
      %1692 = vmatprep.subr.bf16.mxu0 0
      %1693 = vmatpush2.bf16.msra.mxu0 0
      %1694 = vmatprep.subr.bf16.mxu0 0
      %1695 = vmatpush2.bf16.msra.mxu0 0
      %1696 = vmatprep.subr.bf16.mxu0 0
      %1697 = vmatpush2.bf16.msra.mxu0 0
      %1698 = vmatprep.subr.bf16.mxu0 0
      %1699 = vmatpush2.bf16.msra.mxu0 0
      %1700 = vmatprep.subr.bf16.mxu0 0
      %1701 = vmatpush2.bf16.msra.mxu0 0
      %1702 = vmatprep.subr.bf16.mxu0 0
      %1703 = vmatpush2.bf16.msra.mxu0 0
      %1704 = vmatprep.subr.bf16.mxu0 0
      %1705 = vmatpush2.bf16.msra.mxu0 0
      %1706 = vmatprep.mubr.bf16.mxu0 0
      %1707 = vmatmul.mubr.bf16.gmra.mxu0 %v1595
      %v1708 = vpop.f32.mrf.mxu0
      %v1709 = vadd.f32 %v1624, %v1708
      %v1710 = vpop.f32.mrf.mxu0
      %v1711 = vpop.f32.mrf.mxu0
      %v1712 = vadd.f32 %v1624, %v1711
      %v1713 = vpop.f32.mrf.mxu0
      %1714 = vmatprep.mubr.bf16.mxu0 0
      %1715 = vmatmul.mubr.bf16.gmra.mxu0 %v1596
      %v1716 = vpop.f32.mrf.mxu0
      %v1717 = vadd.f32 %v1624, %v1716
      %v1718 = vpop.f32.mrf.mxu0
      %v1719 = vpop.f32.mrf.mxu0
      %v1720 = vadd.f32 %v1624, %v1719
      %v1721 = vpop.f32.mrf.mxu0
      %1722 = vmatprep.mubr.bf16.mxu0 0
      %1723 = vmatmul.mubr.bf16.gmra.mxu0 %v1597
      %v1724 = vpop.f32.mrf.mxu0
      %v1725 = vadd.f32 %v1624, %v1724
      %v1726 = vpop.f32.mrf.mxu0
      %v1727 = vpop.f32.mrf.mxu0
      %v1728 = vadd.f32 %v1624, %v1727
      %v1729 = vpop.f32.mrf.mxu0
      %1730 = vmatprep.mubr.bf16.mxu0 0
      %1731 = vmatmul.mubr.bf16.gmra.mxu0 %v1598
      %v1732 = vpop.f32.mrf.mxu0
      %v1733 = vadd.f32 %v1624, %v1732
      %v1734 = vpop.f32.mrf.mxu0
      %v1735 = vpop.f32.mrf.mxu0
      %v1736 = vadd.f32 %v1624, %v1735
      %v1737 = vpop.f32.mrf.mxu0
      %1738 = vmatprep.mubr.bf16.mxu0 0
      %1739 = vmatmul.mubr.bf16.gmra.mxu0 %v1599
      %v1740 = vpop.f32.mrf.mxu0
      %v1741 = vadd.f32 %v1624, %v1740
      %v1742 = vpop.f32.mrf.mxu0
      %v1743 = vpop.f32.mrf.mxu0
      %v1744 = vadd.f32 %v1624, %v1743
      %v1745 = vpop.f32.mrf.mxu0
      %1746 = vmatprep.mubr.bf16.mxu0 0
      %1747 = vmatmul.mubr.bf16.gmra.mxu0 %v1600
      %v1748 = vpop.f32.mrf.mxu0
      %v1749 = vadd.f32 %v1624, %v1748
      %v1750 = vpop.f32.mrf.mxu0
      %v1751 = vpop.f32.mrf.mxu0
      %v1752 = vadd.f32 %v1624, %v1751
      %v1753 = vpop.f32.mrf.mxu0
      %1754 = vmatprep.mubr.bf16.mxu0 0
      %1755 = vmatmul.mubr.bf16.gmra.mxu0 %v1601
      %v1756 = vpop.f32.mrf.mxu0
      %v1757 = vadd.f32 %v1624, %v1756
      %v1758 = vpop.f32.mrf.mxu0
      %v1759 = vpop.f32.mrf.mxu0
      %v1760 = vadd.f32 %v1624, %v1759
      %v1761 = vpop.f32.mrf.mxu0
      %1762 = vmatprep.mubr.bf16.mxu0 0
      %1763 = vmatmul.mubr.bf16.gmra.mxu0 %v1602
      %v1764 = vpop.f32.mrf.mxu0
      %v1765 = vadd.f32 %v1624, %v1764
      %v1766 = vpop.f32.mrf.mxu0
      %v1767 = vpop.f32.mrf.mxu0
      %v1768 = vadd.f32 %v1624, %v1767
      %v1769 = vpop.f32.mrf.mxu0
      %1770 = vdwg.mxu0
      %v1771 = vtanh.pop %v1709
      %v1772 = vtanh.pop %v1712
      %v1773 = vtanh.pop %v1717
      %v1774 = vtanh.pop %v1720
      %v1775 = vtanh.pop %v1725
      %v1776 = vtanh.pop %v1728
      %v1777 = vtanh.pop %v1733
      %v1778 = vtanh.pop %v1736
      %v1779 = vtanh.pop %v1741
      %v1780 = vtanh.pop %v1744
      %v1781 = vtanh.pop %v1749
      %v1782 = vtanh.pop %v1752
      %v1783 = vtanh.pop %v1757
      %v1784 = vtanh.pop %v1760
      %v1785 = vtanh.pop %v1765
      %v1786 = vtanh.pop %v1768
      %v1787 = vpack.c.bf16 %v1772, %v1771
      %v1788 = vpack.c.bf16 %v1774, %v1773
      %v1789 = vpack.c.bf16 %v1776, %v1775
      %v1790 = vpack.c.bf16 %v1778, %v1777
      %v1791 = vpack.c.bf16 %v1780, %v1779
      %v1792 = vpack.c.bf16 %v1782, %v1781
      %v1793 = vpack.c.bf16 %v1784, %v1783
      %v1794 = vpack.c.bf16 %v1786, %v1785
      %v1795 = vld [vmem:[%s5] sm:$0xf]
      %v1796 = vld [vmem:[%s5 + $0x4] sm:$0xf]
      %v1797 = vld [vmem:[%s5 + $0x8] sm:$0xf]
      %v1798 = vld [vmem:[%s5 + $0xc] sm:$0xf]
      %v1799 = vld [vmem:[%s5 + $0x10] sm:$0xf]
      %v1800 = vld [vmem:[%s5 + $0x14] sm:$0xf]
      %v1801 = vld [vmem:[%s5 + $0x18] sm:$0xf]
      %v1802 = vld [vmem:[%s5 + $0x1c] sm:$0xf]
      %v1803 = vld [vmem:[%s6] sm:$0x1]
      %v1805 = vlaneseq
      %v1806 = vshrl.u32 %v1805, 7
      %v1807 = vsub.s32 0, %v1806
      %v1808 = vrot.slane %v1803, %v1807
      %v1818 = vunpack.c.l.b16 %v1795
      %v1819 = vunpack.c.l.b16 %v1796
      %v1820 = vunpack.c.l.b16 %v1797
      %v1821 = vunpack.c.l.b16 %v1798
      %v1822 = vunpack.c.l.b16 %v1799
      %v1823 = vunpack.c.l.b16 %v1800
      %v1824 = vunpack.c.l.b16 %v1801
      %v1825 = vunpack.c.l.b16 %v1802
      %v1826 = vpack.c.b16 %v1819, %v1818
      %v1827 = vpack.c.b16 %v1821, %v1820
      %v1828 = vpack.c.b16 %v1823, %v1822
      %v1829 = vpack.c.b16 %v1825, %v1824
      %vm1834 = vcmask 523264
      %v1836 = vsel %vm1834, %v1787, 0
      %v1839 = vsel %vm1834, %v1788, 0
      %v1842 = vsel %vm1834, %v1789, 0
      %v1845 = vsel %vm1834, %v1790, 0
      %v1848 = vsel %vm1834, %v1791, 0
      %v1851 = vsel %vm1834, %v1792, 0
      %v1854 = vsel %vm1834, %v1793, 0
      %v1857 = vsel %vm1834, %v1794, 0
      %1859 = vmatprep.subr.bf16.mxu0 0
      %1860 = vmatpush1.bf16.msra.mxu0 0
      %1861 = vmatprep.subr.bf16.mxu0 0
      %1862 = vmatpush1.bf16.msra.mxu0 0
      %1863 = vmatprep.subr.bf16.mxu0 0
      %1864 = vmatpush1.bf16.msra.mxu0 0
      %1865 = vmatprep.subr.bf16.mxu0 0
      %1866 = vmatpush1.bf16.msra.mxu0 0
      %1867 = vmatprep.subr.bf16.mxu0 0
      %1868 = vmatpush1.bf16.msra.mxu0 %v1829
      %1869 = vmatprep.subr.bf16.mxu0 0
      %1870 = vmatpush1.bf16.msra.mxu0 %v1828
      %1871 = vmatprep.subr.bf16.mxu0 0
      %1872 = vmatpush1.bf16.msra.mxu0 %v1827
      %1873 = vmatprep.subr.bf16.mxu0 0
      %1874 = vmatpush1.bf16.msra.mxu0 %v1826
      %1875 = vmatprep.subr.bf16.mxu0 0
      %1876 = vmatpush2.bf16.msra.mxu0 0
      %1877 = vmatprep.subr.bf16.mxu0 0
      %1878 = vmatpush2.bf16.msra.mxu0 0
      %1879 = vmatprep.subr.bf16.mxu0 0
      %1880 = vmatpush2.bf16.msra.mxu0 0
      %1881 = vmatprep.subr.bf16.mxu0 0
      %1882 = vmatpush2.bf16.msra.mxu0 0
      %1883 = vmatprep.subr.bf16.mxu0 0
      %1884 = vmatpush2.bf16.msra.mxu0 0
      %1885 = vmatprep.subr.bf16.mxu0 0
      %1886 = vmatpush2.bf16.msra.mxu0 0
      %1887 = vmatprep.subr.bf16.mxu0 0
      %1888 = vmatpush2.bf16.msra.mxu0 0
      %1889 = vmatprep.subr.bf16.mxu0 0
      %1890 = vmatpush2.bf16.msra.mxu0 0
      %1891 = vmatprep.mubr.bf16.mxu0 0
      %1892 = vmatmul.mubr.bf16.gmra.mxu0 %v1836
      %v1893 = vpop.f32.mrf.mxu0
      %v1894 = vadd.f32 %v1808, %v1893
      %v1895 = vpop.f32.mrf.mxu0
      %v1896 = vpop.f32.mrf.mxu0
      %v1897 = vadd.f32 %v1808, %v1896
      %v1898 = vpop.f32.mrf.mxu0
      %1899 = vmatprep.mubr.bf16.mxu0 0
      %1900 = vmatmul.mubr.bf16.gmra.mxu0 %v1839
      %v1901 = vpop.f32.mrf.mxu0
      %v1902 = vadd.f32 %v1808, %v1901
      %v1903 = vpop.f32.mrf.mxu0
      %v1904 = vpop.f32.mrf.mxu0
      %v1905 = vadd.f32 %v1808, %v1904
      %v1906 = vpop.f32.mrf.mxu0
      %1907 = vmatprep.mubr.bf16.mxu0 0
      %1908 = vmatmul.mubr.bf16.gmra.mxu0 %v1842
      %v1909 = vpop.f32.mrf.mxu0
      %v1910 = vadd.f32 %v1808, %v1909
      %v1911 = vpop.f32.mrf.mxu0
      %v1912 = vpop.f32.mrf.mxu0
      %v1913 = vadd.f32 %v1808, %v1912
      %v1914 = vpop.f32.mrf.mxu0
      %1915 = vmatprep.mubr.bf16.mxu0 0
      %1916 = vmatmul.mubr.bf16.gmra.mxu0 %v1845
      %v1917 = vpop.f32.mrf.mxu0
      %v1918 = vadd.f32 %v1808, %v1917
      %v1919 = vpop.f32.mrf.mxu0
      %v1920 = vpop.f32.mrf.mxu0
      %v1921 = vadd.f32 %v1808, %v1920
      %v1922 = vpop.f32.mrf.mxu0
      %1923 = vmatprep.mubr.bf16.mxu0 0
      %1924 = vmatmul.mubr.bf16.gmra.mxu0 %v1848
      %v1925 = vpop.f32.mrf.mxu0
      %v1926 = vadd.f32 %v1808, %v1925
      %v1927 = vpop.f32.mrf.mxu0
      %v1928 = vpop.f32.mrf.mxu0
      %v1929 = vadd.f32 %v1808, %v1928
      %v1930 = vpop.f32.mrf.mxu0
      %1931 = vmatprep.mubr.bf16.mxu0 0
      %1932 = vmatmul.mubr.bf16.gmra.mxu0 %v1851
      %v1933 = vpop.f32.mrf.mxu0
      %v1934 = vadd.f32 %v1808, %v1933
      %v1935 = vpop.f32.mrf.mxu0
      %v1936 = vpop.f32.mrf.mxu0
      %v1937 = vadd.f32 %v1808, %v1936
      %v1938 = vpop.f32.mrf.mxu0
      %1939 = vmatprep.mubr.bf16.mxu0 0
      %1940 = vmatmul.mubr.bf16.gmra.mxu0 %v1854
      %v1941 = vpop.f32.mrf.mxu0
      %v1942 = vadd.f32 %v1808, %v1941
      %v1943 = vpop.f32.mrf.mxu0
      %v1944 = vpop.f32.mrf.mxu0
      %v1945 = vadd.f32 %v1808, %v1944
      %v1946 = vpop.f32.mrf.mxu0
      %1947 = vmatprep.mubr.bf16.mxu0 0
      %1948 = vmatmul.mubr.bf16.gmra.mxu0 %v1857
      %v1949 = vpop.f32.mrf.mxu0
      %v1950 = vadd.f32 %v1808, %v1949
      %v1951 = vpop.f32.mrf.mxu0
      %v1952 = vpop.f32.mrf.mxu0
      %v1953 = vadd.f32 %v1808, %v1952
      %v1954 = vpop.f32.mrf.mxu0
      %1955 = vdwg.mxu0
      %v1956 = vtanh.pop %v1894
      %v1957 = vtanh.pop %v1897
      %v1958 = vtanh.pop %v1902
      %v1959 = vtanh.pop %v1905
      %v1960 = vtanh.pop %v1910
      %v1961 = vtanh.pop %v1913
      %v1962 = vtanh.pop %v1918
      %v1963 = vtanh.pop %v1921
      %v1964 = vtanh.pop %v1926
      %v1965 = vtanh.pop %v1929
      %v1966 = vtanh.pop %v1934
      %v1967 = vtanh.pop %v1937
      %v1968 = vtanh.pop %v1942
      %v1969 = vtanh.pop %v1945
      %v1970 = vtanh.pop %v1950
      %v1971 = vtanh.pop %v1953
      %v1972 = vpack.c.bf16 %v1957, %v1956
      %v1973 = vpack.c.bf16 %v1959, %v1958
      %v1974 = vpack.c.bf16 %v1961, %v1960
      %v1975 = vpack.c.bf16 %v1963, %v1962
      %v1976 = vpack.c.bf16 %v1965, %v1964
      %v1977 = vpack.c.bf16 %v1967, %v1966
      %v1978 = vpack.c.bf16 %v1969, %v1968
      %v1979 = vpack.c.bf16 %v1971, %v1970
      %v1980 = vld [vmem:[%s7] sm:$0xf]
      %v1981 = vld [vmem:[%s7 + $0x4] sm:$0x3]
      %v1982 = vld [vmem:[%s8] sm:$0x1]
      %v1984 = vlaneseq
      %v1985 = vshrl.u32 %v1984, 7
      %v1986 = vsub.s32 0, %v1985
      %v1987 = vrot.slane %v1982, %v1986
      %v1991 = vunpack.c.l.b16 %v1980
      %v1992 = vunpack.c.l.b16 %v1981
      %v1993 = vpack.c.b16 %v1992, %v1991
      %vm1994 = vcmask 97280
      %v1996 = vsel %vm1994, %v1972, 0
      %v1999 = vsel %vm1994, %v1973, 0
      %v2002 = vsel %vm1994, %v1974, 0
      %v2005 = vsel %vm1994, %v1975, 0
      %v2008 = vsel %vm1994, %v1976, 0
      %v2011 = vsel %vm1994, %v1977, 0
      %v2014 = vsel %vm1994, %v1978, 0
      %v2017 = vsel %vm1994, %v1979, 0
      %vm2019 = vcmask 1045504
      %v2021 = vsel %vm2019, %v1993, 0
      %2023 = vmatprep.subr.bf16.mxu0 0
      %2024 = vmatpush1.bf16.msra.mxu0 0
      %2025 = vmatprep.subr.bf16.mxu0 0
      %2026 = vmatpush1.bf16.msra.mxu0 0
      %2027 = vmatprep.subr.bf16.mxu0 0
      %2028 = vmatpush1.bf16.msra.mxu0 0
      %2029 = vmatprep.subr.bf16.mxu0 0
      %2030 = vmatpush1.bf16.msra.mxu0 0
      %2031 = vmatprep.subr.bf16.mxu0 0
      %2032 = vmatpush1.bf16.msra.mxu0 0
      %2033 = vmatprep.subr.bf16.mxu0 0
      %2034 = vmatpush1.bf16.msra.mxu0 0
      %2035 = vmatprep.subr.bf16.mxu0 0
      %2036 = vmatpush1.bf16.msra.mxu0 0
      %2037 = vmatprep.subr.bf16.mxu0 0
      %2038 = vmatpush1.bf16.msra.mxu0 %v2021
      %2039 = vmatprep.subr.bf16.mxu0 0
      %2040 = vmatpush2.bf16.msra.mxu0 0
      %2041 = vmatprep.subr.bf16.mxu0 0
      %2042 = vmatpush2.bf16.msra.mxu0 0
      %2043 = vmatprep.subr.bf16.mxu0 0
      %2044 = vmatpush2.bf16.msra.mxu0 0
      %2045 = vmatprep.subr.bf16.mxu0 0
      %2046 = vmatpush2.bf16.msra.mxu0 0
      %2047 = vmatprep.subr.bf16.mxu0 0
      %2048 = vmatpush2.bf16.msra.mxu0 0
      %2049 = vmatprep.subr.bf16.mxu0 0
      %2050 = vmatpush2.bf16.msra.mxu0 0
      %2051 = vmatprep.subr.bf16.mxu0 0
      %2052 = vmatpush2.bf16.msra.mxu0 0
      %2053 = vmatprep.subr.bf16.mxu0 0
      %2054 = vmatpush2.bf16.msra.mxu0 0
      %2055 = vmatprep.mubr.bf16.mxu0 0
      %2056 = vmatmul.mubr.bf16.gmra.mxu0 %v1996
      %v2057 = vpop.f32.mrf.mxu0
      %v2058 = vadd.f32 %v1987, %v2057
      %v2059 = vpop.f32.mrf.mxu0
      %v2060 = vpop.f32.mrf.mxu0
      %v2061 = vadd.f32 %v1987, %v2060
      %v2062 = vpop.f32.mrf.mxu0
      %2063 = vmatprep.mubr.bf16.mxu0 0
      %2064 = vmatmul.mubr.bf16.gmra.mxu0 %v1999
      %v2065 = vpop.f32.mrf.mxu0
      %v2066 = vadd.f32 %v1987, %v2065
      %v2067 = vpop.f32.mrf.mxu0
      %v2068 = vpop.f32.mrf.mxu0
      %v2069 = vadd.f32 %v1987, %v2068
      %v2070 = vpop.f32.mrf.mxu0
      %2071 = vmatprep.mubr.bf16.mxu0 0
      %2072 = vmatmul.mubr.bf16.gmra.mxu0 %v2002
      %v2073 = vpop.f32.mrf.mxu0
      %v2074 = vadd.f32 %v1987, %v2073
      %v2075 = vpop.f32.mrf.mxu0
      %v2076 = vpop.f32.mrf.mxu0
      %v2077 = vadd.f32 %v1987, %v2076
      %v2078 = vpop.f32.mrf.mxu0
      %2079 = vmatprep.mubr.bf16.mxu0 0
      %2080 = vmatmul.mubr.bf16.gmra.mxu0 %v2005
      %v2081 = vpop.f32.mrf.mxu0
      %v2082 = vadd.f32 %v1987, %v2081
      %v2083 = vpop.f32.mrf.mxu0
      %v2084 = vpop.f32.mrf.mxu0
      %v2085 = vadd.f32 %v1987, %v2084
      %v2086 = vpop.f32.mrf.mxu0
      %2087 = vmatprep.mubr.bf16.mxu0 0
      %2088 = vmatmul.mubr.bf16.gmra.mxu0 %v2008
      %v2089 = vpop.f32.mrf.mxu0
      %v2090 = vadd.f32 %v1987, %v2089
      %v2091 = vpop.f32.mrf.mxu0
      %v2092 = vpop.f32.mrf.mxu0
      %v2093 = vadd.f32 %v1987, %v2092
      %v2094 = vpop.f32.mrf.mxu0
      %2095 = vmatprep.mubr.bf16.mxu0 0
      %2096 = vmatmul.mubr.bf16.gmra.mxu0 %v2011
      %v2097 = vpop.f32.mrf.mxu0
      %v2098 = vadd.f32 %v1987, %v2097
      %v2099 = vpop.f32.mrf.mxu0
      %v2100 = vpop.f32.mrf.mxu0
      %v2101 = vadd.f32 %v1987, %v2100
      %v2102 = vpop.f32.mrf.mxu0
      %2103 = vmatprep.mubr.bf16.mxu0 0
      %2104 = vmatmul.mubr.bf16.gmra.mxu0 %v2014
      %v2105 = vpop.f32.mrf.mxu0
      %v2106 = vadd.f32 %v1987, %v2105
      %v2107 = vpop.f32.mrf.mxu0
      %v2108 = vpop.f32.mrf.mxu0
      %v2109 = vadd.f32 %v1987, %v2108
      %v2110 = vpop.f32.mrf.mxu0
      %2111 = vmatprep.mubr.bf16.mxu0 0
      %2112 = vmatmul.mubr.bf16.gmra.mxu0 %v2017
      %v2113 = vpop.f32.mrf.mxu0
      %v2114 = vadd.f32 %v1987, %v2113
      %v2115 = vpop.f32.mrf.mxu0
      %v2116 = vpop.f32.mrf.mxu0
      %v2117 = vadd.f32 %v1987, %v2116
      %v2118 = vpop.f32.mrf.mxu0
      %2119 = vdwg.mxu0
      %vm2120 = vcmask 23552
      %2121 = vst.msk [vmem:[%s589] sm:$0xff] %vm2120, %v2058
      %2122 = vst.msk [vmem:[%s589 + $0x8] sm:$0xff] %vm2120, %v2061
      %2123 = vst.msk [vmem:[%s589 + $0x10] sm:$0xff] %vm2120, %v2066
      %2124 = vst.msk [vmem:[%s589 + $0x18] sm:$0xff] %vm2120, %v2069
      %2125 = vst.msk [vmem:[%s589 + $0x20] sm:$0xff] %vm2120, %v2074
      %2126 = vst.msk [vmem:[%s589 + $0x28] sm:$0xff] %vm2120, %v2077
      %2127 = vst.msk [vmem:[%s589 + $0x30] sm:$0xff] %vm2120, %v2082
      %2128 = vst.msk [vmem:[%s589 + $0x38] sm:$0xff] %vm2120, %v2085
      %2129 = vst.msk [vmem:[%s589 + $0x40] sm:$0xff] %vm2120, %v2090
      %2130 = vst.msk [vmem:[%s589 + $0x48] sm:$0xff] %vm2120, %v2093
      %2131 = vst.msk [vmem:[%s589 + $0x50] sm:$0xff] %vm2120, %v2098
      %2132 = vst.msk [vmem:[%s589 + $0x58] sm:$0xff] %vm2120, %v2101
      %2133 = vst.msk [vmem:[%s589 + $0x60] sm:$0xff] %vm2120, %v2106
      %2134 = vst.msk [vmem:[%s589 + $0x68] sm:$0xff] %vm2120, %v2109
      %2135 = vst.msk [vmem:[%s589 + $0x70] sm:$0xff] %vm2120, %v2114
      %2136 = vst.msk [vmem:[%s589 + $0x78] sm:$0xff] %vm2120, %v2117
      %v2137 = vpack.c.bf16 %v2061, %v2058
      %v2138 = vpack.c.bf16 %v2069, %v2066
      %v2139 = vpack.c.bf16 %v2077, %v2074
      %v2140 = vpack.c.bf16 %v2085, %v2082
      %v2141 = vpack.c.bf16 %v2093, %v2090
      %v2142 = vpack.c.bf16 %v2101, %v2098
      %v2143 = vpack.c.bf16 %v2109, %v2106
      %v2144 = vpack.c.bf16 %v2117, %v2114
      %v2145 = vld [vmem:[%s9] sm:$0x3]
      %v2146 = vld [vmem:[%s10] sm:$0x1]
      %v2148 = vlaneseq
      %v2149 = vshrl.u32 %v2148, 7
      %v2150 = vsub.s32 0, %v2149
      %v2151 = vrot.slane %v2146, %v2150
      %v2154 = vsel %vm2120, %v2137, 0
      %v2157 = vsel %vm2120, %v2138, 0
      %v2160 = vsel %vm2120, %v2139, 0
      %v2163 = vsel %vm2120, %v2140, 0
      %v2166 = vsel %vm2120, %v2141, 0
      %v2169 = vsel %vm2120, %v2142, 0
      %v2172 = vsel %vm2120, %v2143, 0
      %v2175 = vsel %vm2120, %v2144, 0
      %vm2177 = vcmask 1040384
      %vm2178 = vcmask 1041408
      %v2179 = vsel %vm2177, 4294967295, 65535
      %v2180 = vsel %vm2178, %v2179, 0
      %v2182 = vand.u32 %v2145, %v2180
      %2184 = vmatprep.subr.bf16.mxu0 0
      %2185 = vmatpush1.bf16.msra.mxu0 0
      %2186 = vmatprep.subr.bf16.mxu0 0
      %2187 = vmatpush1.bf16.msra.mxu0 0
      %2188 = vmatprep.subr.bf16.mxu0 0
      %2189 = vmatpush1.bf16.msra.mxu0 0
      %2190 = vmatprep.subr.bf16.mxu0 0
      %2191 = vmatpush1.bf16.msra.mxu0 0
      %2192 = vmatprep.subr.bf16.mxu0 0
      %2193 = vmatpush1.bf16.msra.mxu0 0
      %2194 = vmatprep.subr.bf16.mxu0 0
      %2195 = vmatpush1.bf16.msra.mxu0 0
      %2196 = vmatprep.subr.bf16.mxu0 0
      %2197 = vmatpush1.bf16.msra.mxu0 0
      %2198 = vmatprep.subr.bf16.mxu0 0
      %2199 = vmatpush1.bf16.msra.mxu0 %v2182
      %2200 = vmatprep.subr.bf16.mxu0 0
      %2201 = vmatpush2.bf16.msra.mxu0 0
      %2202 = vmatprep.subr.bf16.mxu0 0
      %2203 = vmatpush2.bf16.msra.mxu0 0
      %2204 = vmatprep.subr.bf16.mxu0 0
      %2205 = vmatpush2.bf16.msra.mxu0 0
      %2206 = vmatprep.subr.bf16.mxu0 0
      %2207 = vmatpush2.bf16.msra.mxu0 0
      %2208 = vmatprep.subr.bf16.mxu0 0
      %2209 = vmatpush2.bf16.msra.mxu0 0
      %2210 = vmatprep.subr.bf16.mxu0 0
      %2211 = vmatpush2.bf16.msra.mxu0 0
      %2212 = vmatprep.subr.bf16.mxu0 0
      %2213 = vmatpush2.bf16.msra.mxu0 0
      %2214 = vmatprep.subr.bf16.mxu0 0
      %2215 = vmatpush2.bf16.msra.mxu0 0
      %2216 = vmatprep.mubr.bf16.mxu0 0
      %2217 = vmatmul.mubr.bf16.gmra.mxu0 %v2154
      %v2218 = vpop.f32.mrf.mxu0
      %v2219 = vadd.f32 %v2151, %v2218
      %v2220 = vpop.f32.mrf.mxu0
      %v2221 = vpop.f32.mrf.mxu0
      %v2222 = vadd.f32 %v2151, %v2221
      %v2223 = vpop.f32.mrf.mxu0
      %2224 = vmatprep.mubr.bf16.mxu0 0
      %2225 = vmatmul.mubr.bf16.gmra.mxu0 %v2157
      %v2226 = vpop.f32.mrf.mxu0
      %v2227 = vadd.f32 %v2151, %v2226
      %v2228 = vpop.f32.mrf.mxu0
      %v2229 = vpop.f32.mrf.mxu0
      %v2230 = vadd.f32 %v2151, %v2229
      %v2231 = vpop.f32.mrf.mxu0
      %2232 = vmatprep.mubr.bf16.mxu0 0
      %2233 = vmatmul.mubr.bf16.gmra.mxu0 %v2160
      %v2234 = vpop.f32.mrf.mxu0
      %v2235 = vadd.f32 %v2151, %v2234
      %v2236 = vpop.f32.mrf.mxu0
      %v2237 = vpop.f32.mrf.mxu0
      %v2238 = vadd.f32 %v2151, %v2237
      %v2239 = vpop.f32.mrf.mxu0
      %2240 = vmatprep.mubr.bf16.mxu0 0
      %2241 = vmatmul.mubr.bf16.gmra.mxu0 %v2163
      %v2242 = vpop.f32.mrf.mxu0
      %v2243 = vadd.f32 %v2151, %v2242
      %v2244 = vpop.f32.mrf.mxu0
      %v2245 = vpop.f32.mrf.mxu0
      %v2246 = vadd.f32 %v2151, %v2245
      %v2247 = vpop.f32.mrf.mxu0
      %2248 = vmatprep.mubr.bf16.mxu0 0
      %2249 = vmatmul.mubr.bf16.gmra.mxu0 %v2166
      %v2250 = vpop.f32.mrf.mxu0
      %v2251 = vadd.f32 %v2151, %v2250
      %v2252 = vpop.f32.mrf.mxu0
      %v2253 = vpop.f32.mrf.mxu0
      %v2254 = vadd.f32 %v2151, %v2253
      %v2255 = vpop.f32.mrf.mxu0
      %2256 = vmatprep.mubr.bf16.mxu0 0
      %2257 = vmatmul.mubr.bf16.gmra.mxu0 %v2169
      %v2258 = vpop.f32.mrf.mxu0
      %v2259 = vadd.f32 %v2151, %v2258
      %v2260 = vpop.f32.mrf.mxu0
      %v2261 = vpop.f32.mrf.mxu0
      %v2262 = vadd.f32 %v2151, %v2261
      %v2263 = vpop.f32.mrf.mxu0
      %2264 = vmatprep.mubr.bf16.mxu0 0
      %2265 = vmatmul.mubr.bf16.gmra.mxu0 %v2172
      %v2266 = vpop.f32.mrf.mxu0
      %v2267 = vadd.f32 %v2151, %v2266
      %v2268 = vpop.f32.mrf.mxu0
      %v2269 = vpop.f32.mrf.mxu0
      %v2270 = vadd.f32 %v2151, %v2269
      %v2271 = vpop.f32.mrf.mxu0
      %2272 = vmatprep.mubr.bf16.mxu0 0
      %2273 = vmatmul.mubr.bf16.gmra.mxu0 %v2175
      %v2274 = vpop.f32.mrf.mxu0
      %v2275 = vadd.f32 %v2151, %v2274
      %v2276 = vpop.f32.mrf.mxu0
      %v2277 = vpop.f32.mrf.mxu0
      %v2278 = vadd.f32 %v2151, %v2277
      %v2279 = vpop.f32.mrf.mxu0
      %2280 = vdwg.mxu0
      %v2281 = vtanh.pop %v2219
      %v2282 = vtanh.pop %v2222
      %v2283 = vtanh.pop %v2227
      %v2284 = vtanh.pop %v2230
      %v2285 = vtanh.pop %v2235
      %v2286 = vtanh.pop %v2238
      %v2287 = vtanh.pop %v2243
      %v2288 = vtanh.pop %v2246
      %v2289 = vtanh.pop %v2251
      %v2290 = vtanh.pop %v2254
      %v2291 = vtanh.pop %v2259
      %v2292 = vtanh.pop %v2262
      %v2293 = vtanh.pop %v2267
      %v2294 = vtanh.pop %v2270
      %v2295 = vtanh.pop %v2275
      %v2296 = vtanh.pop %v2278
      %v2297 = vpack.c.bf16 %v2282, %v2281
      %v2298 = vpack.c.bf16 %v2284, %v2283
      %v2299 = vpack.c.bf16 %v2286, %v2285
      %v2300 = vpack.c.bf16 %v2288, %v2287
      %v2301 = vpack.c.bf16 %v2290, %v2289
      %v2302 = vpack.c.bf16 %v2292, %v2291
      %v2303 = vpack.c.bf16 %v2294, %v2293
      %v2304 = vpack.c.bf16 %v2296, %v2295
      %v2305 = vld [vmem:[%s11] sm:$0xf]
      %v2306 = vld [vmem:[%s11 + $0x4] sm:$0x3]
      %v2307 = vld [vmem:[%s12] sm:$0x1]
      %v2309 = vlaneseq
      %v2310 = vshrl.u32 %v2309, 7
      %v2311 = vsub.s32 0, %v2310
      %v2312 = vrot.slane %v2307, %v2311
      %v2316 = vunpack.c.l.b16 %v2305
      %v2317 = vunpack.c.l.b16 %v2306
      %v2318 = vpack.c.b16 %v2317, %v2316
      %v2320 = vsel %vm1994, %v2297, 0
      %v2323 = vsel %vm1994, %v2298, 0
      %v2326 = vsel %vm1994, %v2299, 0
      %v2329 = vsel %vm1994, %v2300, 0
      %v2332 = vsel %vm1994, %v2301, 0
      %v2335 = vsel %vm1994, %v2302, 0
      %v2338 = vsel %vm1994, %v2303, 0
      %v2341 = vsel %vm1994, %v2304, 0
      %v2344 = vsel %vm2019, %v2318, 0
      %2346 = vmatprep.subr.bf16.mxu0 0
      %2347 = vmatpush1.bf16.msra.mxu0 0
      %2348 = vmatprep.subr.bf16.mxu0 0
      %2349 = vmatpush1.bf16.msra.mxu0 0
      %2350 = vmatprep.subr.bf16.mxu0 0
      %2351 = vmatpush1.bf16.msra.mxu0 0
      %2352 = vmatprep.subr.bf16.mxu0 0
      %2353 = vmatpush1.bf16.msra.mxu0 0
      %2354 = vmatprep.subr.bf16.mxu0 0
      %2355 = vmatpush1.bf16.msra.mxu0 0
      %2356 = vmatprep.subr.bf16.mxu0 0
      %2357 = vmatpush1.bf16.msra.mxu0 0
      %2358 = vmatprep.subr.bf16.mxu0 0
      %2359 = vmatpush1.bf16.msra.mxu0 0
      %2360 = vmatprep.subr.bf16.mxu0 0
      %2361 = vmatpush1.bf16.msra.mxu0 %v2344
      %2362 = vmatprep.subr.bf16.mxu0 0
      %2363 = vmatpush2.bf16.msra.mxu0 0
      %2364 = vmatprep.subr.bf16.mxu0 0
      %2365 = vmatpush2.bf16.msra.mxu0 0
      %2366 = vmatprep.subr.bf16.mxu0 0
      %2367 = vmatpush2.bf16.msra.mxu0 0
      %2368 = vmatprep.subr.bf16.mxu0 0
      %2369 = vmatpush2.bf16.msra.mxu0 0
      %2370 = vmatprep.subr.bf16.mxu0 0
      %2371 = vmatpush2.bf16.msra.mxu0 0
      %2372 = vmatprep.subr.bf16.mxu0 0
      %2373 = vmatpush2.bf16.msra.mxu0 0
      %2374 = vmatprep.subr.bf16.mxu0 0
      %2375 = vmatpush2.bf16.msra.mxu0 0
      %2376 = vmatprep.subr.bf16.mxu0 0
      %2377 = vmatpush2.bf16.msra.mxu0 0
      %2378 = vmatprep.mubr.bf16.mxu0 0
      %2379 = vmatmul.mubr.bf16.gmra.mxu0 %v2320
      %v2380 = vpop.f32.mrf.mxu0
      %v2381 = vadd.f32 %v2312, %v2380
      %v2382 = vpop.f32.mrf.mxu0
      %v2383 = vpop.f32.mrf.mxu0
      %v2384 = vadd.f32 %v2312, %v2383
      %v2385 = vpop.f32.mrf.mxu0
      %2386 = vmatprep.mubr.bf16.mxu0 0
      %2387 = vmatmul.mubr.bf16.gmra.mxu0 %v2323
      %v2388 = vpop.f32.mrf.mxu0
      %v2389 = vadd.f32 %v2312, %v2388
      %v2390 = vpop.f32.mrf.mxu0
      %v2391 = vpop.f32.mrf.mxu0
      %v2392 = vadd.f32 %v2312, %v2391
      %v2393 = vpop.f32.mrf.mxu0
      %2394 = vmatprep.mubr.bf16.mxu0 0
      %2395 = vmatmul.mubr.bf16.gmra.mxu0 %v2326
      %v2396 = vpop.f32.mrf.mxu0
      %v2397 = vadd.f32 %v2312, %v2396
      %v2398 = vpop.f32.mrf.mxu0
      %v2399 = vpop.f32.mrf.mxu0
      %v2400 = vadd.f32 %v2312, %v2399
      %v2401 = vpop.f32.mrf.mxu0
      %2402 = vmatprep.mubr.bf16.mxu0 0
      %2403 = vmatmul.mubr.bf16.gmra.mxu0 %v2329
      %v2404 = vpop.f32.mrf.mxu0
      %v2405 = vadd.f32 %v2312, %v2404
      %v2406 = vpop.f32.mrf.mxu0
      %v2407 = vpop.f32.mrf.mxu0
      %v2408 = vadd.f32 %v2312, %v2407
      %v2409 = vpop.f32.mrf.mxu0
      %2410 = vmatprep.mubr.bf16.mxu0 0
      %2411 = vmatmul.mubr.bf16.gmra.mxu0 %v2332
      %v2412 = vpop.f32.mrf.mxu0
      %v2413 = vadd.f32 %v2312, %v2412
      %v2414 = vpop.f32.mrf.mxu0
      %v2415 = vpop.f32.mrf.mxu0
      %v2416 = vadd.f32 %v2312, %v2415
      %v2417 = vpop.f32.mrf.mxu0
      %2418 = vmatprep.mubr.bf16.mxu0 0
      %2419 = vmatmul.mubr.bf16.gmra.mxu0 %v2335
      %v2420 = vpop.f32.mrf.mxu0
      %v2421 = vadd.f32 %v2312, %v2420
      %v2422 = vpop.f32.mrf.mxu0
      %v2423 = vpop.f32.mrf.mxu0
      %v2424 = vadd.f32 %v2312, %v2423
      %v2425 = vpop.f32.mrf.mxu0
      %2426 = vmatprep.mubr.bf16.mxu0 0
      %2427 = vmatmul.mubr.bf16.gmra.mxu0 %v2338
      %v2428 = vpop.f32.mrf.mxu0
      %v2429 = vadd.f32 %v2312, %v2428
      %v2430 = vpop.f32.mrf.mxu0
      %v2431 = vpop.f32.mrf.mxu0
      %v2432 = vadd.f32 %v2312, %v2431
      %v2433 = vpop.f32.mrf.mxu0
      %2434 = vmatprep.mubr.bf16.mxu0 0
      %2435 = vmatmul.mubr.bf16.gmra.mxu0 %v2341
      %v2436 = vpop.f32.mrf.mxu0
      %v2437 = vadd.f32 %v2312, %v2436
      %v2438 = vpop.f32.mrf.mxu0
      %v2439 = vpop.f32.mrf.mxu0
      %v2440 = vadd.f32 %v2312, %v2439
      %v2441 = vpop.f32.mrf.mxu0
      %2442 = vdwg.mxu0
      %v2443 = vtanh.pop %v2381
      %v2444 = vtanh.pop %v2384
      %v2445 = vtanh.pop %v2389
      %v2446 = vtanh.pop %v2392
      %v2447 = vtanh.pop %v2397
      %v2448 = vtanh.pop %v2400
      %v2449 = vtanh.pop %v2405
      %v2450 = vtanh.pop %v2408
      %v2451 = vtanh.pop %v2413
      %v2452 = vtanh.pop %v2416
      %v2453 = vtanh.pop %v2421
      %v2454 = vtanh.pop %v2424
      %v2455 = vtanh.pop %v2429
      %v2456 = vtanh.pop %v2432
      %v2457 = vtanh.pop %v2437
      %v2458 = vtanh.pop %v2440
      %v2459 = vpack.c.bf16 %v2444, %v2443
      %v2460 = vpack.c.bf16 %v2446, %v2445
      %v2461 = vpack.c.bf16 %v2448, %v2447
      %v2462 = vpack.c.bf16 %v2450, %v2449
      %v2463 = vpack.c.bf16 %v2452, %v2451
      %v2464 = vpack.c.bf16 %v2454, %v2453
      %v2465 = vpack.c.bf16 %v2456, %v2455
      %v2466 = vpack.c.bf16 %v2458, %v2457
      %v2467 = vld [vmem:[%s13] sm:$0xf]
      %v2468 = vld [vmem:[%s13 + $0x4] sm:$0xf]
      %v2469 = vld [vmem:[%s13 + $0x8] sm:$0xf]
      %v2470 = vld [vmem:[%s13 + $0xc] sm:$0xf]
      %v2471 = vld [vmem:[%s13 + $0x10] sm:$0xf]
      %v2472 = vld [vmem:[%s13 + $0x14] sm:$0xf]
      %v2473 = vld [vmem:[%s13 + $0x18] sm:$0xf]
      %v2474 = vld [vmem:[%s13 + $0x1c] sm:$0xf]
      %v2475 = vld [vmem:[%s14] sm:$0x1]
      %v2477 = vlaneseq
      %v2478 = vshrl.u32 %v2477, 7
      %v2479 = vsub.s32 0, %v2478
      %v2480 = vrot.slane %v2475, %v2479
      %v2490 = vunpack.c.l.b16 %v2467
      %v2491 = vunpack.c.l.b16 %v2468
      %v2492 = vunpack.c.l.b16 %v2469
      %v2493 = vunpack.c.l.b16 %v2470
      %v2494 = vunpack.c.l.b16 %v2471
      %v2495 = vunpack.c.l.b16 %v2472
      %v2496 = vunpack.c.l.b16 %v2473
      %v2497 = vunpack.c.l.b16 %v2474
      %v2498 = vpack.c.b16 %v2491, %v2490
      %v2499 = vpack.c.b16 %v2493, %v2492
      %v2500 = vpack.c.b16 %v2495, %v2494
      %v2501 = vpack.c.b16 %v2497, %v2496
      %v2507 = vsel %vm1834, %v2459, 0
      %v2510 = vsel %vm1834, %v2460, 0
      %v2513 = vsel %vm1834, %v2461, 0
      %v2516 = vsel %vm1834, %v2462, 0
      %v2519 = vsel %vm1834, %v2463, 0
      %v2522 = vsel %vm1834, %v2464, 0
      %v2525 = vsel %vm1834, %v2465, 0
      %v2528 = vsel %vm1834, %v2466, 0
      %2530 = vmatprep.subr.bf16.mxu0 0
      %2531 = vmatpush1.bf16.msra.mxu0 0
      %2532 = vmatprep.subr.bf16.mxu0 0
      %2533 = vmatpush1.bf16.msra.mxu0 0
      %2534 = vmatprep.subr.bf16.mxu0 0
      %2535 = vmatpush1.bf16.msra.mxu0 0
      %2536 = vmatprep.subr.bf16.mxu0 0
      %2537 = vmatpush1.bf16.msra.mxu0 0
      %2538 = vmatprep.subr.bf16.mxu0 0
      %2539 = vmatpush1.bf16.msra.mxu0 %v2501
      %2540 = vmatprep.subr.bf16.mxu0 0
      %2541 = vmatpush1.bf16.msra.mxu0 %v2500
      %2542 = vmatprep.subr.bf16.mxu0 0
      %2543 = vmatpush1.bf16.msra.mxu0 %v2499
      %2544 = vmatprep.subr.bf16.mxu0 0
      %2545 = vmatpush1.bf16.msra.mxu0 %v2498
      %2546 = vmatprep.subr.bf16.mxu0 0
      %2547 = vmatpush2.bf16.msra.mxu0 0
      %2548 = vmatprep.subr.bf16.mxu0 0
      %2549 = vmatpush2.bf16.msra.mxu0 0
      %2550 = vmatprep.subr.bf16.mxu0 0
      %2551 = vmatpush2.bf16.msra.mxu0 0
      %2552 = vmatprep.subr.bf16.mxu0 0
      %2553 = vmatpush2.bf16.msra.mxu0 0
      %2554 = vmatprep.subr.bf16.mxu0 0
      %2555 = vmatpush2.bf16.msra.mxu0 0
      %2556 = vmatprep.subr.bf16.mxu0 0
      %2557 = vmatpush2.bf16.msra.mxu0 0
      %2558 = vmatprep.subr.bf16.mxu0 0
      %2559 = vmatpush2.bf16.msra.mxu0 0
      %2560 = vmatprep.subr.bf16.mxu0 0
      %2561 = vmatpush2.bf16.msra.mxu0 0
      %2562 = vmatprep.mubr.bf16.mxu0 0
      %2563 = vmatmul.mubr.bf16.gmra.mxu0 %v2507
      %v2564 = vpop.f32.mrf.mxu0
      %v2565 = vadd.f32 %v2480, %v2564
      %v2566 = vpop.f32.mrf.mxu0
      %v2567 = vpop.f32.mrf.mxu0
      %v2568 = vadd.f32 %v2480, %v2567
      %v2569 = vpop.f32.mrf.mxu0
      %2570 = vmatprep.mubr.bf16.mxu0 0
      %2571 = vmatmul.mubr.bf16.gmra.mxu0 %v2510
      %v2572 = vpop.f32.mrf.mxu0
      %v2573 = vadd.f32 %v2480, %v2572
      %v2574 = vpop.f32.mrf.mxu0
      %v2575 = vpop.f32.mrf.mxu0
      %v2576 = vadd.f32 %v2480, %v2575
      %v2577 = vpop.f32.mrf.mxu0
      %2578 = vmatprep.mubr.bf16.mxu0 0
      %2579 = vmatmul.mubr.bf16.gmra.mxu0 %v2513
      %v2580 = vpop.f32.mrf.mxu0
      %v2581 = vadd.f32 %v2480, %v2580
      %v2582 = vpop.f32.mrf.mxu0
      %v2583 = vpop.f32.mrf.mxu0
      %v2584 = vadd.f32 %v2480, %v2583
      %v2585 = vpop.f32.mrf.mxu0
      %2586 = vmatprep.mubr.bf16.mxu0 0
      %2587 = vmatmul.mubr.bf16.gmra.mxu0 %v2516
      %v2588 = vpop.f32.mrf.mxu0
      %v2589 = vadd.f32 %v2480, %v2588
      %v2590 = vpop.f32.mrf.mxu0
      %v2591 = vpop.f32.mrf.mxu0
      %v2592 = vadd.f32 %v2480, %v2591
      %v2593 = vpop.f32.mrf.mxu0
      %2594 = vmatprep.mubr.bf16.mxu0 0
      %2595 = vmatmul.mubr.bf16.gmra.mxu0 %v2519
      %v2596 = vpop.f32.mrf.mxu0
      %v2597 = vadd.f32 %v2480, %v2596
      %v2598 = vpop.f32.mrf.mxu0
      %v2599 = vpop.f32.mrf.mxu0
      %v2600 = vadd.f32 %v2480, %v2599
      %v2601 = vpop.f32.mrf.mxu0
      %2602 = vmatprep.mubr.bf16.mxu0 0
      %2603 = vmatmul.mubr.bf16.gmra.mxu0 %v2522
      %v2604 = vpop.f32.mrf.mxu0
      %v2605 = vadd.f32 %v2480, %v2604
      %v2606 = vpop.f32.mrf.mxu0
      %v2607 = vpop.f32.mrf.mxu0
      %v2608 = vadd.f32 %v2480, %v2607
      %v2609 = vpop.f32.mrf.mxu0
      %2610 = vmatprep.mubr.bf16.mxu0 0
      %2611 = vmatmul.mubr.bf16.gmra.mxu0 %v2525
      %v2612 = vpop.f32.mrf.mxu0
      %v2613 = vadd.f32 %v2480, %v2612
      %v2614 = vpop.f32.mrf.mxu0
      %v2615 = vpop.f32.mrf.mxu0
      %v2616 = vadd.f32 %v2480, %v2615
      %v2617 = vpop.f32.mrf.mxu0
      %2618 = vmatprep.mubr.bf16.mxu0 0
      %2619 = vmatmul.mubr.bf16.gmra.mxu0 %v2528
      %v2620 = vpop.f32.mrf.mxu0
      %v2621 = vadd.f32 %v2480, %v2620
      %v2622 = vpop.f32.mrf.mxu0
      %v2623 = vpop.f32.mrf.mxu0
      %v2624 = vadd.f32 %v2480, %v2623
      %v2625 = vpop.f32.mrf.mxu0
      %2626 = vdwg.mxu0
      %v2627 = vtanh.pop %v2565
      %v2628 = vtanh.pop %v2568
      %v2629 = vtanh.pop %v2573
      %v2630 = vtanh.pop %v2576
      %v2631 = vtanh.pop %v2581
      %v2632 = vtanh.pop %v2584
      %v2633 = vtanh.pop %v2589
      %v2634 = vtanh.pop %v2592
      %v2635 = vtanh.pop %v2597
      %v2636 = vtanh.pop %v2600
      %v2637 = vtanh.pop %v2605
      %v2638 = vtanh.pop %v2608
      %v2639 = vtanh.pop %v2613
      %v2640 = vtanh.pop %v2616
      %v2641 = vtanh.pop %v2621
      %v2642 = vtanh.pop %v2624
      %v2643 = vpack.c.bf16 %v2628, %v2627
      %v2644 = vpack.c.bf16 %v2630, %v2629
      %v2645 = vpack.c.bf16 %v2632, %v2631
      %v2646 = vpack.c.bf16 %v2634, %v2633
      %v2647 = vpack.c.bf16 %v2636, %v2635
      %v2648 = vpack.c.bf16 %v2638, %v2637
      %v2649 = vpack.c.bf16 %v2640, %v2639
      %v2650 = vpack.c.bf16 %v2642, %v2641
      %v2651 = vld [vmem:[%s15] sm:$0xff]
      %v2652 = vld [vmem:[%s15 + $0x8] sm:$0xff]
      %v2653 = vld [vmem:[%s15 + $0x10] sm:$0xff]
      %v2654 = vld [vmem:[%s15 + $0x18] sm:$0xf]
      %v2655 = vld [vmem:[%s15 + $0x1c] sm:$0xff]
      %v2656 = vld [vmem:[%s15 + $0x24] sm:$0xff]
      %v2657 = vld [vmem:[%s15 + $0x2c] sm:$0xff]
      %v2658 = vld [vmem:[%s15 + $0x34] sm:$0xf]
      %v2659 = vld [vmem:[%s15 + $0x38] sm:$0xff]
      %v2660 = vld [vmem:[%s15 + $0x40] sm:$0xff]
      %v2661 = vld [vmem:[%s15 + $0x48] sm:$0xff]
      %v2662 = vld [vmem:[%s15 + $0x50] sm:$0xf]
      %v2663 = vld [vmem:[%s15 + $0x54] sm:$0xff]
      %v2664 = vld [vmem:[%s15 + $0x5c] sm:$0xff]
      %v2665 = vld [vmem:[%s15 + $0x64] sm:$0xff]
      %v2666 = vld [vmem:[%s15 + $0x6c] sm:$0xf]
      %v2667 = vld [vmem:[%s15 + $0x70] sm:$0xff]
      %v2668 = vld [vmem:[%s15 + $0x78] sm:$0xff]
      %v2669 = vld [vmem:[%s15 + $0x80] sm:$0xff]
      %v2670 = vld [vmem:[%s15 + $0x88] sm:$0xf]
      %v2671 = vld [vmem:[%s15 + $0x8c] sm:$0xff]
      %v2672 = vld [vmem:[%s15 + $0x94] sm:$0xff]
      %v2673 = vld [vmem:[%s15 + $0x9c] sm:$0xff]
      %v2674 = vld [vmem:[%s15 + $0xa4] sm:$0xf]
      %v2675 = vld [vmem:[%s15 + $0xa8] sm:$0xff]
      %v2676 = vld [vmem:[%s15 + $0xb0] sm:$0xff]
      %v2677 = vld [vmem:[%s15 + $0xb8] sm:$0xff]
      %v2678 = vld [vmem:[%s15 + $0xc0] sm:$0xf]
      %v2679 = vld [vmem:[%s15 + $0xc4] sm:$0xff]
      %v2680 = vld [vmem:[%s15 + $0xcc] sm:$0xff]
      %v2681 = vld [vmem:[%s15 + $0xd4] sm:$0xff]
      %v2682 = vld [vmem:[%s15 + $0xdc] sm:$0xf]
      %v2683 = vld [vmem:[%s15 + $0xe0] sm:$0xff]
      %v2684 = vld [vmem:[%s15 + $0xe8] sm:$0xff]
      %v2685 = vld [vmem:[%s15 + $0xf0] sm:$0xff]
      %v2686 = vld [vmem:[%s15 + $0xf8] sm:$0xf]
      %v2687 = vld [vmem:[%s15 + $0xfc] sm:$0xff]
      %v2688 = vld [vmem:[%s15 + $0x104] sm:$0xff]
      %v2689 = vld [vmem:[%s15 + $0x10c] sm:$0xff]
      %v2690 = vld [vmem:[%s15 + $0x114] sm:$0xf]
      %v2691 = vld [vmem:[%s15 + $0x118] sm:$0xff]
      %v2692 = vld [vmem:[%s15 + $0x120] sm:$0xff]
      %v2693 = vld [vmem:[%s15 + $0x128] sm:$0xff]
      %v2694 = vld [vmem:[%s15 + $0x130] sm:$0xf]
      %v2695 = vld [vmem:[%s15 + $0x134] sm:$0xff]
      %v2696 = vld [vmem:[%s15 + $0x13c] sm:$0xff]
      %v2697 = vld [vmem:[%s15 + $0x144] sm:$0xff]
      %v2698 = vld [vmem:[%s15 + $0x14c] sm:$0xf]
      %v2699 = vld [vmem:[%s15 + $0x150] sm:$0xff]
      %v2700 = vld [vmem:[%s15 + $0x158] sm:$0xff]
      %v2701 = vld [vmem:[%s15 + $0x160] sm:$0xff]
      %v2702 = vld [vmem:[%s15 + $0x168] sm:$0xf]
      %v2703 = vld [vmem:[%s15 + $0x16c] sm:$0xff]
      %v2704 = vld [vmem:[%s15 + $0x174] sm:$0xff]
      %v2705 = vld [vmem:[%s15 + $0x17c] sm:$0xff]
      %v2706 = vld [vmem:[%s15 + $0x184] sm:$0xf]
      %v2707 = vld [vmem:[%s15 + $0x188] sm:$0xff]
      %v2708 = vld [vmem:[%s15 + $0x190] sm:$0xff]
      %v2709 = vld [vmem:[%s15 + $0x198] sm:$0xff]
      %v2710 = vld [vmem:[%s15 + $0x1a0] sm:$0xf]
      %v2711 = vld [vmem:[%s15 + $0x1a4] sm:$0xff]
      %v2712 = vld [vmem:[%s15 + $0x1ac] sm:$0xff]
      %v2713 = vld [vmem:[%s15 + $0x1b4] sm:$0xff]
      %v2714 = vld [vmem:[%s15 + $0x1bc] sm:$0xf]
      %v2715 = vld [vmem:[%s16] sm:$0x7f]
      %v2717 = vlaneseq
      %v2718 = vshrl.u32 %v2717, 7
      %v2719 = vsub.s32 0, %v2718
      %v2720 = vrot.slane %v2715, %v2719
      %v2721 = vlaneseq
      %v2722 = vshrl.u32 %v2721, 7
      %v2723 = vsub.s32 1, %v2722
      %v2724 = vrot.slane %v2715, %v2723
      %v2725 = vlaneseq
      %v2726 = vshrl.u32 %v2725, 7
      %v2727 = vsub.s32 2, %v2726
      %v2728 = vrot.slane %v2715, %v2727
      %v2729 = vlaneseq
      %v2730 = vshrl.u32 %v2729, 7
      %v2731 = vsub.s32 3, %v2730
      %v2732 = vrot.slane %v2715, %v2731
      %v2733 = vlaneseq
      %v2734 = vshrl.u32 %v2733, 7
      %v2735 = vsub.s32 4, %v2734
      %v2736 = vrot.slane %v2715, %v2735
      %v2737 = vlaneseq
      %v2738 = vshrl.u32 %v2737, 7
      %v2739 = vsub.s32 5, %v2738
      %v2740 = vrot.slane %v2715, %v2739
      %v2741 = vlaneseq
      %v2742 = vshrl.u32 %v2741, 7
      %v2743 = vsub.s32 6, %v2742
      %v2744 = vrot.slane %v2715, %v2743
      %v2816 = vunpack.c.l.b16 %v2651
      %v2817 = vunpack.c.h.b16 %v2651
      %v2818 = vunpack.c.l.b16 %v2652
      %v2819 = vunpack.c.h.b16 %v2652
      %v2820 = vunpack.c.l.b16 %v2653
      %v2821 = vunpack.c.h.b16 %v2653
      %v2822 = vunpack.c.l.b16 %v2654
      %v2823 = vunpack.c.l.b16 %v2655
      %v2824 = vunpack.c.h.b16 %v2655
      %v2825 = vunpack.c.l.b16 %v2656
      %v2826 = vunpack.c.h.b16 %v2656
      %v2827 = vunpack.c.l.b16 %v2657
      %v2828 = vunpack.c.h.b16 %v2657
      %v2829 = vunpack.c.l.b16 %v2658
      %v2830 = vunpack.c.l.b16 %v2659
      %v2831 = vunpack.c.h.b16 %v2659
      %v2832 = vunpack.c.l.b16 %v2660
      %v2833 = vunpack.c.h.b16 %v2660
      %v2834 = vunpack.c.l.b16 %v2661
      %v2835 = vunpack.c.h.b16 %v2661
      %v2836 = vunpack.c.l.b16 %v2662
      %v2837 = vunpack.c.l.b16 %v2663
      %v2838 = vunpack.c.h.b16 %v2663
      %v2839 = vunpack.c.l.b16 %v2664
      %v2840 = vunpack.c.h.b16 %v2664
      %v2841 = vunpack.c.l.b16 %v2665
      %v2842 = vunpack.c.h.b16 %v2665
      %v2843 = vunpack.c.l.b16 %v2666
      %v2844 = vunpack.c.l.b16 %v2667
      %v2845 = vunpack.c.h.b16 %v2667
      %v2846 = vunpack.c.l.b16 %v2668
      %v2847 = vunpack.c.h.b16 %v2668
      %v2848 = vunpack.c.l.b16 %v2669
      %v2849 = vunpack.c.h.b16 %v2669
      %v2850 = vunpack.c.l.b16 %v2670
      %v2851 = vunpack.c.l.b16 %v2671
      %v2852 = vunpack.c.h.b16 %v2671
      %v2853 = vunpack.c.l.b16 %v2672
      %v2854 = vunpack.c.h.b16 %v2672
      %v2855 = vunpack.c.l.b16 %v2673
      %v2856 = vunpack.c.h.b16 %v2673
      %v2857 = vunpack.c.l.b16 %v2674
      %v2858 = vunpack.c.l.b16 %v2675
      %v2859 = vunpack.c.h.b16 %v2675
      %v2860 = vunpack.c.l.b16 %v2676
      %v2861 = vunpack.c.h.b16 %v2676
      %v2862 = vunpack.c.l.b16 %v2677
      %v2863 = vunpack.c.h.b16 %v2677
      %v2864 = vunpack.c.l.b16 %v2678
      %v2865 = vunpack.c.l.b16 %v2679
      %v2866 = vunpack.c.h.b16 %v2679
      %v2867 = vunpack.c.l.b16 %v2680
      %v2868 = vunpack.c.h.b16 %v2680
      %v2869 = vunpack.c.l.b16 %v2681
      %v2870 = vunpack.c.h.b16 %v2681
      %v2871 = vunpack.c.l.b16 %v2682
      %v2872 = vunpack.c.l.b16 %v2683
      %v2873 = vunpack.c.h.b16 %v2683
      %v2874 = vunpack.c.l.b16 %v2684
      %v2875 = vunpack.c.h.b16 %v2684
      %v2876 = vunpack.c.l.b16 %v2685
      %v2877 = vunpack.c.h.b16 %v2685
      %v2878 = vunpack.c.l.b16 %v2686
      %v2879 = vunpack.c.l.b16 %v2687
      %v2880 = vunpack.c.h.b16 %v2687
      %v2881 = vunpack.c.l.b16 %v2688
      %v2882 = vunpack.c.h.b16 %v2688
      %v2883 = vunpack.c.l.b16 %v2689
      %v2884 = vunpack.c.h.b16 %v2689
      %v2885 = vunpack.c.l.b16 %v2690
      %v2886 = vunpack.c.l.b16 %v2691
      %v2887 = vunpack.c.h.b16 %v2691
      %v2888 = vunpack.c.l.b16 %v2692
      %v2889 = vunpack.c.h.b16 %v2692
      %v2890 = vunpack.c.l.b16 %v2693
      %v2891 = vunpack.c.h.b16 %v2693
      %v2892 = vunpack.c.l.b16 %v2694
      %v2893 = vunpack.c.l.b16 %v2695
      %v2894 = vunpack.c.h.b16 %v2695
      %v2895 = vunpack.c.l.b16 %v2696
      %v2896 = vunpack.c.h.b16 %v2696
      %v2897 = vunpack.c.l.b16 %v2697
      %v2898 = vunpack.c.h.b16 %v2697
      %v2899 = vunpack.c.l.b16 %v2698
      %v2900 = vunpack.c.l.b16 %v2699
      %v2901 = vunpack.c.h.b16 %v2699
      %v2902 = vunpack.c.l.b16 %v2700
      %v2903 = vunpack.c.h.b16 %v2700
      %v2904 = vunpack.c.l.b16 %v2701
      %v2905 = vunpack.c.h.b16 %v2701
      %v2906 = vunpack.c.l.b16 %v2702
      %v2907 = vunpack.c.l.b16 %v2703
      %v2908 = vunpack.c.h.b16 %v2703
      %v2909 = vunpack.c.l.b16 %v2704
      %v2910 = vunpack.c.h.b16 %v2704
      %v2911 = vunpack.c.l.b16 %v2705
      %v2912 = vunpack.c.h.b16 %v2705
      %v2913 = vunpack.c.l.b16 %v2706
      %v2914 = vunpack.c.l.b16 %v2707
      %v2915 = vunpack.c.h.b16 %v2707
      %v2916 = vunpack.c.l.b16 %v2708
      %v2917 = vunpack.c.h.b16 %v2708
      %v2918 = vunpack.c.l.b16 %v2709
      %v2919 = vunpack.c.h.b16 %v2709
      %v2920 = vunpack.c.l.b16 %v2710
      %v2921 = vunpack.c.l.b16 %v2711
      %v2922 = vunpack.c.h.b16 %v2711
      %v2923 = vunpack.c.l.b16 %v2712
      %v2924 = vunpack.c.h.b16 %v2712
      %v2925 = vunpack.c.l.b16 %v2713
      %v2926 = vunpack.c.h.b16 %v2713
      %v2927 = vunpack.c.l.b16 %v2714
      %v2928 = vpack.c.b16 %v2823, %v2816
      %v2929 = vpack.c.b16 %v2824, %v2817
      %v2930 = vpack.c.b16 %v2825, %v2818
      %v2931 = vpack.c.b16 %v2826, %v2819
      %v2932 = vpack.c.b16 %v2827, %v2820
      %v2933 = vpack.c.b16 %v2828, %v2821
      %v2934 = vpack.c.b16 %v2829, %v2822
      %v2935 = vpack.c.b16 %v2837, %v2830
      %v2936 = vpack.c.b16 %v2838, %v2831
      %v2937 = vpack.c.b16 %v2839, %v2832
      %v2938 = vpack.c.b16 %v2840, %v2833
      %v2939 = vpack.c.b16 %v2841, %v2834
      %v2940 = vpack.c.b16 %v2842, %v2835
      %v2941 = vpack.c.b16 %v2843, %v2836
      %v2942 = vpack.c.b16 %v2851, %v2844
      %v2943 = vpack.c.b16 %v2852, %v2845
      %v2944 = vpack.c.b16 %v2853, %v2846
      %v2945 = vpack.c.b16 %v2854, %v2847
      %v2946 = vpack.c.b16 %v2855, %v2848
      %v2947 = vpack.c.b16 %v2856, %v2849
      %v2948 = vpack.c.b16 %v2857, %v2850
      %v2949 = vpack.c.b16 %v2865, %v2858
      %v2950 = vpack.c.b16 %v2866, %v2859
      %v2951 = vpack.c.b16 %v2867, %v2860
      %v2952 = vpack.c.b16 %v2868, %v2861
      %v2953 = vpack.c.b16 %v2869, %v2862
      %v2954 = vpack.c.b16 %v2870, %v2863
      %v2955 = vpack.c.b16 %v2871, %v2864
      %v2956 = vpack.c.b16 %v2879, %v2872
      %v2957 = vpack.c.b16 %v2880, %v2873
      %v2958 = vpack.c.b16 %v2881, %v2874
      %v2959 = vpack.c.b16 %v2882, %v2875
      %v2960 = vpack.c.b16 %v2883, %v2876
      %v2961 = vpack.c.b16 %v2884, %v2877
      %v2962 = vpack.c.b16 %v2885, %v2878
      %v2963 = vpack.c.b16 %v2893, %v2886
      %v2964 = vpack.c.b16 %v2894, %v2887
      %v2965 = vpack.c.b16 %v2895, %v2888
      %v2966 = vpack.c.b16 %v2896, %v2889
      %v2967 = vpack.c.b16 %v2897, %v2890
      %v2968 = vpack.c.b16 %v2898, %v2891
      %v2969 = vpack.c.b16 %v2899, %v2892
      %v2970 = vpack.c.b16 %v2907, %v2900
      %v2971 = vpack.c.b16 %v2908, %v2901
      %v2972 = vpack.c.b16 %v2909, %v2902
      %v2973 = vpack.c.b16 %v2910, %v2903
      %v2974 = vpack.c.b16 %v2911, %v2904
      %v2975 = vpack.c.b16 %v2912, %v2905
      %v2976 = vpack.c.b16 %v2913, %v2906
      %v2977 = vpack.c.b16 %v2921, %v2914
      %v2978 = vpack.c.b16 %v2922, %v2915
      %v2979 = vpack.c.b16 %v2923, %v2916
      %v2980 = vpack.c.b16 %v2924, %v2917
      %v2981 = vpack.c.b16 %v2925, %v2918
      %v2982 = vpack.c.b16 %v2926, %v2919
      %v2983 = vpack.c.b16 %v2927, %v2920
      %3040 = vmatprep.subr.bf16.mxu0 %v2978
      %3041 = vmatpush1.bf16.msra.mxu0 %v2977
      %3042 = vmatprep.subr.bf16.mxu0 %v2971
      %3043 = vmatpush1.bf16.msra.mxu0 %v2970
      %3044 = vmatprep.subr.bf16.mxu0 %v2964
      %3045 = vmatpush1.bf16.msra.mxu0 %v2963
      %3046 = vmatprep.subr.bf16.mxu0 %v2957
      %3047 = vmatpush1.bf16.msra.mxu0 %v2956
      %3048 = vmatprep.subr.bf16.mxu0 %v2950
      %3049 = vmatpush1.bf16.msra.mxu0 %v2949
      %3050 = vmatprep.subr.bf16.mxu0 %v2943
      %3051 = vmatpush1.bf16.msra.mxu0 %v2942
      %3052 = vmatprep.subr.bf16.mxu0 %v2936
      %3053 = vmatpush1.bf16.msra.mxu0 %v2935
      %3054 = vmatprep.subr.bf16.mxu0 %v2929
      %3055 = vmatpush1.bf16.msra.mxu0 %v2928
      %3056 = vmatprep.subr.bf16.mxu0 0
      %3057 = vmatpush2.bf16.msra.mxu0 0
      %3058 = vmatprep.subr.bf16.mxu0 0
      %3059 = vmatpush2.bf16.msra.mxu0 0
      %3060 = vmatprep.subr.bf16.mxu0 0
      %3061 = vmatpush2.bf16.msra.mxu0 0
      %3062 = vmatprep.subr.bf16.mxu0 0
      %3063 = vmatpush2.bf16.msra.mxu0 0
      %3064 = vmatprep.subr.bf16.mxu0 0
      %3065 = vmatpush2.bf16.msra.mxu0 0
      %3066 = vmatprep.subr.bf16.mxu0 0
      %3067 = vmatpush2.bf16.msra.mxu0 0
      %3068 = vmatprep.subr.bf16.mxu0 0
      %3069 = vmatpush2.bf16.msra.mxu0 0
      %3070 = vmatprep.subr.bf16.mxu0 0
      %3071 = vmatpush2.bf16.msra.mxu0 0
      %3072 = vmatprep.mubr.bf16.mxu0 0
      %3073 = vmatmul.mubr.bf16.gmra.mxu0 %v2643
      %v3074 = vpop.f32.mrf.mxu0
      %v3075 = vadd.f32 %v2720, %v3074
      %v3076 = vpop.f32.mrf.mxu0
      %v3077 = vadd.f32 %v2724, %v3076
      %v3078 = vpop.f32.mrf.mxu0
      %v3079 = vadd.f32 %v2720, %v3078
      %v3080 = vpop.f32.mrf.mxu0
      %v3081 = vadd.f32 %v2724, %v3080
      %3082 = vmatprep.mubr.bf16.mxu0 0
      %3083 = vmatmul.mubr.bf16.gmra.mxu0 %v2644
      %v3084 = vpop.f32.mrf.mxu0
      %v3085 = vadd.f32 %v2720, %v3084
      %v3086 = vpop.f32.mrf.mxu0
      %v3087 = vadd.f32 %v2724, %v3086
      %v3088 = vpop.f32.mrf.mxu0
      %v3089 = vadd.f32 %v2720, %v3088
      %v3090 = vpop.f32.mrf.mxu0
      %v3091 = vadd.f32 %v2724, %v3090
      %3092 = vmatprep.mubr.bf16.mxu0 0
      %3093 = vmatmul.mubr.bf16.gmra.mxu0 %v2645
      %v3094 = vpop.f32.mrf.mxu0
      %v3095 = vadd.f32 %v2720, %v3094
      %v3096 = vpop.f32.mrf.mxu0
      %v3097 = vadd.f32 %v2724, %v3096
      %v3098 = vpop.f32.mrf.mxu0
      %v3099 = vadd.f32 %v2720, %v3098
      %v3100 = vpop.f32.mrf.mxu0
      %v3101 = vadd.f32 %v2724, %v3100
      %3102 = vmatprep.mubr.bf16.mxu0 0
      %3103 = vmatmul.mubr.bf16.gmra.mxu0 %v2646
      %v3104 = vpop.f32.mrf.mxu0
      %v3105 = vadd.f32 %v2720, %v3104
      %v3106 = vpop.f32.mrf.mxu0
      %v3107 = vadd.f32 %v2724, %v3106
      %v3108 = vpop.f32.mrf.mxu0
      %v3109 = vadd.f32 %v2720, %v3108
      %v3110 = vpop.f32.mrf.mxu0
      %v3111 = vadd.f32 %v2724, %v3110
      %3112 = vmatprep.mubr.bf16.mxu0 0
      %3113 = vmatmul.mubr.bf16.gmra.mxu0 %v2647
      %v3114 = vpop.f32.mrf.mxu0
      %v3115 = vadd.f32 %v2720, %v3114
      %v3116 = vpop.f32.mrf.mxu0
      %v3117 = vadd.f32 %v2724, %v3116
      %v3118 = vpop.f32.mrf.mxu0
      %v3119 = vadd.f32 %v2720, %v3118
      %v3120 = vpop.f32.mrf.mxu0
      %v3121 = vadd.f32 %v2724, %v3120
      %3122 = vmatprep.mubr.bf16.mxu0 0
      %3123 = vmatmul.mubr.bf16.gmra.mxu0 %v2648
      %v3124 = vpop.f32.mrf.mxu0
      %v3125 = vadd.f32 %v2720, %v3124
      %v3126 = vpop.f32.mrf.mxu0
      %v3127 = vadd.f32 %v2724, %v3126
      %v3128 = vpop.f32.mrf.mxu0
      %v3129 = vadd.f32 %v2720, %v3128
      %v3130 = vpop.f32.mrf.mxu0
      %v3131 = vadd.f32 %v2724, %v3130
      %3132 = vmatprep.mubr.bf16.mxu0 0
      %3133 = vmatmul.mubr.bf16.gmra.mxu0 %v2649
      %v3134 = vpop.f32.mrf.mxu0
      %v3135 = vadd.f32 %v2720, %v3134
      %v3136 = vpop.f32.mrf.mxu0
      %v3137 = vadd.f32 %v2724, %v3136
      %v3138 = vpop.f32.mrf.mxu0
      %v3139 = vadd.f32 %v2720, %v3138
      %v3140 = vpop.f32.mrf.mxu0
      %v3141 = vadd.f32 %v2724, %v3140
      %3142 = vmatprep.mubr.bf16.mxu0 0
      %3143 = vmatmul.mubr.bf16.gmra.mxu0 %v2650
      %v3144 = vpop.f32.mrf.mxu0
      %v3145 = vadd.f32 %v2720, %v3144
      %v3146 = vpop.f32.mrf.mxu0
      %v3147 = vadd.f32 %v2724, %v3146
      %v3148 = vpop.f32.mrf.mxu0
      %v3149 = vadd.f32 %v2720, %v3148
      %v3150 = vpop.f32.mrf.mxu0
      %v3151 = vadd.f32 %v2724, %v3150
      %3152 = vdwg.mxu0
      %3153 = vmatprep.subr.bf16.mxu0 %v2980
      %3154 = vmatpush1.bf16.msra.mxu0 %v2979
      %3155 = vmatprep.subr.bf16.mxu0 %v2973
      %3156 = vmatpush1.bf16.msra.mxu0 %v2972
      %3157 = vmatprep.subr.bf16.mxu0 %v2966
      %3158 = vmatpush1.bf16.msra.mxu0 %v2965
      %3159 = vmatprep.subr.bf16.mxu0 %v2959
      %3160 = vmatpush1.bf16.msra.mxu0 %v2958
      %3161 = vmatprep.subr.bf16.mxu0 %v2952
      %3162 = vmatpush1.bf16.msra.mxu0 %v2951
      %3163 = vmatprep.subr.bf16.mxu0 %v2945
      %3164 = vmatpush1.bf16.msra.mxu0 %v2944
      %3165 = vmatprep.subr.bf16.mxu0 %v2938
      %3166 = vmatpush1.bf16.msra.mxu0 %v2937
      %3167 = vmatprep.subr.bf16.mxu0 %v2931
      %3168 = vmatpush1.bf16.msra.mxu0 %v2930
      %3169 = vmatprep.subr.bf16.mxu0 0
      %3170 = vmatpush2.bf16.msra.mxu0 0
      %3171 = vmatprep.subr.bf16.mxu0 0
      %3172 = vmatpush2.bf16.msra.mxu0 0
      %3173 = vmatprep.subr.bf16.mxu0 0
      %3174 = vmatpush2.bf16.msra.mxu0 0
      %3175 = vmatprep.subr.bf16.mxu0 0
      %3176 = vmatpush2.bf16.msra.mxu0 0
      %3177 = vmatprep.subr.bf16.mxu0 0
      %3178 = vmatpush2.bf16.msra.mxu0 0
      %3179 = vmatprep.subr.bf16.mxu0 0
      %3180 = vmatpush2.bf16.msra.mxu0 0
      %3181 = vmatprep.subr.bf16.mxu0 0
      %3182 = vmatpush2.bf16.msra.mxu0 0
      %3183 = vmatprep.subr.bf16.mxu0 0
      %3184 = vmatpush2.bf16.msra.mxu0 0
      %3185 = vmatprep.mubr.bf16.mxu0 0
      %3186 = vmatmul.mubr.bf16.gmra.mxu0 %v2643
      %v3187 = vpop.f32.mrf.mxu0
      %v3188 = vadd.f32 %v2728, %v3187
      %v3189 = vpop.f32.mrf.mxu0
      %v3190 = vadd.f32 %v2732, %v3189
      %v3191 = vpop.f32.mrf.mxu0
      %v3192 = vadd.f32 %v2728, %v3191
      %v3193 = vpop.f32.mrf.mxu0
      %v3194 = vadd.f32 %v2732, %v3193
      %3195 = vmatprep.mubr.bf16.mxu0 0
      %3196 = vmatmul.mubr.bf16.gmra.mxu0 %v2644
      %v3197 = vpop.f32.mrf.mxu0
      %v3198 = vadd.f32 %v2728, %v3197
      %v3199 = vpop.f32.mrf.mxu0
      %v3200 = vadd.f32 %v2732, %v3199
      %v3201 = vpop.f32.mrf.mxu0
      %v3202 = vadd.f32 %v2728, %v3201
      %v3203 = vpop.f32.mrf.mxu0
      %v3204 = vadd.f32 %v2732, %v3203
      %3205 = vmatprep.mubr.bf16.mxu0 0
      %3206 = vmatmul.mubr.bf16.gmra.mxu0 %v2645
      %v3207 = vpop.f32.mrf.mxu0
      %v3208 = vadd.f32 %v2728, %v3207
      %v3209 = vpop.f32.mrf.mxu0
      %v3210 = vadd.f32 %v2732, %v3209
      %v3211 = vpop.f32.mrf.mxu0
      %v3212 = vadd.f32 %v2728, %v3211
      %v3213 = vpop.f32.mrf.mxu0
      %v3214 = vadd.f32 %v2732, %v3213
      %3215 = vmatprep.mubr.bf16.mxu0 0
      %3216 = vmatmul.mubr.bf16.gmra.mxu0 %v2646
      %v3217 = vpop.f32.mrf.mxu0
      %v3218 = vadd.f32 %v2728, %v3217
      %v3219 = vpop.f32.mrf.mxu0
      %v3220 = vadd.f32 %v2732, %v3219
      %v3221 = vpop.f32.mrf.mxu0
      %v3222 = vadd.f32 %v2728, %v3221
      %v3223 = vpop.f32.mrf.mxu0
      %v3224 = vadd.f32 %v2732, %v3223
      %3225 = vmatprep.mubr.bf16.mxu0 0
      %3226 = vmatmul.mubr.bf16.gmra.mxu0 %v2647
      %v3227 = vpop.f32.mrf.mxu0
      %v3228 = vadd.f32 %v2728, %v3227
      %v3229 = vpop.f32.mrf.mxu0
      %v3230 = vadd.f32 %v2732, %v3229
      %v3231 = vpop.f32.mrf.mxu0
      %v3232 = vadd.f32 %v2728, %v3231
      %v3233 = vpop.f32.mrf.mxu0
      %v3234 = vadd.f32 %v2732, %v3233
      %3235 = vmatprep.mubr.bf16.mxu0 0
      %3236 = vmatmul.mubr.bf16.gmra.mxu0 %v2648
      %v3237 = vpop.f32.mrf.mxu0
      %v3238 = vadd.f32 %v2728, %v3237
      %v3239 = vpop.f32.mrf.mxu0
      %v3240 = vadd.f32 %v2732, %v3239
      %v3241 = vpop.f32.mrf.mxu0
      %v3242 = vadd.f32 %v2728, %v3241
      %v3243 = vpop.f32.mrf.mxu0
      %v3244 = vadd.f32 %v2732, %v3243
      %3245 = vmatprep.mubr.bf16.mxu0 0
      %3246 = vmatmul.mubr.bf16.gmra.mxu0 %v2649
      %v3247 = vpop.f32.mrf.mxu0
      %v3248 = vadd.f32 %v2728, %v3247
      %v3249 = vpop.f32.mrf.mxu0
      %v3250 = vadd.f32 %v2732, %v3249
      %v3251 = vpop.f32.mrf.mxu0
      %v3252 = vadd.f32 %v2728, %v3251
      %v3253 = vpop.f32.mrf.mxu0
      %v3254 = vadd.f32 %v2732, %v3253
      %3255 = vmatprep.mubr.bf16.mxu0 0
      %3256 = vmatmul.mubr.bf16.gmra.mxu0 %v2650
      %v3257 = vpop.f32.mrf.mxu0
      %v3258 = vadd.f32 %v2728, %v3257
      %v3259 = vpop.f32.mrf.mxu0
      %v3260 = vadd.f32 %v2732, %v3259
      %v3261 = vpop.f32.mrf.mxu0
      %v3262 = vadd.f32 %v2728, %v3261
      %v3263 = vpop.f32.mrf.mxu0
      %v3264 = vadd.f32 %v2732, %v3263
      %3265 = vdwg.mxu0
      %3266 = vmatprep.subr.bf16.mxu0 %v2982
      %3267 = vmatpush1.bf16.msra.mxu0 %v2981
      %3268 = vmatprep.subr.bf16.mxu0 %v2975
      %3269 = vmatpush1.bf16.msra.mxu0 %v2974
      %3270 = vmatprep.subr.bf16.mxu0 %v2968
      %3271 = vmatpush1.bf16.msra.mxu0 %v2967
      %3272 = vmatprep.subr.bf16.mxu0 %v2961
      %3273 = vmatpush1.bf16.msra.mxu0 %v2960
      %3274 = vmatprep.subr.bf16.mxu0 %v2954
      %3275 = vmatpush1.bf16.msra.mxu0 %v2953
      %3276 = vmatprep.subr.bf16.mxu0 %v2947
      %3277 = vmatpush1.bf16.msra.mxu0 %v2946
      %3278 = vmatprep.subr.bf16.mxu0 %v2940
      %3279 = vmatpush1.bf16.msra.mxu0 %v2939
      %3280 = vmatprep.subr.bf16.mxu0 %v2933
      %3281 = vmatpush1.bf16.msra.mxu0 %v2932
      %3282 = vmatprep.subr.bf16.mxu0 0
      %3283 = vmatpush2.bf16.msra.mxu0 0
      %3284 = vmatprep.subr.bf16.mxu0 0
      %3285 = vmatpush2.bf16.msra.mxu0 0
      %3286 = vmatprep.subr.bf16.mxu0 0
      %3287 = vmatpush2.bf16.msra.mxu0 0
      %3288 = vmatprep.subr.bf16.mxu0 0
      %3289 = vmatpush2.bf16.msra.mxu0 0
      %3290 = vmatprep.subr.bf16.mxu0 0
      %3291 = vmatpush2.bf16.msra.mxu0 0
      %3292 = vmatprep.subr.bf16.mxu0 0
      %3293 = vmatpush2.bf16.msra.mxu0 0
      %3294 = vmatprep.subr.bf16.mxu0 0
      %3295 = vmatpush2.bf16.msra.mxu0 0
      %3296 = vmatprep.subr.bf16.mxu0 0
      %3297 = vmatpush2.bf16.msra.mxu0 0
      %3298 = vmatprep.mubr.bf16.mxu0 0
      %3299 = vmatmul.mubr.bf16.gmra.mxu0 %v2643
      %v3300 = vpop.f32.mrf.mxu0
      %v3301 = vadd.f32 %v2736, %v3300
      %v3302 = vpop.f32.mrf.mxu0
      %v3303 = vadd.f32 %v2740, %v3302
      %v3304 = vpop.f32.mrf.mxu0
      %v3305 = vadd.f32 %v2736, %v3304
      %v3306 = vpop.f32.mrf.mxu0
      %v3307 = vadd.f32 %v2740, %v3306
      %3308 = vmatprep.mubr.bf16.mxu0 0
      %3309 = vmatmul.mubr.bf16.gmra.mxu0 %v2644
      %v3310 = vpop.f32.mrf.mxu0
      %v3311 = vadd.f32 %v2736, %v3310
      %v3312 = vpop.f32.mrf.mxu0
      %v3313 = vadd.f32 %v2740, %v3312
      %v3314 = vpop.f32.mrf.mxu0
      %v3315 = vadd.f32 %v2736, %v3314
      %v3316 = vpop.f32.mrf.mxu0
      %v3317 = vadd.f32 %v2740, %v3316
      %3318 = vmatprep.mubr.bf16.mxu0 0
      %3319 = vmatmul.mubr.bf16.gmra.mxu0 %v2645
      %v3320 = vpop.f32.mrf.mxu0
      %v3321 = vadd.f32 %v2736, %v3320
      %v3322 = vpop.f32.mrf.mxu0
      %v3323 = vadd.f32 %v2740, %v3322
      %v3324 = vpop.f32.mrf.mxu0
      %v3325 = vadd.f32 %v2736, %v3324
      %v3326 = vpop.f32.mrf.mxu0
      %v3327 = vadd.f32 %v2740, %v3326
      %3328 = vmatprep.mubr.bf16.mxu0 0
      %3329 = vmatmul.mubr.bf16.gmra.mxu0 %v2646
      %v3330 = vpop.f32.mrf.mxu0
      %v3331 = vadd.f32 %v2736, %v3330
      %v3332 = vpop.f32.mrf.mxu0
      %v3333 = vadd.f32 %v2740, %v3332
      %v3334 = vpop.f32.mrf.mxu0
      %v3335 = vadd.f32 %v2736, %v3334
      %v3336 = vpop.f32.mrf.mxu0
      %v3337 = vadd.f32 %v2740, %v3336
      %3338 = vmatprep.mubr.bf16.mxu0 0
      %3339 = vmatmul.mubr.bf16.gmra.mxu0 %v2647
      %v3340 = vpop.f32.mrf.mxu0
      %v3341 = vadd.f32 %v2736, %v3340
      %v3342 = vpop.f32.mrf.mxu0
      %v3343 = vadd.f32 %v2740, %v3342
      %v3344 = vpop.f32.mrf.mxu0
      %v3345 = vadd.f32 %v2736, %v3344
      %v3346 = vpop.f32.mrf.mxu0
      %v3347 = vadd.f32 %v2740, %v3346
      %3348 = vmatprep.mubr.bf16.mxu0 0
      %3349 = vmatmul.mubr.bf16.gmra.mxu0 %v2648
      %v3350 = vpop.f32.mrf.mxu0
      %v3351 = vadd.f32 %v2736, %v3350
      %v3352 = vpop.f32.mrf.mxu0
      %v3353 = vadd.f32 %v2740, %v3352
      %v3354 = vpop.f32.mrf.mxu0
      %v3355 = vadd.f32 %v2736, %v3354
      %v3356 = vpop.f32.mrf.mxu0
      %v3357 = vadd.f32 %v2740, %v3356
      %3358 = vmatprep.mubr.bf16.mxu0 0
      %3359 = vmatmul.mubr.bf16.gmra.mxu0 %v2649
      %v3360 = vpop.f32.mrf.mxu0
      %v3361 = vadd.f32 %v2736, %v3360
      %v3362 = vpop.f32.mrf.mxu0
      %v3363 = vadd.f32 %v2740, %v3362
      %v3364 = vpop.f32.mrf.mxu0
      %v3365 = vadd.f32 %v2736, %v3364
      %v3366 = vpop.f32.mrf.mxu0
      %v3367 = vadd.f32 %v2740, %v3366
      %3368 = vmatprep.mubr.bf16.mxu0 0
      %3369 = vmatmul.mubr.bf16.gmra.mxu0 %v2650
      %v3370 = vpop.f32.mrf.mxu0
      %v3371 = vadd.f32 %v2736, %v3370
      %v3372 = vpop.f32.mrf.mxu0
      %v3373 = vadd.f32 %v2740, %v3372
      %v3374 = vpop.f32.mrf.mxu0
      %v3375 = vadd.f32 %v2736, %v3374
      %v3376 = vpop.f32.mrf.mxu0
      %v3377 = vadd.f32 %v2740, %v3376
      %3378 = vdwg.mxu0
      %3379 = vmatprep.subr.bf16.mxu0 0
      %3380 = vmatpush1.bf16.msra.mxu0 %v2983
      %3381 = vmatprep.subr.bf16.mxu0 0
      %3382 = vmatpush1.bf16.msra.mxu0 %v2976
      %3383 = vmatprep.subr.bf16.mxu0 0
      %3384 = vmatpush1.bf16.msra.mxu0 %v2969
      %3385 = vmatprep.subr.bf16.mxu0 0
      %3386 = vmatpush1.bf16.msra.mxu0 %v2962
      %3387 = vmatprep.subr.bf16.mxu0 0
      %3388 = vmatpush1.bf16.msra.mxu0 %v2955
      %3389 = vmatprep.subr.bf16.mxu0 0
      %3390 = vmatpush1.bf16.msra.mxu0 %v2948
      %3391 = vmatprep.subr.bf16.mxu0 0
      %3392 = vmatpush1.bf16.msra.mxu0 %v2941
      %3393 = vmatprep.subr.bf16.mxu0 0
      %3394 = vmatpush1.bf16.msra.mxu0 %v2934
      %3395 = vmatprep.subr.bf16.mxu0 0
      %3396 = vmatpush2.bf16.msra.mxu0 0
      %3397 = vmatprep.subr.bf16.mxu0 0
      %3398 = vmatpush2.bf16.msra.mxu0 0
      %3399 = vmatprep.subr.bf16.mxu0 0
      %3400 = vmatpush2.bf16.msra.mxu0 0
      %3401 = vmatprep.subr.bf16.mxu0 0
      %3402 = vmatpush2.bf16.msra.mxu0 0
      %3403 = vmatprep.subr.bf16.mxu0 0
      %3404 = vmatpush2.bf16.msra.mxu0 0
      %3405 = vmatprep.subr.bf16.mxu0 0
      %3406 = vmatpush2.bf16.msra.mxu0 0
      %3407 = vmatprep.subr.bf16.mxu0 0
      %3408 = vmatpush2.bf16.msra.mxu0 0
      %3409 = vmatprep.subr.bf16.mxu0 0
      %3410 = vmatpush2.bf16.msra.mxu0 0
      %3411 = vmatprep.mubr.bf16.mxu0 0
      %3412 = vmatmul.mubr.bf16.gmra.mxu0 %v2643
      %v3413 = vpop.f32.mrf.mxu0
      %v3414 = vadd.f32 %v2744, %v3413
      %v3415 = vpop.f32.mrf.mxu0
      %v3416 = vpop.f32.mrf.mxu0
      %v3417 = vadd.f32 %v2744, %v3416
      %v3418 = vpop.f32.mrf.mxu0
      %3419 = vmatprep.mubr.bf16.mxu0 0
      %3420 = vmatmul.mubr.bf16.gmra.mxu0 %v2644
      %v3421 = vpop.f32.mrf.mxu0
      %v3422 = vadd.f32 %v2744, %v3421
      %v3423 = vpop.f32.mrf.mxu0
      %v3424 = vpop.f32.mrf.mxu0
      %v3425 = vadd.f32 %v2744, %v3424
      %v3426 = vpop.f32.mrf.mxu0
      %3427 = vmatprep.mubr.bf16.mxu0 0
      %3428 = vmatmul.mubr.bf16.gmra.mxu0 %v2645
      %v3429 = vpop.f32.mrf.mxu0
      %v3430 = vadd.f32 %v2744, %v3429
      %v3431 = vpop.f32.mrf.mxu0
      %v3432 = vpop.f32.mrf.mxu0
      %v3433 = vadd.f32 %v2744, %v3432
      %v3434 = vpop.f32.mrf.mxu0
      %3435 = vmatprep.mubr.bf16.mxu0 0
      %3436 = vmatmul.mubr.bf16.gmra.mxu0 %v2646
      %v3437 = vpop.f32.mrf.mxu0
      %v3438 = vadd.f32 %v2744, %v3437
      %v3439 = vpop.f32.mrf.mxu0
      %v3440 = vpop.f32.mrf.mxu0
      %v3441 = vadd.f32 %v2744, %v3440
      %v3442 = vpop.f32.mrf.mxu0
      %3443 = vmatprep.mubr.bf16.mxu0 0
      %3444 = vmatmul.mubr.bf16.gmra.mxu0 %v2647
      %v3445 = vpop.f32.mrf.mxu0
      %v3446 = vadd.f32 %v2744, %v3445
      %v3447 = vpop.f32.mrf.mxu0
      %v3448 = vpop.f32.mrf.mxu0
      %v3449 = vadd.f32 %v2744, %v3448
      %v3450 = vpop.f32.mrf.mxu0
      %3451 = vmatprep.mubr.bf16.mxu0 0
      %3452 = vmatmul.mubr.bf16.gmra.mxu0 %v2648
      %v3453 = vpop.f32.mrf.mxu0
      %v3454 = vadd.f32 %v2744, %v3453
      %v3455 = vpop.f32.mrf.mxu0
      %v3456 = vpop.f32.mrf.mxu0
      %v3457 = vadd.f32 %v2744, %v3456
      %v3458 = vpop.f32.mrf.mxu0
      %3459 = vmatprep.mubr.bf16.mxu0 0
      %3460 = vmatmul.mubr.bf16.gmra.mxu0 %v2649
      %v3461 = vpop.f32.mrf.mxu0
      %v3462 = vadd.f32 %v2744, %v3461
      %v3463 = vpop.f32.mrf.mxu0
      %v3464 = vpop.f32.mrf.mxu0
      %v3465 = vadd.f32 %v2744, %v3464
      %v3466 = vpop.f32.mrf.mxu0
      %3467 = vmatprep.mubr.bf16.mxu0 0
      %3468 = vmatmul.mubr.bf16.gmra.mxu0 %v2650
      %v3469 = vpop.f32.mrf.mxu0
      %v3470 = vadd.f32 %v2744, %v3469
      %v3471 = vpop.f32.mrf.mxu0
      %v3472 = vpop.f32.mrf.mxu0
      %v3473 = vadd.f32 %v2744, %v3472
      %v3474 = vpop.f32.mrf.mxu0
      %3475 = vdwg.mxu0
      %v3476 = vmul.f32 %v3075, 0.5
      %v3477 = vmul.f32 %v3077, 0.5
      %v3478 = vmul.f32 %v3188, 0.5
      %v3479 = vmul.f32 %v3190, 0.5
      %v3480 = vmul.f32 %v3301, 0.5
      %v3481 = vmul.f32 %v3303, 0.5
      %v3482 = vmul.f32 %v3414, 0.5
      %v3483 = vmul.f32 %v3079, 0.5
      %v3484 = vmul.f32 %v3081, 0.5
      %v3485 = vmul.f32 %v3192, 0.5
      %v3486 = vmul.f32 %v3194, 0.5
      %v3487 = vmul.f32 %v3305, 0.5
      %v3488 = vmul.f32 %v3307, 0.5
      %v3489 = vmul.f32 %v3417, 0.5
      %v3490 = vmul.f32 %v3085, 0.5
      %v3491 = vmul.f32 %v3087, 0.5
      %v3492 = vmul.f32 %v3198, 0.5
      %v3493 = vmul.f32 %v3200, 0.5
      %v3494 = vmul.f32 %v3311, 0.5
      %v3495 = vmul.f32 %v3313, 0.5
      %v3496 = vmul.f32 %v3422, 0.5
      %v3497 = vmul.f32 %v3089, 0.5
      %v3498 = vmul.f32 %v3091, 0.5
      %v3499 = vmul.f32 %v3202, 0.5
      %v3500 = vmul.f32 %v3204, 0.5
      %v3501 = vmul.f32 %v3315, 0.5
      %v3502 = vmul.f32 %v3317, 0.5
      %v3503 = vmul.f32 %v3425, 0.5
      %v3504 = vmul.f32 %v3095, 0.5
      %v3505 = vmul.f32 %v3097, 0.5
      %v3506 = vmul.f32 %v3208, 0.5
      %v3507 = vmul.f32 %v3210, 0.5
      %v3508 = vmul.f32 %v3321, 0.5
      %v3509 = vmul.f32 %v3323, 0.5
      %v3510 = vmul.f32 %v3430, 0.5
      %v3511 = vmul.f32 %v3099, 0.5
      %v3512 = vmul.f32 %v3101, 0.5
      %v3513 = vmul.f32 %v3212, 0.5
      %v3514 = vmul.f32 %v3214, 0.5
      %v3515 = vmul.f32 %v3325, 0.5
      %v3516 = vmul.f32 %v3327, 0.5
      %v3517 = vmul.f32 %v3433, 0.5
      %v3518 = vmul.f32 %v3105, 0.5
      %v3519 = vmul.f32 %v3107, 0.5
      %v3520 = vmul.f32 %v3218, 0.5
      %v3521 = vmul.f32 %v3220, 0.5
      %v3522 = vmul.f32 %v3331, 0.5
      %v3523 = vmul.f32 %v3333, 0.5
      %v3524 = vmul.f32 %v3438, 0.5
      %v3525 = vmul.f32 %v3109, 0.5
      %v3526 = vmul.f32 %v3111, 0.5
      %v3527 = vmul.f32 %v3222, 0.5
      %v3528 = vmul.f32 %v3224, 0.5
      %v3529 = vmul.f32 %v3335, 0.5
      %v3530 = vmul.f32 %v3337, 0.5
      %v3531 = vmul.f32 %v3441, 0.5
      %v3532 = vmul.f32 %v3115, 0.5
      %v3533 = vmul.f32 %v3117, 0.5
      %v3534 = vmul.f32 %v3228, 0.5
      %v3535 = vmul.f32 %v3230, 0.5
      %v3536 = vmul.f32 %v3341, 0.5
      %v3537 = vmul.f32 %v3343, 0.5
      %v3538 = vmul.f32 %v3446, 0.5
      %v3539 = vmul.f32 %v3119, 0.5
      %v3540 = vmul.f32 %v3121, 0.5
      %v3541 = vmul.f32 %v3232, 0.5
      %v3542 = vmul.f32 %v3234, 0.5
      %v3543 = vmul.f32 %v3345, 0.5
      %v3544 = vmul.f32 %v3347, 0.5
      %v3545 = vmul.f32 %v3449, 0.5
      %v3546 = vmul.f32 %v3125, 0.5
      %v3547 = vmul.f32 %v3127, 0.5
      %v3548 = vmul.f32 %v3238, 0.5
      %v3549 = vmul.f32 %v3240, 0.5
      %v3550 = vmul.f32 %v3351, 0.5
      %v3551 = vmul.f32 %v3353, 0.5
      %v3552 = vmul.f32 %v3454, 0.5
      %v3553 = vmul.f32 %v3129, 0.5
      %v3554 = vmul.f32 %v3131, 0.5
      %v3555 = vmul.f32 %v3242, 0.5
      %v3556 = vmul.f32 %v3244, 0.5
      %v3557 = vmul.f32 %v3355, 0.5
      %v3558 = vmul.f32 %v3357, 0.5
      %v3559 = vmul.f32 %v3457, 0.5
      %v3560 = vmul.f32 %v3135, 0.5
      %v3561 = vmul.f32 %v3137, 0.5
      %v3562 = vmul.f32 %v3248, 0.5
      %v3563 = vmul.f32 %v3250, 0.5
      %v3564 = vmul.f32 %v3361, 0.5
      %v3565 = vmul.f32 %v3363, 0.5
      %v3566 = vmul.f32 %v3462, 0.5
      %v3567 = vmul.f32 %v3139, 0.5
      %v3568 = vmul.f32 %v3141, 0.5
      %v3569 = vmul.f32 %v3252, 0.5
      %v3570 = vmul.f32 %v3254, 0.5
      %v3571 = vmul.f32 %v3365, 0.5
      %v3572 = vmul.f32 %v3367, 0.5
      %v3573 = vmul.f32 %v3465, 0.5
      %v3574 = vmul.f32 %v3145, 0.5
      %v3575 = vmul.f32 %v3147, 0.5
      %v3576 = vmul.f32 %v3258, 0.5
      %v3577 = vmul.f32 %v3260, 0.5
      %v3578 = vmul.f32 %v3371, 0.5
      %v3579 = vmul.f32 %v3373, 0.5
      %v3580 = vmul.f32 %v3470, 0.5
      %v3581 = vmul.f32 %v3149, 0.5
      %v3582 = vmul.f32 %v3151, 0.5
      %v3583 = vmul.f32 %v3262, 0.5
      %v3584 = vmul.f32 %v3264, 0.5
      %v3585 = vmul.f32 %v3375, 0.5
      %v3586 = vmul.f32 %v3377, 0.5
      %v3587 = vmul.f32 %v3473, 0.5
      %v3588 = vtanh.pop %v3476
      %v3589 = vtanh.pop %v3477
      %v3590 = vtanh.pop %v3478
      %v3591 = vtanh.pop %v3479
      %v3592 = vtanh.pop %v3480
      %v3593 = vtanh.pop %v3481
      %v3594 = vtanh.pop %v3482
      %v3595 = vtanh.pop %v3483
      %v3596 = vtanh.pop %v3484
      %v3597 = vtanh.pop %v3485
      %v3598 = vtanh.pop %v3486
      %v3599 = vtanh.pop %v3487
      %v3600 = vtanh.pop %v3488
      %v3601 = vtanh.pop %v3489
      %v3602 = vtanh.pop %v3490
      %v3603 = vtanh.pop %v3491
      %v3604 = vtanh.pop %v3492
      %v3605 = vtanh.pop %v3493
      %v3606 = vtanh.pop %v3494
      %v3607 = vtanh.pop %v3495
      %v3608 = vtanh.pop %v3496
      %v3609 = vtanh.pop %v3497
      %v3610 = vtanh.pop %v3498
      %v3611 = vtanh.pop %v3499
      %v3612 = vtanh.pop %v3500
      %v3613 = vtanh.pop %v3501
      %v3614 = vtanh.pop %v3502
      %v3615 = vtanh.pop %v3503
      %v3616 = vtanh.pop %v3504
      %v3617 = vtanh.pop %v3505
      %v3618 = vtanh.pop %v3506
      %v3619 = vtanh.pop %v3507
      %v3620 = vtanh.pop %v3508
      %v3621 = vtanh.pop %v3509
      %v3622 = vtanh.pop %v3510
      %v3623 = vtanh.pop %v3511
      %v3624 = vtanh.pop %v3512
      %v3625 = vtanh.pop %v3513
      %v3626 = vtanh.pop %v3514
      %v3627 = vtanh.pop %v3515
      %v3628 = vtanh.pop %v3516
      %v3629 = vtanh.pop %v3517
      %v3630 = vtanh.pop %v3518
      %v3631 = vtanh.pop %v3519
      %v3632 = vtanh.pop %v3520
      %v3633 = vtanh.pop %v3521
      %v3634 = vtanh.pop %v3522
      %v3635 = vtanh.pop %v3523
      %v3636 = vtanh.pop %v3524
      %v3637 = vtanh.pop %v3525
      %v3638 = vtanh.pop %v3526
      %v3639 = vtanh.pop %v3527
      %v3640 = vtanh.pop %v3528
      %v3641 = vtanh.pop %v3529
      %v3642 = vtanh.pop %v3530
      %v3643 = vtanh.pop %v3531
      %v3644 = vtanh.pop %v3532
      %v3645 = vtanh.pop %v3533
      %v3646 = vtanh.pop %v3534
      %v3647 = vtanh.pop %v3535
      %v3648 = vtanh.pop %v3536
      %v3649 = vtanh.pop %v3537
      %v3650 = vtanh.pop %v3538
      %v3651 = vtanh.pop %v3539
      %v3652 = vtanh.pop %v3540
      %v3653 = vtanh.pop %v3541
      %v3654 = vtanh.pop %v3542
      %v3655 = vtanh.pop %v3543
      %v3656 = vtanh.pop %v3544
      %v3657 = vtanh.pop %v3545
      %v3658 = vtanh.pop %v3546
      %v3659 = vtanh.pop %v3547
      %v3660 = vtanh.pop %v3548
      %v3661 = vtanh.pop %v3549
      %v3662 = vtanh.pop %v3550
      %v3663 = vtanh.pop %v3551
      %v3664 = vtanh.pop %v3552
      %v3665 = vtanh.pop %v3553
      %v3666 = vtanh.pop %v3554
      %v3667 = vtanh.pop %v3555
      %v3668 = vtanh.pop %v3556
      %v3669 = vtanh.pop %v3557
      %v3670 = vtanh.pop %v3558
      %v3671 = vtanh.pop %v3559
      %v3672 = vtanh.pop %v3560
      %v3673 = vtanh.pop %v3561
      %v3674 = vtanh.pop %v3562
      %v3675 = vtanh.pop %v3563
      %v3676 = vtanh.pop %v3564
      %v3677 = vtanh.pop %v3565
      %v3678 = vtanh.pop %v3566
      %v3679 = vtanh.pop %v3567
      %v3680 = vtanh.pop %v3568
      %v3681 = vtanh.pop %v3569
      %v3682 = vtanh.pop %v3570
      %v3683 = vtanh.pop %v3571
      %v3684 = vtanh.pop %v3572
      %v3685 = vtanh.pop %v3573
      %v3686 = vtanh.pop %v3574
      %v3687 = vtanh.pop %v3575
      %v3688 = vtanh.pop %v3576
      %v3689 = vtanh.pop %v3577
      %v3690 = vtanh.pop %v3578
      %v3691 = vtanh.pop %v3579
      %v3692 = vtanh.pop %v3580
      %v3693 = vtanh.pop %v3581
      %v3694 = vtanh.pop %v3582
      %v3695 = vtanh.pop %v3583
      %v3696 = vtanh.pop %v3584
      %v3697 = vtanh.pop %v3585
      %v3698 = vtanh.pop %v3586
      %v3699 = vtanh.pop %v3587
      %v3700 = vadd.f32 %v3588, 1.0
      %v3701 = vadd.f32 %v3589, 1.0
      %v3702 = vadd.f32 %v3590, 1.0
      %v3703 = vadd.f32 %v3591, 1.0
      %v3704 = vadd.f32 %v3592, 1.0
      %v3705 = vadd.f32 %v3593, 1.0
      %v3706 = vadd.f32 %v3594, 1.0
      %v3707 = vadd.f32 %v3595, 1.0
      %v3708 = vadd.f32 %v3596, 1.0
      %v3709 = vadd.f32 %v3597, 1.0
      %v3710 = vadd.f32 %v3598, 1.0
      %v3711 = vadd.f32 %v3599, 1.0
      %v3712 = vadd.f32 %v3600, 1.0
      %v3713 = vadd.f32 %v3601, 1.0
      %v3714 = vadd.f32 %v3602, 1.0
      %v3715 = vadd.f32 %v3603, 1.0
      %v3716 = vadd.f32 %v3604, 1.0
      %v3717 = vadd.f32 %v3605, 1.0
      %v3718 = vadd.f32 %v3606, 1.0
      %v3719 = vadd.f32 %v3607, 1.0
      %v3720 = vadd.f32 %v3608, 1.0
      %v3721 = vadd.f32 %v3609, 1.0
      %v3722 = vadd.f32 %v3610, 1.0
      %v3723 = vadd.f32 %v3611, 1.0
      %v3724 = vadd.f32 %v3612, 1.0
      %v3725 = vadd.f32 %v3613, 1.0
      %v3726 = vadd.f32 %v3614, 1.0
      %v3727 = vadd.f32 %v3615, 1.0
      %v3728 = vadd.f32 %v3616, 1.0
      %v3729 = vadd.f32 %v3617, 1.0
      %v3730 = vadd.f32 %v3618, 1.0
      %v3731 = vadd.f32 %v3619, 1.0
      %v3732 = vadd.f32 %v3620, 1.0
      %v3733 = vadd.f32 %v3621, 1.0
      %v3734 = vadd.f32 %v3622, 1.0
      %v3735 = vadd.f32 %v3623, 1.0
      %v3736 = vadd.f32 %v3624, 1.0
      %v3737 = vadd.f32 %v3625, 1.0
      %v3738 = vadd.f32 %v3626, 1.0
      %v3739 = vadd.f32 %v3627, 1.0
      %v3740 = vadd.f32 %v3628, 1.0
      %v3741 = vadd.f32 %v3629, 1.0
      %v3742 = vadd.f32 %v3630, 1.0
      %v3743 = vadd.f32 %v3631, 1.0
      %v3744 = vadd.f32 %v3632, 1.0
      %v3745 = vadd.f32 %v3633, 1.0
      %v3746 = vadd.f32 %v3634, 1.0
      %v3747 = vadd.f32 %v3635, 1.0
      %v3748 = vadd.f32 %v3636, 1.0
      %v3749 = vadd.f32 %v3637, 1.0
      %v3750 = vadd.f32 %v3638, 1.0
      %v3751 = vadd.f32 %v3639, 1.0
      %v3752 = vadd.f32 %v3640, 1.0
      %v3753 = vadd.f32 %v3641, 1.0
      %v3754 = vadd.f32 %v3642, 1.0
      %v3755 = vadd.f32 %v3643, 1.0
      %v3756 = vadd.f32 %v3644, 1.0
      %v3757 = vadd.f32 %v3645, 1.0
      %v3758 = vadd.f32 %v3646, 1.0
      %v3759 = vadd.f32 %v3647, 1.0
      %v3760 = vadd.f32 %v3648, 1.0
      %v3761 = vadd.f32 %v3649, 1.0
      %v3762 = vadd.f32 %v3650, 1.0
      %v3763 = vadd.f32 %v3651, 1.0
      %v3764 = vadd.f32 %v3652, 1.0
      %v3765 = vadd.f32 %v3653, 1.0
      %v3766 = vadd.f32 %v3654, 1.0
      %v3767 = vadd.f32 %v3655, 1.0
      %v3768 = vadd.f32 %v3656, 1.0
      %v3769 = vadd.f32 %v3657, 1.0
      %v3770 = vadd.f32 %v3658, 1.0
      %v3771 = vadd.f32 %v3659, 1.0
      %v3772 = vadd.f32 %v3660, 1.0
      %v3773 = vadd.f32 %v3661, 1.0
      %v3774 = vadd.f32 %v3662, 1.0
      %v3775 = vadd.f32 %v3663, 1.0
      %v3776 = vadd.f32 %v3664, 1.0
      %v3777 = vadd.f32 %v3665, 1.0
      %v3778 = vadd.f32 %v3666, 1.0
      %v3779 = vadd.f32 %v3667, 1.0
      %v3780 = vadd.f32 %v3668, 1.0
      %v3781 = vadd.f32 %v3669, 1.0
      %v3782 = vadd.f32 %v3670, 1.0
      %v3783 = vadd.f32 %v3671, 1.0
      %v3784 = vadd.f32 %v3672, 1.0
      %v3785 = vadd.f32 %v3673, 1.0
      %v3786 = vadd.f32 %v3674, 1.0
      %v3787 = vadd.f32 %v3675, 1.0
      %v3788 = vadd.f32 %v3676, 1.0
      %v3789 = vadd.f32 %v3677, 1.0
      %v3790 = vadd.f32 %v3678, 1.0
      %v3791 = vadd.f32 %v3679, 1.0
      %v3792 = vadd.f32 %v3680, 1.0
      %v3793 = vadd.f32 %v3681, 1.0
      %v3794 = vadd.f32 %v3682, 1.0
      %v3795 = vadd.f32 %v3683, 1.0
      %v3796 = vadd.f32 %v3684, 1.0
      %v3797 = vadd.f32 %v3685, 1.0
      %v3798 = vadd.f32 %v3686, 1.0
      %v3799 = vadd.f32 %v3687, 1.0
      %v3800 = vadd.f32 %v3688, 1.0
      %v3801 = vadd.f32 %v3689, 1.0
      %v3802 = vadd.f32 %v3690, 1.0
      %v3803 = vadd.f32 %v3691, 1.0
      %v3804 = vadd.f32 %v3692, 1.0
      %v3805 = vadd.f32 %v3693, 1.0
      %v3806 = vadd.f32 %v3694, 1.0
      %v3807 = vadd.f32 %v3695, 1.0
      %v3808 = vadd.f32 %v3696, 1.0
      %v3809 = vadd.f32 %v3697, 1.0
      %v3810 = vadd.f32 %v3698, 1.0
      %v3811 = vadd.f32 %v3699, 1.0
      %v3812 = vmul.f32 %v3700, 0.5
      %v3813 = vmul.f32 %v3701, 0.5
      %v3814 = vmul.f32 %v3702, 0.5
      %v3815 = vmul.f32 %v3703, 0.5
      %v3816 = vmul.f32 %v3704, 0.5
      %v3817 = vmul.f32 %v3705, 0.5
      %v3818 = vmul.f32 %v3706, 0.5
      %v3819 = vmul.f32 %v3707, 0.5
      %v3820 = vmul.f32 %v3708, 0.5
      %v3821 = vmul.f32 %v3709, 0.5
      %v3822 = vmul.f32 %v3710, 0.5
      %v3823 = vmul.f32 %v3711, 0.5
      %v3824 = vmul.f32 %v3712, 0.5
      %v3825 = vmul.f32 %v3713, 0.5
      %v3826 = vmul.f32 %v3714, 0.5
      %v3827 = vmul.f32 %v3715, 0.5
      %v3828 = vmul.f32 %v3716, 0.5
      %v3829 = vmul.f32 %v3717, 0.5
      %v3830 = vmul.f32 %v3718, 0.5
      %v3831 = vmul.f32 %v3719, 0.5
      %v3832 = vmul.f32 %v3720, 0.5
      %v3833 = vmul.f32 %v3721, 0.5
      %v3834 = vmul.f32 %v3722, 0.5
      %v3835 = vmul.f32 %v3723, 0.5
      %v3836 = vmul.f32 %v3724, 0.5
      %v3837 = vmul.f32 %v3725, 0.5
      %v3838 = vmul.f32 %v3726, 0.5
      %v3839 = vmul.f32 %v3727, 0.5
      %v3840 = vmul.f32 %v3728, 0.5
      %v3841 = vmul.f32 %v3729, 0.5
      %v3842 = vmul.f32 %v3730, 0.5
      %v3843 = vmul.f32 %v3731, 0.5
      %v3844 = vmul.f32 %v3732, 0.5
      %v3845 = vmul.f32 %v3733, 0.5
      %v3846 = vmul.f32 %v3734, 0.5
      %v3847 = vmul.f32 %v3735, 0.5
      %v3848 = vmul.f32 %v3736, 0.5
      %v3849 = vmul.f32 %v3737, 0.5
      %v3850 = vmul.f32 %v3738, 0.5
      %v3851 = vmul.f32 %v3739, 0.5
      %v3852 = vmul.f32 %v3740, 0.5
      %v3853 = vmul.f32 %v3741, 0.5
      %v3854 = vmul.f32 %v3742, 0.5
      %v3855 = vmul.f32 %v3743, 0.5
      %v3856 = vmul.f32 %v3744, 0.5
      %v3857 = vmul.f32 %v3745, 0.5
      %v3858 = vmul.f32 %v3746, 0.5
      %v3859 = vmul.f32 %v3747, 0.5
      %v3860 = vmul.f32 %v3748, 0.5
      %v3861 = vmul.f32 %v3749, 0.5
      %v3862 = vmul.f32 %v3750, 0.5
      %v3863 = vmul.f32 %v3751, 0.5
      %v3864 = vmul.f32 %v3752, 0.5
      %v3865 = vmul.f32 %v3753, 0.5
      %v3866 = vmul.f32 %v3754, 0.5
      %v3867 = vmul.f32 %v3755, 0.5
      %v3868 = vmul.f32 %v3756, 0.5
      %v3869 = vmul.f32 %v3757, 0.5
      %v3870 = vmul.f32 %v3758, 0.5
      %v3871 = vmul.f32 %v3759, 0.5
      %v3872 = vmul.f32 %v3760, 0.5
      %v3873 = vmul.f32 %v3761, 0.5
      %v3874 = vmul.f32 %v3762, 0.5
      %v3875 = vmul.f32 %v3763, 0.5
      %v3876 = vmul.f32 %v3764, 0.5
      %v3877 = vmul.f32 %v3765, 0.5
      %v3878 = vmul.f32 %v3766, 0.5
      %v3879 = vmul.f32 %v3767, 0.5
      %v3880 = vmul.f32 %v3768, 0.5
      %v3881 = vmul.f32 %v3769, 0.5
      %v3882 = vmul.f32 %v3770, 0.5
      %v3883 = vmul.f32 %v3771, 0.5
      %v3884 = vmul.f32 %v3772, 0.5
      %v3885 = vmul.f32 %v3773, 0.5
      %v3886 = vmul.f32 %v3774, 0.5
      %v3887 = vmul.f32 %v3775, 0.5
      %v3888 = vmul.f32 %v3776, 0.5
      %v3889 = vmul.f32 %v3777, 0.5
      %v3890 = vmul.f32 %v3778, 0.5
      %v3891 = vmul.f32 %v3779, 0.5
      %v3892 = vmul.f32 %v3780, 0.5
      %v3893 = vmul.f32 %v3781, 0.5
      %v3894 = vmul.f32 %v3782, 0.5
      %v3895 = vmul.f32 %v3783, 0.5
      %v3896 = vmul.f32 %v3784, 0.5
      %v3897 = vmul.f32 %v3785, 0.5
      %v3898 = vmul.f32 %v3786, 0.5
      %v3899 = vmul.f32 %v3787, 0.5
      %v3900 = vmul.f32 %v3788, 0.5
      %v3901 = vmul.f32 %v3789, 0.5
      %v3902 = vmul.f32 %v3790, 0.5
      %v3903 = vmul.f32 %v3791, 0.5
      %v3904 = vmul.f32 %v3792, 0.5
      %v3905 = vmul.f32 %v3793, 0.5
      %v3906 = vmul.f32 %v3794, 0.5
      %v3907 = vmul.f32 %v3795, 0.5
      %v3908 = vmul.f32 %v3796, 0.5
      %v3909 = vmul.f32 %v3797, 0.5
      %v3910 = vmul.f32 %v3798, 0.5
      %v3911 = vmul.f32 %v3799, 0.5
      %v3912 = vmul.f32 %v3800, 0.5
      %v3913 = vmul.f32 %v3801, 0.5
      %v3914 = vmul.f32 %v3802, 0.5
      %v3915 = vmul.f32 %v3803, 0.5
      %v3916 = vmul.f32 %v3804, 0.5
      %v3917 = vmul.f32 %v3805, 0.5
      %v3918 = vmul.f32 %v3806, 0.5
      %v3919 = vmul.f32 %v3807, 0.5
      %v3920 = vmul.f32 %v3808, 0.5
      %v3921 = vmul.f32 %v3809, 0.5
      %v3922 = vmul.f32 %v3810, 0.5
      %v3923 = vmul.f32 %v3811, 0.5
      %3924 = vst [vmem:[%s596] sm:$0xff] %v3812
      %3925 = vst [vmem:[%s596 + $0x8] sm:$0xff] %v3813
      %3926 = vst [vmem:[%s596 + $0x10] sm:$0xff] %v3814
      %3927 = vst [vmem:[%s596 + $0x18] sm:$0xff] %v3815
      %3928 = vst [vmem:[%s596 + $0x20] sm:$0xff] %v3816
      %3929 = vst [vmem:[%s596 + $0x28] sm:$0xff] %v3817
      %3930 = vst.msk [vmem:[%s596 + $0x30] sm:$0xff] %vm1166, %v3818
      %3931 = vst [vmem:[%s596 + $0x38] sm:$0xff] %v3819
      %3932 = vst [vmem:[%s596 + $0x40] sm:$0xff] %v3820
      %3933 = vst [vmem:[%s596 + $0x48] sm:$0xff] %v3821
      %3934 = vst [vmem:[%s596 + $0x50] sm:$0xff] %v3822
      %3935 = vst [vmem:[%s596 + $0x58] sm:$0xff] %v3823
      %3936 = vst [vmem:[%s596 + $0x60] sm:$0xff] %v3824
      %3937 = vst.msk [vmem:[%s596 + $0x68] sm:$0xff] %vm1166, %v3825
      %3938 = vst [vmem:[%s596 + $0x70] sm:$0xff] %v3826
      %3939 = vst [vmem:[%s596 + $0x78] sm:$0xff] %v3827
      %3940 = vst [vmem:[%s596 + $0x80] sm:$0xff] %v3828
      %3941 = vst [vmem:[%s596 + $0x88] sm:$0xff] %v3829
      %3942 = vst [vmem:[%s596 + $0x90] sm:$0xff] %v3830
      %3943 = vst [vmem:[%s596 + $0x98] sm:$0xff] %v3831
      %3944 = vst.msk [vmem:[%s596 + $0xa0] sm:$0xff] %vm1166, %v3832
      %3945 = vst [vmem:[%s596 + $0xa8] sm:$0xff] %v3833
      %3946 = vst [vmem:[%s596 + $0xb0] sm:$0xff] %v3834
      %3947 = vst [vmem:[%s596 + $0xb8] sm:$0xff] %v3835
      %3948 = vst [vmem:[%s596 + $0xc0] sm:$0xff] %v3836
      %3949 = vst [vmem:[%s596 + $0xc8] sm:$0xff] %v3837
      %3950 = vst [vmem:[%s596 + $0xd0] sm:$0xff] %v3838
      %3951 = vst.msk [vmem:[%s596 + $0xd8] sm:$0xff] %vm1166, %v3839
      %3952 = vst [vmem:[%s596 + $0xe0] sm:$0xff] %v3840
      %3953 = vst [vmem:[%s596 + $0xe8] sm:$0xff] %v3841
      %3954 = vst [vmem:[%s596 + $0xf0] sm:$0xff] %v3842
      %3955 = vst [vmem:[%s596 + $0xf8] sm:$0xff] %v3843
      %3956 = vst [vmem:[%s596 + $0x100] sm:$0xff] %v3844
      %3957 = vst [vmem:[%s596 + $0x108] sm:$0xff] %v3845
      %3958 = vst.msk [vmem:[%s596 + $0x110] sm:$0xff] %vm1166, %v3846
      %3959 = vst [vmem:[%s596 + $0x118] sm:$0xff] %v3847
      %3960 = vst [vmem:[%s596 + $0x120] sm:$0xff] %v3848
      %3961 = vst [vmem:[%s596 + $0x128] sm:$0xff] %v3849
      %3962 = vst [vmem:[%s596 + $0x130] sm:$0xff] %v3850
      %3963 = vst [vmem:[%s596 + $0x138] sm:$0xff] %v3851
      %3964 = vst [vmem:[%s596 + $0x140] sm:$0xff] %v3852
      %3965 = vst.msk [vmem:[%s596 + $0x148] sm:$0xff] %vm1166, %v3853
      %3966 = vst [vmem:[%s596 + $0x150] sm:$0xff] %v3854
      %3967 = vst [vmem:[%s596 + $0x158] sm:$0xff] %v3855
      %3968 = vst [vmem:[%s596 + $0x160] sm:$0xff] %v3856
      %3969 = vst [vmem:[%s596 + $0x168] sm:$0xff] %v3857
      %3970 = vst [vmem:[%s596 + $0x170] sm:$0xff] %v3858
      %3971 = vst [vmem:[%s596 + $0x178] sm:$0xff] %v3859
      %3972 = vst.msk [vmem:[%s596 + $0x180] sm:$0xff] %vm1166, %v3860
      %3973 = vst [vmem:[%s596 + $0x188] sm:$0xff] %v3861
      %3974 = vst [vmem:[%s596 + $0x190] sm:$0xff] %v3862
      %3975 = vst [vmem:[%s596 + $0x198] sm:$0xff] %v3863
      %3976 = vst [vmem:[%s596 + $0x1a0] sm:$0xff] %v3864
      %3977 = vst [vmem:[%s596 + $0x1a8] sm:$0xff] %v3865
      %3978 = vst [vmem:[%s596 + $0x1b0] sm:$0xff] %v3866
      %3979 = vst.msk [vmem:[%s596 + $0x1b8] sm:$0xff] %vm1166, %v3867
      %3980 = vst [vmem:[%s596 + $0x1c0] sm:$0xff] %v3868
      %3981 = vst [vmem:[%s596 + $0x1c8] sm:$0xff] %v3869
      %3982 = vst [vmem:[%s596 + $0x1d0] sm:$0xff] %v3870
      %3983 = vst [vmem:[%s596 + $0x1d8] sm:$0xff] %v3871
      %3984 = vst [vmem:[%s596 + $0x1e0] sm:$0xff] %v3872
      %3985 = vst [vmem:[%s596 + $0x1e8] sm:$0xff] %v3873
      %3986 = vst.msk [vmem:[%s596 + $0x1f0] sm:$0xff] %vm1166, %v3874
      %3987 = vst [vmem:[%s596 + $0x1f8] sm:$0xff] %v3875
      %3988 = vst [vmem:[%s596 + $0x200] sm:$0xff] %v3876
      %3989 = vst [vmem:[%s596 + $0x208] sm:$0xff] %v3877
      %3990 = vst [vmem:[%s596 + $0x210] sm:$0xff] %v3878
      %3991 = vst [vmem:[%s596 + $0x218] sm:$0xff] %v3879
      %3992 = vst [vmem:[%s596 + $0x220] sm:$0xff] %v3880
      %3993 = vst.msk [vmem:[%s596 + $0x228] sm:$0xff] %vm1166, %v3881
      %3994 = vst [vmem:[%s596 + $0x230] sm:$0xff] %v3882
      %3995 = vst [vmem:[%s596 + $0x238] sm:$0xff] %v3883
      %3996 = vst [vmem:[%s596 + $0x240] sm:$0xff] %v3884
      %3997 = vst [vmem:[%s596 + $0x248] sm:$0xff] %v3885
      %3998 = vst [vmem:[%s596 + $0x250] sm:$0xff] %v3886
      %3999 = vst [vmem:[%s596 + $0x258] sm:$0xff] %v3887
      %4000 = vst.msk [vmem:[%s596 + $0x260] sm:$0xff] %vm1166, %v3888
      %4001 = vst [vmem:[%s596 + $0x268] sm:$0xff] %v3889
      %4002 = vst [vmem:[%s596 + $0x270] sm:$0xff] %v3890
      %4003 = vst [vmem:[%s596 + $0x278] sm:$0xff] %v3891
      %4004 = vst [vmem:[%s596 + $0x280] sm:$0xff] %v3892
      %4005 = vst [vmem:[%s596 + $0x288] sm:$0xff] %v3893
      %4006 = vst [vmem:[%s596 + $0x290] sm:$0xff] %v3894
      %4007 = vst.msk [vmem:[%s596 + $0x298] sm:$0xff] %vm1166, %v3895
      %4008 = vst [vmem:[%s596 + $0x2a0] sm:$0xff] %v3896
      %4009 = vst [vmem:[%s596 + $0x2a8] sm:$0xff] %v3897
      %4010 = vst [vmem:[%s596 + $0x2b0] sm:$0xff] %v3898
      %4011 = vst [vmem:[%s596 + $0x2b8] sm:$0xff] %v3899
      %4012 = vst [vmem:[%s596 + $0x2c0] sm:$0xff] %v3900
      %4013 = vst [vmem:[%s596 + $0x2c8] sm:$0xff] %v3901
      %4014 = vst.msk [vmem:[%s596 + $0x2d0] sm:$0xff] %vm1166, %v3902
      %4015 = vst [vmem:[%s596 + $0x2d8] sm:$0xff] %v3903
      %4016 = vst [vmem:[%s596 + $0x2e0] sm:$0xff] %v3904
      %4017 = vst [vmem:[%s596 + $0x2e8] sm:$0xff] %v3905
      %4018 = vst [vmem:[%s596 + $0x2f0] sm:$0xff] %v3906
      %4019 = vst [vmem:[%s596 + $0x2f8] sm:$0xff] %v3907
      %4020 = vst [vmem:[%s596 + $0x300] sm:$0xff] %v3908
      %4021 = vst.msk [vmem:[%s596 + $0x308] sm:$0xff] %vm1166, %v3909
      %4022 = vst [vmem:[%s596 + $0x310] sm:$0xff] %v3910
      %4023 = vst [vmem:[%s596 + $0x318] sm:$0xff] %v3911
      %4024 = vst [vmem:[%s596 + $0x320] sm:$0xff] %v3912
      %4025 = vst [vmem:[%s596 + $0x328] sm:$0xff] %v3913
      %4026 = vst [vmem:[%s596 + $0x330] sm:$0xff] %v3914
      %4027 = vst [vmem:[%s596 + $0x338] sm:$0xff] %v3915
      %4028 = vst.msk [vmem:[%s596 + $0x340] sm:$0xff] %vm1166, %v3916
      %4029 = vst [vmem:[%s596 + $0x348] sm:$0xff] %v3917
      %4030 = vst [vmem:[%s596 + $0x350] sm:$0xff] %v3918
      %4031 = vst [vmem:[%s596 + $0x358] sm:$0xff] %v3919
      %4032 = vst [vmem:[%s596 + $0x360] sm:$0xff] %v3920
      %4033 = vst [vmem:[%s596 + $0x368] sm:$0xff] %v3921
      %4034 = vst [vmem:[%s596 + $0x370] sm:$0xff] %v3922
      %4035 = vst.msk [vmem:[%s596 + $0x378] sm:$0xff] %vm1166, %v3923
      %s4036 = smul.u32 16, %s30
      %p4037 = scmp.lt.s32.totalorder %s4036, 31
      %s4038 = scalar_select %p4037, %s4036, 31
      %s4039 = smul.addr %s4038, 8
      %s4040 = scalar_lea.vmem %s17, %s4039
      %s4041 = smul.u32 16, %s30
      %p4042 = scmp.lt.s32.totalorder %s4041, 31
      %s4043 = scalar_select %p4042, %s4041, 31
      %s4044 = smul.addr %s4043, 7
      %s4045 = smul.addr %s4044, 8
      %s4046 = scalar_lea.vmem %s18, %s4045
      // Predicated region
      $region89: #{autoencoder_forward.1} parent=87 // pred_check
        %p4047 = pneg %p410
      $region90: #{autoencoder_forward.1} parent=87 // pred_check_branch
        %4049 = sbr.rel (%p4047) target = $region92
      $region91: #{autoencoder_forward.1} parent=87 // pred_region
        %s4050 = smul.u32 16, %s30
      $region92: #{autoencoder_forward.1} parent=87 // pred_fallthru
        _
      // Predicated region
      $region93: #{autoencoder_forward.1} parent=87 // pred_check
        %p4051 = pneg %p436
      $region94: #{autoencoder_forward.1} parent=87 // pred_check_branch
        %4053 = sbr.rel (%p4051) target = $region96
      $region95: #{autoencoder_forward.1} parent=87 // pred_region
        %s4054 = smul.u32 16, %s30
      $region96: #{autoencoder_forward.1} parent=87 // pred_fallthru
        _
    $region88: #{autoencoder_forward.1} parent=5 // pred_fallthru
      _
    %p4055 = scmp.le.s32.totalorder 2, %s25
    // Predicated region
    $region97: #{autoencoder_forward.1} parent=5 // pred_check
      %p4056 = pneg %p4055
    $region98: #{autoencoder_forward.1} parent=5 // pred_check_branch
      %4058 = sbr.rel (%p4056) target = $region100
    $region99: #{autoencoder_forward.1} parent=5 // pred_region
      %s4059 = ssub.s32 %s25, 2
      // Predicated region
      $region101: #{autoencoder_forward.1} parent=99 // pred_check
        %p4060 = pneg %p416
      $region102: #{autoencoder_forward.1} parent=99 // pred_check_branch
        %4062 = sbr.rel (%p4060) target = $region104
      $region103: #{autoencoder_forward.1} parent=99 // pred_region
        %s4063 = smul.u32 16, %s31
        %p4064 = scmp.lt.s32.totalorder %s4063, 31
        %s4065 = scalar_select %p4064, %s4063, 31
        %s4066 = smul.addr %s4065, 8
        %s4067 = scalar_lea.vmem %s17, %s4066
      $region104: #{autoencoder_forward.1} parent=99 // pred_fallthru
        _
      // Predicated region
      $region105: #{autoencoder_forward.1} parent=99 // pred_check
        %p4068 = pneg %p442
      $region106: #{autoencoder_forward.1} parent=99 // pred_check_branch
        %4070 = sbr.rel (%p4068) target = $region108
      $region107: #{autoencoder_forward.1} parent=99 // pred_region
        %s4071 = smul.u32 16, %s31
        %p4072 = scmp.lt.s32.totalorder %s4071, 31
        %s4073 = scalar_select %p4072, %s4071, 31
        %s4074 = smul.addr %s4073, 7
        %s4075 = smul.addr %s4074, 8
        %s4076 = scalar_lea.vmem %s18, %s4075
      $region108: #{autoencoder_forward.1} parent=99 // pred_fallthru
        _
    $region100: #{autoencoder_forward.1} parent=5 // pred_fallthru
      _
  $region6: #{autoencoder_forward.1} parent=0 // loop_footer
    %s29 = sadd.s32 1, %s25
  $region7: #{autoencoder_forward.1} parent=0 // loop_footer_branch
    %24 = sbr.rel target = $region3
  $region8: #{autoencoder_forward.1} parent=0 // loop_exit
    _

</llo_original>
